<compile_context>
chip_gen: v5e
topology: v5e:2x2
jax: 0.10.0
libtpu: 0.0.40
codegen_flags: <defaults>
</compile_context>

<pallas_src>
import functools

import jax
import jax.numpy as jnp
from jax.experimental import pallas as pl
from jax.experimental.pallas import tpu as pltpu

# Model hyper-parameters (CBAM(in_planes=32, ratio=16, kernel_size=7))
IN_PLANES = 32
RATIO = 16
KSIZE = 7
PAD = 3


def cbam_kernel(x_ref, w1t_ref, w2_ref, wsa_ref, o_ref, sp_pad, sa_flat, *, H, W):
    # x_ref   : (Nb, C, H*W)        VMEM  lane-dense input block
    # w1t_ref : (C, Cr)             VMEM  fc1 weight, transposed (w1.T)
    # w2_ref  : (C, Cr)             VMEM  fc2 weight
    # wsa_ref : (2*K*K,)            SMEM  flattened spatial conv weight (1,2,K,K)
    # o_ref   : (Nb, C, H*W)        VMEM  output block
    # sp_pad  : (2, Nb, H+6, W+6)   VMEM  zero-padded avg/max spatial maps
    # sa_flat : (Nb, 1, H*W)        VMEM  spatial attention, flattened back
    Nb, C, HW = x_ref.shape
    Cr = w1t_ref.shape[1]
    Hp = H + 2 * PAD

    x = x_ref[...].astype(jnp.float32)                          # (Nb, C, HW)

    # ---------------- Channel attention (VPU only, no MXU) ----------------
    avg_pool = jnp.mean(x, axis=2, keepdims=True)               # (Nb, C, 1)
    max_pool = jnp.max(x, axis=2, keepdims=True)                # (Nb, C, 1)
    pooled = jnp.concatenate([avg_pool, max_pool], axis=0)      # (2*Nb, C, 1)

    w1t = w1t_ref[...].astype(jnp.float32)                      # (C, Cr)
    w2 = w2_ref[...].astype(jnp.float32)                        # (C, Cr)

    mlp_out = jnp.zeros((2 * Nb, C, 1), jnp.float32)
    for j in range(Cr):                      # Cr = in_planes // ratio (tiny)
        # hidden_j = relu(sum_c w1[j, c] * pooled[:, c])   (sublane reduce)
        hj = jnp.sum(pooled * w1t[None, :, j:j + 1], axis=1, keepdims=True)
        hj = jnp.maximum(hj, 0.0)                                # (2*Nb, 1, 1)
        mlp_out = mlp_out + hj * w2[None, :, j:j + 1]            # (2*Nb, C, 1)
    ca = jax.nn.sigmoid(mlp_out[:Nb] + mlp_out[Nb:])             # (Nb, C, 1)

    out = x * ca                                                 # (Nb, C, HW)

    # ---------------- Spatial attention ----------------
    avg_sp = jnp.mean(out, axis=1, keepdims=True)                # (Nb, 1, HW)
    max_sp = jnp.max(out, axis=1, keepdims=True)                 # (Nb, 1, HW)

    # Scatter the two reduced maps into a zeroed, padded VMEM scratch
    # (plain aligned row stores; no lane-dim concatenation).
    sp_pad[...] = jnp.zeros_like(sp_pad)
    for y in range(H):
        sp_pad[0, :, PAD + y:PAD + y + 1, PAD:PAD + W] = \
            avg_sp[:, :, y * W:(y + 1) * W]
        sp_pad[1, :, PAD + y:PAD + y + 1, PAD:PAD + W] = \
            max_sp[:, :, y * W:(y + 1) * W]

    avg_p = sp_pad[0]                                            # (Nb, Hp, W+6)
    max_p = sp_pad[1]

    # Hoist the 7 lane-shifted (kw) column views of each padded map; the inner
    # loop then only needs cheap sublane (kh) slices and VALU FMAs.
    a_cols = [avg_p[:, :, kw:kw + W] for kw in range(KSIZE)]     # (Nb, Hp, W)
    m_cols = [max_p[:, :, kw:kw + W] for kw in range(KSIZE)]

    acc = jnp.zeros((Nb, H, W), jnp.float32)
    for kh in range(KSIZE):
        row = jnp.zeros((Nb, Hp, W), jnp.float32)
        for kw in range(KSIZE):
            wa = wsa_ref[kh * KSIZE + kw]                        # avg-map weight
            wm = wsa_ref[KSIZE * KSIZE + kh * KSIZE + kw]        # max-map weight
            row = row + wa * a_cols[kw] + wm * m_cols[kw]
        acc = acc + row[:, kh:kh + H, :]                         # sublane slice
    sa = jax.nn.sigmoid(acc)                                     # (Nb, H, W)

    # Back to the lane-dense flat layout via a tiny scratch round-trip.
    for y in range(H):
        sa_flat[:, :, y * W:(y + 1) * W] = sa[:, y:y + 1, :]

    o_ref[...] = (out * sa_flat[...]).astype(o_ref.dtype)


def cbam_pallas(x, w1, w2, w_sa, images_per_step=None):
    """x: (N, C, H, W) f32; w1: (Cr, C); w2: (C, Cr); w_sa: (2, K, K)."""
    N, C, H, W = x.shape
    Cr = w1.shape[0]
    HW = H * W

    if images_per_step is None:
        # <=2 fat grid steps: amortize per-step overhead on v5e/v6e (one TC)
        # while keeping 2 parallel steps so both v7x TensorCores are busy.
        images_per_step = (N + 1) // 2
        if N % images_per_step != 0:
            images_per_step = 1
    nb = max(1, images_per_step)
    assert N % nb == 0, "batch must be divisible by images_per_step"
    steps = N // nb

    x_flat = x.reshape(N, C, HW)                                 # lane-dense
    w1t = jnp.asarray(w1, jnp.float32).T                         # (C, Cr)
    w2f = jnp.asarray(w2, jnp.float32)                           # (C, Cr)
    wsa_flat = jnp.asarray(w_sa, jnp.float32).reshape(-1)        # (2*K*K,)

    kernel = functools.partial(cbam_kernel, H=H, W=W)

    out_flat = pl.pallas_call(
        kernel,
        out_shape=jax.ShapeDtypeStruct((N, C, HW), x.dtype),
        grid=(steps,),
        in_specs=[
            pl.BlockSpec((nb, C, HW), lambda b: (b, 0, 0)),
            pl.BlockSpec((C, Cr), lambda b: (0, 0)),
            pl.BlockSpec((C, Cr), lambda b: (0, 0)),
            pl.BlockSpec(memory_space=pltpu.MemorySpace.SMEM),
        ],
        out_specs=pl.BlockSpec((nb, C, HW), lambda b: (b, 0, 0)),
        scratch_shapes=[
            pltpu.VMEM((2, nb, H + 2 * PAD, W + 2 * PAD), jnp.float32),
            pltpu.VMEM((nb, 1, HW), jnp.float32),
        ],
        compiler_params=pltpu.CompilerParams(
            dimension_semantics=("parallel",)),
    )(x_flat, w1t, w2f, wsa_flat)

    return out_flat.reshape(N, C, H, W)


def cbam_reference(x, w1, w2, w_sa):
    """Pure-JAX reference mirroring the PyTorch CBAM forward."""
    # Channel attention
    avg = x.mean(axis=(2, 3))                    # (N, C)
    mx = x.max(axis=(2, 3))                      # (N, C)

    def mlp(v):                                  # (N, C) -> (N, C)
        return jnp.maximum(v @ w1.T, 0.0) @ w2.T

    ca = jax.nn.sigmoid(mlp(avg) + mlp(mx))      # (N, C)
    out = x * ca[:, :, None, None]

    # Spatial attention
    avg_s = out.mean(axis=1, keepdims=True)      # (N, 1, H, W)
    max_s = out.max(axis=1, keepdims=True)       # (N, 1, H, W)
    cat = jnp.concatenate([avg_s, max_s], axis=1)            # (N, 2, H, W)
    conv = jax.lax.conv_general_dilated(
        cat, w_sa[None],                         # (1, 2, K, K)
        window_strides=(1, 1), padding=[(PAD, PAD), (PAD, PAD)],
        dimension_numbers=("NCHW", "OIHW", "NCHW"))
    sa = jax.nn.sigmoid(conv)                    # (N, 1, H, W)
    return out * sa


if __name__ == "__main__":
    N, C, H, W = 2, IN_PLANES, 16, 16
    Cr = C // RATIO

    key = jax.random.PRNGKey(0)
    kx, k1, k2, k3 = jax.random.split(key, 4)
    x = jax.random.normal(kx, (N, C, H, W), dtype=jnp.float32)
    w1 = jax.random.normal(k1, (Cr, C), dtype=jnp.float32) * 0.2     # fc1
    w2 = jax.random.normal(k2, (C, Cr), dtype=jnp.float32) * 0.2     # fc2
    w_sa = jax.random.normal(k3, (2, KSIZE, KSIZE), dtype=jnp.float32) * 0.1

    out = cbam_pallas(x, w1, w2, w_sa)
    out = jax.block_until_ready(out)

    ref = cbam_reference(x, w1, w2, w_sa)
    assert out.shape == (N, C, H, W)
    err = float(jnp.max(jnp.abs(out - ref)))
    assert jnp.allclose(out, ref, atol=1e-4, rtol=1e-4), err

    print("KERNEL_OK")
</pallas_src>

<mosaic_0001>
module attributes {stable_mosaic.version = 11 : i64} {
  func.func @cbam_kernel(%arg0: i32, %arg1: memref<1x32x256xf32, #tpu.memory_space<vmem>>, %arg2: memref<32x2xf32, #tpu.memory_space<vmem>>, %arg3: memref<32x2xf32, #tpu.memory_space<vmem>>, %arg4: memref<98xf32, #tpu.memory_space<smem>>, %arg5: memref<1x32x256xf32, #tpu.memory_space<vmem>>, %arg6: memref<2x1x22x22xf32, #tpu.memory_space<vmem>>, %arg7: memref<1x1x256xf32, #tpu.memory_space<vmem>>) attributes {dimension_semantics = [#tpu.dimension_semantics<parallel>], iteration_bounds = array<i64: 2>, scalar_prefetch = 0 : i64, scratch_operands = 2 : i64, tpu.core_type = #tpu.core_type<tc>, window_params = [{transform_indices = @transform_0, window_bounds = array<i64: 1, 32, 256>}, {pipeline_mode = #tpu.pipeline_mode<synchronous>, transform_indices = @transform_1, window_bounds = array<i64: 32, 2>}, {pipeline_mode = #tpu.pipeline_mode<synchronous>, transform_indices = @transform_2, window_bounds = array<i64: 32, 2>}, {transform_indices = @transform_3, window_bounds = array<i64: 98>}, {transform_indices = @transform_4, window_bounds = array<i64: 1, 32, 256>}]} {
    %c0 = arith.constant 0 : index
    %c0_0 = arith.constant 0 : index
    %c0_1 = arith.constant 0 : index
    %0 = vector.load %arg1[%c0, %c0_0, %c0_1] : memref<1x32x256xf32, #tpu.memory_space<vmem>>, vector<1x32x256xf32>
    %cst = arith.constant dense<0.000000e+00> : vector<1x32xf32>
    %1 = vector.multi_reduction <add>, %0, %cst [2] : vector<1x32x256xf32> to vector<1x32xf32>
    %2 = vector.shape_cast %1 : vector<1x32xf32> to vector<1x32x1xf32>
    %cst_2 = arith.constant 2.560000e+02 : f32
    %3 = vector.broadcast %cst_2 : f32 to vector<1x32x1xf32>
    %4 = arith.divf %2, %3 : vector<1x32x1xf32>
    %cst_3 = arith.constant dense<0xFF800000> : vector<1x32xf32>
    %5 = vector.multi_reduction <maximumf>, %0, %cst_3 [2] : vector<1x32x256xf32> to vector<1x32xf32>
    %6 = vector.shape_cast %5 : vector<1x32xf32> to vector<1x32x1xf32>
    %7 = tpu.concatenate %4, %6 in 0 : vector<1x32x1xf32>, vector<1x32x1xf32> -> vector<2x32x1xf32>
    %c0_4 = arith.constant 0 : index
    %c0_5 = arith.constant 0 : index
    %8 = vector.load %arg2[%c0_4, %c0_5] : memref<32x2xf32, #tpu.memory_space<vmem>>, vector<32x2xf32>
    %c0_6 = arith.constant 0 : index
    %c0_7 = arith.constant 0 : index
    %9 = vector.load %arg3[%c0_6, %c0_7] : memref<32x2xf32, #tpu.memory_space<vmem>>, vector<32x2xf32>
    %cst_8 = arith.constant 0.000000e+00 : f32
    %10 = vector.broadcast %cst_8 : f32 to vector<2x32x1xf32>
    %11 = vector.extract_strided_slice %8 {offsets = [0, 0], sizes = [32, 1], strides = [1, 1]} : vector<32x2xf32> to vector<32x1xf32>
    %12 = vector.shape_cast %11 : vector<32x1xf32> to vector<1x32x1xf32>
    %13 = vector.broadcast %12 : vector<1x32x1xf32> to vector<2x32x1xf32>
    %14 = arith.mulf %7, %13 : vector<2x32x1xf32>
    %cst_9 = arith.constant dense<0.000000e+00> : vector<2x1xf32>
    %15 = vector.multi_reduction <add>, %14, %cst_9 [1] : vector<2x32x1xf32> to vector<2x1xf32>
    %16 = vector.shape_cast %15 : vector<2x1xf32> to vector<2x1x1xf32>
    %cst_10 = arith.constant 0.000000e+00 : f32
    %17 = vector.broadcast %cst_10 : f32 to vector<2x1x1xf32>
    %18 = arith.maximumf %16, %17 : vector<2x1x1xf32>
    %19 = vector.extract_strided_slice %9 {offsets = [0, 0], sizes = [32, 1], strides = [1, 1]} : vector<32x2xf32> to vector<32x1xf32>
    %20 = vector.shape_cast %19 : vector<32x1xf32> to vector<1x32x1xf32>
    %21 = vector.broadcast %18 : vector<2x1x1xf32> to vector<2x32x1xf32>
    %22 = vector.broadcast %20 : vector<1x32x1xf32> to vector<2x32x1xf32>
    %23 = arith.mulf %21, %22 : vector<2x32x1xf32>
    %24 = arith.addf %10, %23 : vector<2x32x1xf32>
    %25 = vector.extract_strided_slice %8 {offsets = [0, 1], sizes = [32, 1], strides = [1, 1]} : vector<32x2xf32> to vector<32x1xf32>
    %26 = vector.shape_cast %25 : vector<32x1xf32> to vector<1x32x1xf32>
    %27 = vector.broadcast %26 : vector<1x32x1xf32> to vector<2x32x1xf32>
    %28 = arith.mulf %7, %27 : vector<2x32x1xf32>
    %cst_11 = arith.constant dense<0.000000e+00> : vector<2x1xf32>
    %29 = vector.multi_reduction <add>, %28, %cst_11 [1] : vector<2x32x1xf32> to vector<2x1xf32>
    %30 = vector.shape_cast %29 : vector<2x1xf32> to vector<2x1x1xf32>
    %cst_12 = arith.constant 0.000000e+00 : f32
    %31 = vector.broadcast %cst_12 : f32 to vector<2x1x1xf32>
    %32 = arith.maximumf %30, %31 : vector<2x1x1xf32>
    %33 = vector.extract_strided_slice %9 {offsets = [0, 1], sizes = [32, 1], strides = [1, 1]} : vector<32x2xf32> to vector<32x1xf32>
    %34 = vector.shape_cast %33 : vector<32x1xf32> to vector<1x32x1xf32>
    %35 = vector.broadcast %32 : vector<2x1x1xf32> to vector<2x32x1xf32>
    %36 = vector.broadcast %34 : vector<1x32x1xf32> to vector<2x32x1xf32>
    %37 = arith.mulf %35, %36 : vector<2x32x1xf32>
    %38 = arith.addf %24, %37 : vector<2x32x1xf32>
    %39 = vector.extract_strided_slice %38 {offsets = [0, 0, 0], sizes = [1, 32, 1], strides = [1, 1, 1]} : vector<2x32x1xf32> to vector<1x32x1xf32>
    %40 = vector.extract_strided_slice %38 {offsets = [1, 0, 0], sizes = [1, 32, 1], strides = [1, 1, 1]} : vector<2x32x1xf32> to vector<1x32x1xf32>
    %41 = arith.addf %39, %40 : vector<1x32x1xf32>
    %42 = arith.negf %41 : vector<1x32x1xf32>
    %43 = math.exp %42 : vector<1x32x1xf32>
    %cst_13 = arith.constant 1.000000e+00 : f32
    %44 = vector.broadcast %cst_13 : f32 to vector<1x32x1xf32>
    %45 = arith.addf %44, %43 : vector<1x32x1xf32>
    %46 = arith.divf %44, %45 : vector<1x32x1xf32>
    %47 = vector.broadcast %46 : vector<1x32x1xf32> to vector<1x32x256xf32>
    %48 = arith.mulf %0, %47 : vector<1x32x256xf32>
    %cst_14 = arith.constant dense<0.000000e+00> : vector<1x256xf32>
    %49 = vector.multi_reduction <add>, %48, %cst_14 [1] : vector<1x32x256xf32> to vector<1x256xf32>
    %50 = vector.shape_cast %49 : vector<1x256xf32> to vector<1x1x256xf32>
    %cst_15 = arith.constant 3.200000e+01 : f32
    %51 = vector.broadcast %cst_15 : f32 to vector<1x1x256xf32>
    %52 = arith.divf %50, %51 : vector<1x1x256xf32>
    %cst_16 = arith.constant dense<0xFF800000> : vector<1x256xf32>
    %53 = vector.multi_reduction <maximumf>, %48, %cst_16 [1] : vector<1x32x256xf32> to vector<1x256xf32>
    %54 = vector.shape_cast %53 : vector<1x256xf32> to vector<1x1x256xf32>
    %cst_17 = arith.constant 0.000000e+00 : f32
    %55 = vector.broadcast %cst_17 : f32 to vector<2x1x22x22xf32>
    %c0_18 = arith.constant 0 : index
    %c0_19 = arith.constant 0 : index
    %c0_20 = arith.constant 0 : index
    %c0_21 = arith.constant 0 : index
    %56 = vector.load %arg6[%c0_18, %c0_19, %c0_20, %c0_21] : memref<2x1x22x22xf32, #tpu.memory_space<vmem>>, vector<2x1x22x22xf32>
    tpu.vector_store %arg6[%c0_18, %c0_19, %c0_20, %c0_21], %55 {strides = array<i32>} : memref<2x1x22x22xf32, #tpu.memory_space<vmem>>, vector<2x1x22x22xf32>,
    %57 = vector.extract_strided_slice %52 {offsets = [0, 0, 0], sizes = [1, 1, 16], strides = [1, 1, 1]} : vector<1x1x256xf32> to vector<1x1x16xf32>
    %c0_22 = arith.constant 0 : index
    %c0_23 = arith.constant 0 : index
    %c3 = arith.constant 3 : index
    %c3_24 = arith.constant 3 : index
    %58 = vector.load %arg6[%c0_22, %c0_23, %c3, %c3_24] : memref<2x1x22x22xf32, #tpu.memory_space<vmem>>, vector<1x1x1x16xf32>
    %59 = vector.shape_cast %58 : vector<1x1x1x16xf32> to vector<1x1x16xf32>
    %60 = vector.shape_cast %57 : vector<1x1x16xf32> to vector<1x1x1x16xf32>
    tpu.vector_store %arg6[%c0_22, %c0_23, %c3, %c3_24], %60 {strides = array<i32>} : memref<2x1x22x22xf32, #tpu.memory_space<vmem>>, vector<1x1x1x16xf32>,
    %61 = vector.extract_strided_slice %54 {offsets = [0, 0, 0], sizes = [1, 1, 16], strides = [1, 1, 1]} : vector<1x1x256xf32> to vector<1x1x16xf32>
    %c1 = arith.constant 1 : index
    %c0_25 = arith.constant 0 : index
    %c3_26 = arith.constant 3 : index
    %c3_27 = arith.constant 3 : index
    %62 = vector.load %arg6[%c1, %c0_25, %c3_26, %c3_27] : memref<2x1x22x22xf32, #tpu.memory_space<vmem>>, vector<1x1x1x16xf32>
    %63 = vector.shape_cast %62 : vector<1x1x1x16xf32> to vector<1x1x16xf32>
    %64 = vector.shape_cast %61 : vector<1x1x16xf32> to vector<1x1x1x16xf32>
    tpu.vector_store %arg6[%c1, %c0_25, %c3_26, %c3_27], %64 {strides = array<i32>} : memref<2x1x22x22xf32, #tpu.memory_space<vmem>>, vector<1x1x1x16xf32>,
    %65 = vector.extract_strided_slice %52 {offsets = [0, 0, 16], sizes = [1, 1, 16], strides = [1, 1, 1]} : vector<1x1x256xf32> to vector<1x1x16xf32>
    %c0_28 = arith.constant 0 : index
    %c0_29 = arith.constant 0 : index
    %c4 = arith.constant 4 : index
    %c3_30 = arith.constant 3 : index
    %66 = vector.load %arg6[%c0_28, %c0_29, %c4, %c3_30] : memref<2x1x22x22xf32, #tpu.memory_space<vmem>>, vector<1x1x1x16xf32>
    %67 = vector.shape_cast %66 : vector<1x1x1x16xf32> to vector<1x1x16xf32>
    %68 = vector.shape_cast %65 : vector<1x1x16xf32> to vector<1x1x1x16xf32>
    tpu.vector_store %arg6[%c0_28, %c0_29, %c4, %c3_30], %68 {strides = array<i32>} : memref<2x1x22x22xf32, #tpu.memory_space<vmem>>, vector<1x1x1x16xf32>,
    %69 = vector.extract_strided_slice %54 {offsets = [0, 0, 16], sizes = [1, 1, 16], strides = [1, 1, 1]} : vector<1x1x256xf32> to vector<1x1x16xf32>
    %c1_31 = arith.constant 1 : index
    %c0_32 = arith.constant 0 : index
    %c4_33 = arith.constant 4 : index
    %c3_34 = arith.constant 3 : index
    %70 = vector.load %arg6[%c1_31, %c0_32, %c4_33, %c3_34] : memref<2x1x22x22xf32, #tpu.memory_space<vmem>>, vector<1x1x1x16xf32>
    %71 = vector.shape_cast %70 : vector<1x1x1x16xf32> to vector<1x1x16xf32>
    %72 = vector.shape_cast %69 : vector<1x1x16xf32> to vector<1x1x1x16xf32>
    tpu.vector_store %arg6[%c1_31, %c0_32, %c4_33, %c3_34], %72 {strides = array<i32>} : memref<2x1x22x22xf32, #tpu.memory_space<vmem>>, vector<1x1x1x16xf32>,
    %73 = vector.extract_strided_slice %52 {offsets = [0, 0, 32], sizes = [1, 1, 16], strides = [1, 1, 1]} : vector<1x1x256xf32> to vector<1x1x16xf32>
    %c0_35 = arith.constant 0 : index
    %c0_36 = arith.constant 0 : index
    %c5 = arith.constant 5 : index
    %c3_37 = arith.constant 3 : index
    %74 = vector.load %arg6[%c0_35, %c0_36, %c5, %c3_37] : memref<2x1x22x22xf32, #tpu.memory_space<vmem>>, vector<1x1x1x16xf32>
    %75 = vector.shape_cast %74 : vector<1x1x1x16xf32> to vector<1x1x16xf32>
    %76 = vector.shape_cast %73 : vector<1x1x16xf32> to vector<1x1x1x16xf32>
    tpu.vector_store %arg6[%c0_35, %c0_36, %c5, %c3_37], %76 {strides = array<i32>} : memref<2x1x22x22xf32, #tpu.memory_space<vmem>>, vector<1x1x1x16xf32>,
    %77 = vector.extract_strided_slice %54 {offsets = [0, 0, 32], sizes = [1, 1, 16], strides = [1, 1, 1]} : vector<1x1x256xf32> to vector<1x1x16xf32>
    %c1_38 = arith.constant 1 : index
    %c0_39 = arith.constant 0 : index
    %c5_40 = arith.constant 5 : index
    %c3_41 = arith.constant 3 : index
    %78 = vector.load %arg6[%c1_38, %c0_39, %c5_40, %c3_41] : memref<2x1x22x22xf32, #tpu.memory_space<vmem>>, vector<1x1x1x16xf32>
    %79 = vector.shape_cast %78 : vector<1x1x1x16xf32> to vector<1x1x16xf32>
    %80 = vector.shape_cast %77 : vector<1x1x16xf32> to vector<1x1x1x16xf32>
    tpu.vector_store %arg6[%c1_38, %c0_39, %c5_40, %c3_41], %80 {strides = array<i32>} : memref<2x1x22x22xf32, #tpu.memory_space<vmem>>, vector<1x1x1x16xf32>,
    %81 = vector.extract_strided_slice %52 {offsets = [0, 0, 48], sizes = [1, 1, 16], strides = [1, 1, 1]} : vector<1x1x256xf32> to vector<1x1x16xf32>
    %c0_42 = arith.constant 0 : index
    %c0_43 = arith.constant 0 : index
    %c6 = arith.constant 6 : index
    %c3_44 = arith.constant 3 : index
    %82 = vector.load %arg6[%c0_42, %c0_43, %c6, %c3_44] : memref<2x1x22x22xf32, #tpu.memory_space<vmem>>, vector<1x1x1x16xf32>
    %83 = vector.shape_cast %82 : vector<1x1x1x16xf32> to vector<1x1x16xf32>
    %84 = vector.shape_cast %81 : vector<1x1x16xf32> to vector<1x1x1x16xf32>
    tpu.vector_store %arg6[%c0_42, %c0_43, %c6, %c3_44], %84 {strides = array<i32>} : memref<2x1x22x22xf32, #tpu.memory_space<vmem>>, vector<1x1x1x16xf32>,
    %85 = vector.extract_strided_slice %54 {offsets = [0, 0, 48], sizes = [1, 1, 16], strides = [1, 1, 1]} : vector<1x1x256xf32> to vector<1x1x16xf32>
    %c1_45 = arith.constant 1 : index
    %c0_46 = arith.constant 0 : index
    %c6_47 = arith.constant 6 : index
    %c3_48 = arith.constant 3 : index
    %86 = vector.load %arg6[%c1_45, %c0_46, %c6_47, %c3_48] : memref<2x1x22x22xf32, #tpu.memory_space<vmem>>, vector<1x1x1x16xf32>
    %87 = vector.shape_cast %86 : vector<1x1x1x16xf32> to vector<1x1x16xf32>
    %88 = vector.shape_cast %85 : vector<1x1x16xf32> to vector<1x1x1x16xf32>
    tpu.vector_store %arg6[%c1_45, %c0_46, %c6_47, %c3_48], %88 {strides = array<i32>} : memref<2x1x22x22xf32, #tpu.memory_space<vmem>>, vector<1x1x1x16xf32>,
    %89 = vector.extract_strided_slice %52 {offsets = [0, 0, 64], sizes = [1, 1, 16], strides = [1, 1, 1]} : vector<1x1x256xf32> to vector<1x1x16xf32>
    %c0_49 = arith.constant 0 : index
    %c0_50 = arith.constant 0 : index
    %c7 = arith.constant 7 : index
    %c3_51 = arith.constant 3 : index
    %90 = vector.load %arg6[%c0_49, %c0_50, %c7, %c3_51] : memref<2x1x22x22xf32, #tpu.memory_space<vmem>>, vector<1x1x1x16xf32>
    %91 = vector.shape_cast %90 : vector<1x1x1x16xf32> to vector<1x1x16xf32>
    %92 = vector.shape_cast %89 : vector<1x1x16xf32> to vector<1x1x1x16xf32>
    tpu.vector_store %arg6[%c0_49, %c0_50, %c7, %c3_51], %92 {strides = array<i32>} : memref<2x1x22x22xf32, #tpu.memory_space<vmem>>, vector<1x1x1x16xf32>,
    %93 = vector.extract_strided_slice %54 {offsets = [0, 0, 64], sizes = [1, 1, 16], strides = [1, 1, 1]} : vector<1x1x256xf32> to vector<1x1x16xf32>
    %c1_52 = arith.constant 1 : index
    %c0_53 = arith.constant 0 : index
    %c7_54 = arith.constant 7 : index
    %c3_55 = arith.constant 3 : index
    %94 = vector.load %arg6[%c1_52, %c0_53, %c7_54, %c3_55] : memref<2x1x22x22xf32, #tpu.memory_space<vmem>>, vector<1x1x1x16xf32>
    %95 = vector.shape_cast %94 : vector<1x1x1x16xf32> to vector<1x1x16xf32>
    %96 = vector.shape_cast %93 : vector<1x1x16xf32> to vector<1x1x1x16xf32>
    tpu.vector_store %arg6[%c1_52, %c0_53, %c7_54, %c3_55], %96 {strides = array<i32>} : memref<2x1x22x22xf32, #tpu.memory_space<vmem>>, vector<1x1x1x16xf32>,
    %97 = vector.extract_strided_slice %52 {offsets = [0, 0, 80], sizes = [1, 1, 16], strides = [1, 1, 1]} : vector<1x1x256xf32> to vector<1x1x16xf32>
    %c0_56 = arith.constant 0 : index
    %c0_57 = arith.constant 0 : index
    %c8 = arith.constant 8 : index
    %c3_58 = arith.constant 3 : index
    %98 = vector.load %arg6[%c0_56, %c0_57, %c8, %c3_58] : memref<2x1x22x22xf32, #tpu.memory_space<vmem>>, vector<1x1x1x16xf32>
    %99 = vector.shape_cast %98 : vector<1x1x1x16xf32> to vector<1x1x16xf32>
    %100 = vector.shape_cast %97 : vector<1x1x16xf32> to vector<1x1x1x16xf32>
    tpu.vector_store %arg6[%c0_56, %c0_57, %c8, %c3_58], %100 {strides = array<i32>} : memref<2x1x22x22xf32, #tpu.memory_space<vmem>>, vector<1x1x1x16xf32>,
    %101 = vector.extract_strided_slice %54 {offsets = [0, 0, 80], sizes = [1, 1, 16], strides = [1, 1, 1]} : vector<1x1x256xf32> to vector<1x1x16xf32>
    %c1_59 = arith.constant 1 : index
    %c0_60 = arith.constant 0 : index
    %c8_61 = arith.constant 8 : index
    %c3_62 = arith.constant 3 : index
    %102 = vector.load %arg6[%c1_59, %c0_60, %c8_61, %c3_62] : memref<2x1x22x22xf32, #tpu.memory_space<vmem>>, vector<1x1x1x16xf32>
    %103 = vector.shape_cast %102 : vector<1x1x1x16xf32> to vector<1x1x16xf32>
    %104 = vector.shape_cast %101 : vector<1x1x16xf32> to vector<1x1x1x16xf32>
    tpu.vector_store %arg6[%c1_59, %c0_60, %c8_61, %c3_62], %104 {strides = array<i32>} : memref<2x1x22x22xf32, #tpu.memory_space<vmem>>, vector<1x1x1x16xf32>,
    %105 = vector.extract_strided_slice %52 {offsets = [0, 0, 96], sizes = [1, 1, 16], strides = [1, 1, 1]} : vector<1x1x256xf32> to vector<1x1x16xf32>
    %c0_63 = arith.constant 0 : index
    %c0_64 = arith.constant 0 : index
    %c9 = arith.constant 9 : index
    %c3_65 = arith.constant 3 : index
    %106 = vector.load %arg6[%c0_63, %c0_64, %c9, %c3_65] : memref<2x1x22x22xf32, #tpu.memory_space<vmem>>, vector<1x1x1x16xf32>
    %107 = vector.shape_cast %106 : vector<1x1x1x16xf32> to vector<1x1x16xf32>
    %108 = vector.shape_cast %105 : vector<1x1x16xf32> to vector<1x1x1x16xf32>
    tpu.vector_store %arg6[%c0_63, %c0_64, %c9, %c3_65], %108 {strides = array<i32>} : memref<2x1x22x22xf32, #tpu.memory_space<vmem>>, vector<1x1x1x16xf32>,
    %109 = vector.extract_strided_slice %54 {offsets = [0, 0, 96], sizes = [1, 1, 16], strides = [1, 1, 1]} : vector<1x1x256xf32> to vector<1x1x16xf32>
    %c1_66 = arith.constant 1 : index
    %c0_67 = arith.constant 0 : index
    %c9_68 = arith.constant 9 : index
    %c3_69 = arith.constant 3 : index
    %110 = vector.load %arg6[%c1_66, %c0_67, %c9_68, %c3_69] : memref<2x1x22x22xf32, #tpu.memory_space<vmem>>, vector<1x1x1x16xf32>
    %111 = vector.shape_cast %110 : vector<1x1x1x16xf32> to vector<1x1x16xf32>
    %112 = vector.shape_cast %109 : vector<1x1x16xf32> to vector<1x1x1x16xf32>
    tpu.vector_store %arg6[%c1_66, %c0_67, %c9_68, %c3_69], %112 {strides = array<i32>} : memref<2x1x22x22xf32, #tpu.memory_space<vmem>>, vector<1x1x1x16xf32>,
    %113 = vector.extract_strided_slice %52 {offsets = [0, 0, 112], sizes = [1, 1, 16], strides = [1, 1, 1]} : vector<1x1x256xf32> to vector<1x1x16xf32>
    %c0_70 = arith.constant 0 : index
    %c0_71 = arith.constant 0 : index
    %c10 = arith.constant 10 : index
    %c3_72 = arith.constant 3 : index
    %114 = vector.load %arg6[%c0_70, %c0_71, %c10, %c3_72] : memref<2x1x22x22xf32, #tpu.memory_space<vmem>>, vector<1x1x1x16xf32>
    %115 = vector.shape_cast %114 : vector<1x1x1x16xf32> to vector<1x1x16xf32>
    %116 = vector.shape_cast %113 : vector<1x1x16xf32> to vector<1x1x1x16xf32>
    tpu.vector_store %arg6[%c0_70, %c0_71, %c10, %c3_72], %116 {strides = array<i32>} : memref<2x1x22x22xf32, #tpu.memory_space<vmem>>, vector<1x1x1x16xf32>,
    %117 = vector.extract_strided_slice %54 {offsets = [0, 0, 112], sizes = [1, 1, 16], strides = [1, 1, 1]} : vector<1x1x256xf32> to vector<1x1x16xf32>
    %c1_73 = arith.constant 1 : index
    %c0_74 = arith.constant 0 : index
    %c10_75 = arith.constant 10 : index
    %c3_76 = arith.constant 3 : index
    %118 = vector.load %arg6[%c1_73, %c0_74, %c10_75, %c3_76] : memref<2x1x22x22xf32, #tpu.memory_space<vmem>>, vector<1x1x1x16xf32>
    %119 = vector.shape_cast %118 : vector<1x1x1x16xf32> to vector<1x1x16xf32>
    %120 = vector.shape_cast %117 : vector<1x1x16xf32> to vector<1x1x1x16xf32>
    tpu.vector_store %arg6[%c1_73, %c0_74, %c10_75, %c3_76], %120 {strides = array<i32>} : memref<2x1x22x22xf32, #tpu.memory_space<vmem>>, vector<1x1x1x16xf32>,
    %121 = vector.extract_strided_slice %52 {offsets = [0, 0, 128], sizes = [1, 1, 16], strides = [1, 1, 1]} : vector<1x1x256xf32> to vector<1x1x16xf32>
    %c0_77 = arith.constant 0 : index
    %c0_78 = arith.constant 0 : index
    %c11 = arith.constant 11 : index
    %c3_79 = arith.constant 3 : index
    %122 = vector.load %arg6[%c0_77, %c0_78, %c11, %c3_79] : memref<2x1x22x22xf32, #tpu.memory_space<vmem>>, vector<1x1x1x16xf32>
    %123 = vector.shape_cast %122 : vector<1x1x1x16xf32> to vector<1x1x16xf32>
    %124 = vector.shape_cast %121 : vector<1x1x16xf32> to vector<1x1x1x16xf32>
    tpu.vector_store %arg6[%c0_77, %c0_78, %c11, %c3_79], %124 {strides = array<i32>} : memref<2x1x22x22xf32, #tpu.memory_space<vmem>>, vector<1x1x1x16xf32>,
    %125 = vector.extract_strided_slice %54 {offsets = [0, 0, 128], sizes = [1, 1, 16], strides = [1, 1, 1]} : vector<1x1x256xf32> to vector<1x1x16xf32>
    %c1_80 = arith.constant 1 : index
    %c0_81 = arith.constant 0 : index
    %c11_82 = arith.constant 11 : index
    %c3_83 = arith.constant 3 : index
    %126 = vector.load %arg6[%c1_80, %c0_81, %c11_82, %c3_83] : memref<2x1x22x22xf32, #tpu.memory_space<vmem>>, vector<1x1x1x16xf32>
    %127 = vector.shape_cast %126 : vector<1x1x1x16xf32> to vector<1x1x16xf32>
    %128 = vector.shape_cast %125 : vector<1x1x16xf32> to vector<1x1x1x16xf32>
    tpu.vector_store %arg6[%c1_80, %c0_81, %c11_82, %c3_83], %128 {strides = array<i32>} : memref<2x1x22x22xf32, #tpu.memory_space<vmem>>, vector<1x1x1x16xf32>,
    %129 = vector.extract_strided_slice %52 {offsets = [0, 0, 144], sizes = [1, 1, 16], strides = [1, 1, 1]} : vector<1x1x256xf32> to vector<1x1x16xf32>
    %c0_84 = arith.constant 0 : index
    %c0_85 = arith.constant 0 : index
    %c12 = arith.constant 12 : index
    %c3_86 = arith.constant 3 : index
    %130 = vector.load %arg6[%c0_84, %c0_85, %c12, %c3_86] : memref<2x1x22x22xf32, #tpu.memory_space<vmem>>, vector<1x1x1x16xf32>
    %131 = vector.shape_cast %130 : vector<1x1x1x16xf32> to vector<1x1x16xf32>
    %132 = vector.shape_cast %129 : vector<1x1x16xf32> to vector<1x1x1x16xf32>
    tpu.vector_store %arg6[%c0_84, %c0_85, %c12, %c3_86], %132 {strides = array<i32>} : memref<2x1x22x22xf32, #tpu.memory_space<vmem>>, vector<1x1x1x16xf32>,
    %133 = vector.extract_strided_slice %54 {offsets = [0, 0, 144], sizes = [1, 1, 16], strides = [1, 1, 1]} : vector<1x1x256xf32> to vector<1x1x16xf32>
    %c1_87 = arith.constant 1 : index
    %c0_88 = arith.constant 0 : index
    %c12_89 = arith.constant 12 : index
    %c3_90 = arith.constant 3 : index
    %134 = vector.load %arg6[%c1_87, %c0_88, %c12_89, %c3_90] : memref<2x1x22x22xf32, #tpu.memory_space<vmem>>, vector<1x1x1x16xf32>
    %135 = vector.shape_cast %134 : vector<1x1x1x16xf32> to vector<1x1x16xf32>
    %136 = vector.shape_cast %133 : vector<1x1x16xf32> to vector<1x1x1x16xf32>
    tpu.vector_store %arg6[%c1_87, %c0_88, %c12_89, %c3_90], %136 {strides = array<i32>} : memref<2x1x22x22xf32, #tpu.memory_space<vmem>>, vector<1x1x1x16xf32>,
    %137 = vector.extract_strided_slice %52 {offsets = [0, 0, 160], sizes = [1, 1, 16], strides = [1, 1, 1]} : vector<1x1x256xf32> to vector<1x1x16xf32>
    %c0_91 = arith.constant 0 : index
    %c0_92 = arith.constant 0 : index
    %c13 = arith.constant 13 : index
    %c3_93 = arith.constant 3 : index
    %138 = vector.load %arg6[%c0_91, %c0_92, %c13, %c3_93] : memref<2x1x22x22xf32, #tpu.memory_space<vmem>>, vector<1x1x1x16xf32>
    %139 = vector.shape_cast %138 : vector<1x1x1x16xf32> to vector<1x1x16xf32>
    %140 = vector.shape_cast %137 : vector<1x1x16xf32> to vector<1x1x1x16xf32>
    tpu.vector_store %arg6[%c0_91, %c0_92, %c13, %c3_93], %140 {strides = array<i32>} : memref<2x1x22x22xf32, #tpu.memory_space<vmem>>, vector<1x1x1x16xf32>,
    %141 = vector.extract_strided_slice %54 {offsets = [0, 0, 160], sizes = [1, 1, 16], strides = [1, 1, 1]} : vector<1x1x256xf32> to vector<1x1x16xf32>
    %c1_94 = arith.constant 1 : index
    %c0_95 = arith.constant 0 : index
    %c13_96 = arith.constant 13 : index
    %c3_97 = arith.constant 3 : index
    %142 = vector.load %arg6[%c1_94, %c0_95, %c13_96, %c3_97] : memref<2x1x22x22xf32, #tpu.memory_space<vmem>>, vector<1x1x1x16xf32>
    %143 = vector.shape_cast %142 : vector<1x1x1x16xf32> to vector<1x1x16xf32>
    %144 = vector.shape_cast %141 : vector<1x1x16xf32> to vector<1x1x1x16xf32>
    tpu.vector_store %arg6[%c1_94, %c0_95, %c13_96, %c3_97], %144 {strides = array<i32>} : memref<2x1x22x22xf32, #tpu.memory_space<vmem>>, vector<1x1x1x16xf32>,
    %145 = vector.extract_strided_slice %52 {offsets = [0, 0, 176], sizes = [1, 1, 16], strides = [1, 1, 1]} : vector<1x1x256xf32> to vector<1x1x16xf32>
    %c0_98 = arith.constant 0 : index
    %c0_99 = arith.constant 0 : index
    %c14 = arith.constant 14 : index
    %c3_100 = arith.constant 3 : index
    %146 = vector.load %arg6[%c0_98, %c0_99, %c14, %c3_100] : memref<2x1x22x22xf32, #tpu.memory_space<vmem>>, vector<1x1x1x16xf32>
    %147 = vector.shape_cast %146 : vector<1x1x1x16xf32> to vector<1x1x16xf32>
    %148 = vector.shape_cast %145 : vector<1x1x16xf32> to vector<1x1x1x16xf32>
    tpu.vector_store %arg6[%c0_98, %c0_99, %c14, %c3_100], %148 {strides = array<i32>} : memref<2x1x22x22xf32, #tpu.memory_space<vmem>>, vector<1x1x1x16xf32>,
    %149 = vector.extract_strided_slice %54 {offsets = [0, 0, 176], sizes = [1, 1, 16], strides = [1, 1, 1]} : vector<1x1x256xf32> to vector<1x1x16xf32>
    %c1_101 = arith.constant 1 : index
    %c0_102 = arith.constant 0 : index
    %c14_103 = arith.constant 14 : index
    %c3_104 = arith.constant 3 : index
    %150 = vector.load %arg6[%c1_101, %c0_102, %c14_103, %c3_104] : memref<2x1x22x22xf32, #tpu.memory_space<vmem>>, vector<1x1x1x16xf32>
    %151 = vector.shape_cast %150 : vector<1x1x1x16xf32> to vector<1x1x16xf32>
    %152 = vector.shape_cast %149 : vector<1x1x16xf32> to vector<1x1x1x16xf32>
    tpu.vector_store %arg6[%c1_101, %c0_102, %c14_103, %c3_104], %152 {strides = array<i32>} : memref<2x1x22x22xf32, #tpu.memory_space<vmem>>, vector<1x1x1x16xf32>,
    %153 = vector.extract_strided_slice %52 {offsets = [0, 0, 192], sizes = [1, 1, 16], strides = [1, 1, 1]} : vector<1x1x256xf32> to vector<1x1x16xf32>
    %c0_105 = arith.constant 0 : index
    %c0_106 = arith.constant 0 : index
    %c15 = arith.constant 15 : index
    %c3_107 = arith.constant 3 : index
    %154 = vector.load %arg6[%c0_105, %c0_106, %c15, %c3_107] : memref<2x1x22x22xf32, #tpu.memory_space<vmem>>, vector<1x1x1x16xf32>
    %155 = vector.shape_cast %154 : vector<1x1x1x16xf32> to vector<1x1x16xf32>
    %156 = vector.shape_cast %153 : vector<1x1x16xf32> to vector<1x1x1x16xf32>
    tpu.vector_store %arg6[%c0_105, %c0_106, %c15, %c3_107], %156 {strides = array<i32>} : memref<2x1x22x22xf32, #tpu.memory_space<vmem>>, vector<1x1x1x16xf32>,
    %157 = vector.extract_strided_slice %54 {offsets = [0, 0, 192], sizes = [1, 1, 16], strides = [1, 1, 1]} : vector<1x1x256xf32> to vector<1x1x16xf32>
    %c1_108 = arith.constant 1 : index
    %c0_109 = arith.constant 0 : index
    %c15_110 = arith.constant 15 : index
    %c3_111 = arith.constant 3 : index
    %158 = vector.load %arg6[%c1_108, %c0_109, %c15_110, %c3_111] : memref<2x1x22x22xf32, #tpu.memory_space<vmem>>, vector<1x1x1x16xf32>
    %159 = vector.shape_cast %158 : vector<1x1x1x16xf32> to vector<1x1x16xf32>
    %160 = vector.shape_cast %157 : vector<1x1x16xf32> to vector<1x1x1x16xf32>
    tpu.vector_store %arg6[%c1_108, %c0_109, %c15_110, %c3_111], %160 {strides = array<i32>} : memref<2x1x22x22xf32, #tpu.memory_space<vmem>>, vector<1x1x1x16xf32>,
    %161 = vector.extract_strided_slice %52 {offsets = [0, 0, 208], sizes = [1, 1, 16], strides = [1, 1, 1]} : vector<1x1x256xf32> to vector<1x1x16xf32>
    %c0_112 = arith.constant 0 : index
    %c0_113 = arith.constant 0 : index
    %c16 = arith.constant 16 : index
    %c3_114 = arith.constant 3 : index
    %162 = vector.load %arg6[%c0_112, %c0_113, %c16, %c3_114] : memref<2x1x22x22xf32, #tpu.memory_space<vmem>>, vector<1x1x1x16xf32>
    %163 = vector.shape_cast %162 : vector<1x1x1x16xf32> to vector<1x1x16xf32>
    %164 = vector.shape_cast %161 : vector<1x1x16xf32> to vector<1x1x1x16xf32>
    tpu.vector_store %arg6[%c0_112, %c0_113, %c16, %c3_114], %164 {strides = array<i32>} : memref<2x1x22x22xf32, #tpu.memory_space<vmem>>, vector<1x1x1x16xf32>,
    %165 = vector.extract_strided_slice %54 {offsets = [0, 0, 208], sizes = [1, 1, 16], strides = [1, 1, 1]} : vector<1x1x256xf32> to vector<1x1x16xf32>
    %c1_115 = arith.constant 1 : index
    %c0_116 = arith.constant 0 : index
    %c16_117 = arith.constant 16 : index
    %c3_118 = arith.constant 3 : index
    %166 = vector.load %arg6[%c1_115, %c0_116, %c16_117, %c3_118] : memref<2x1x22x22xf32, #tpu.memory_space<vmem>>, vector<1x1x1x16xf32>
    %167 = vector.shape_cast %166 : vector<1x1x1x16xf32> to vector<1x1x16xf32>
    %168 = vector.shape_cast %165 : vector<1x1x16xf32> to vector<1x1x1x16xf32>
    tpu.vector_store %arg6[%c1_115, %c0_116, %c16_117, %c3_118], %168 {strides = array<i32>} : memref<2x1x22x22xf32, #tpu.memory_space<vmem>>, vector<1x1x1x16xf32>,
    %169 = vector.extract_strided_slice %52 {offsets = [0, 0, 224], sizes = [1, 1, 16], strides = [1, 1, 1]} : vector<1x1x256xf32> to vector<1x1x16xf32>
    %c0_119 = arith.constant 0 : index
    %c0_120 = arith.constant 0 : index
    %c17 = arith.constant 17 : index
    %c3_121 = arith.constant 3 : index
    %170 = vector.load %arg6[%c0_119, %c0_120, %c17, %c3_121] : memref<2x1x22x22xf32, #tpu.memory_space<vmem>>, vector<1x1x1x16xf32>
    %171 = vector.shape_cast %170 : vector<1x1x1x16xf32> to vector<1x1x16xf32>
    %172 = vector.shape_cast %169 : vector<1x1x16xf32> to vector<1x1x1x16xf32>
    tpu.vector_store %arg6[%c0_119, %c0_120, %c17, %c3_121], %172 {strides = array<i32>} : memref<2x1x22x22xf32, #tpu.memory_space<vmem>>, vector<1x1x1x16xf32>,
    %173 = vector.extract_strided_slice %54 {offsets = [0, 0, 224], sizes = [1, 1, 16], strides = [1, 1, 1]} : vector<1x1x256xf32> to vector<1x1x16xf32>
    %c1_122 = arith.constant 1 : index
    %c0_123 = arith.constant 0 : index
    %c17_124 = arith.constant 17 : index
    %c3_125 = arith.constant 3 : index
    %174 = vector.load %arg6[%c1_122, %c0_123, %c17_124, %c3_125] : memref<2x1x22x22xf32, #tpu.memory_space<vmem>>, vector<1x1x1x16xf32>
    %175 = vector.shape_cast %174 : vector<1x1x1x16xf32> to vector<1x1x16xf32>
    %176 = vector.shape_cast %173 : vector<1x1x16xf32> to vector<1x1x1x16xf32>
    tpu.vector_store %arg6[%c1_122, %c0_123, %c17_124, %c3_125], %176 {strides = array<i32>} : memref<2x1x22x22xf32, #tpu.memory_space<vmem>>, vector<1x1x1x16xf32>,
    %177 = vector.extract_strided_slice %52 {offsets = [0, 0, 240], sizes = [1, 1, 16], strides = [1, 1, 1]} : vector<1x1x256xf32> to vector<1x1x16xf32>
    %c0_126 = arith.constant 0 : index
    %c0_127 = arith.constant 0 : index
    %c18 = arith.constant 18 : index
    %c3_128 = arith.constant 3 : index
    %178 = vector.load %arg6[%c0_126, %c0_127, %c18, %c3_128] : memref<2x1x22x22xf32, #tpu.memory_space<vmem>>, vector<1x1x1x16xf32>
    %179 = vector.shape_cast %178 : vector<1x1x1x16xf32> to vector<1x1x16xf32>
    %180 = vector.shape_cast %177 : vector<1x1x16xf32> to vector<1x1x1x16xf32>
    tpu.vector_store %arg6[%c0_126, %c0_127, %c18, %c3_128], %180 {strides = array<i32>} : memref<2x1x22x22xf32, #tpu.memory_space<vmem>>, vector<1x1x1x16xf32>,
    %181 = vector.extract_strided_slice %54 {offsets = [0, 0, 240], sizes = [1, 1, 16], strides = [1, 1, 1]} : vector<1x1x256xf32> to vector<1x1x16xf32>
    %c1_129 = arith.constant 1 : index
    %c0_130 = arith.constant 0 : index
    %c18_131 = arith.constant 18 : index
    %c3_132 = arith.constant 3 : index
    %182 = vector.load %arg6[%c1_129, %c0_130, %c18_131, %c3_132] : memref<2x1x22x22xf32, #tpu.memory_space<vmem>>, vector<1x1x1x16xf32>
    %183 = vector.shape_cast %182 : vector<1x1x1x16xf32> to vector<1x1x16xf32>
    %184 = vector.shape_cast %181 : vector<1x1x16xf32> to vector<1x1x1x16xf32>
    tpu.vector_store %arg6[%c1_129, %c0_130, %c18_131, %c3_132], %184 {strides = array<i32>} : memref<2x1x22x22xf32, #tpu.memory_space<vmem>>, vector<1x1x1x16xf32>,
    %c0_133 = arith.constant 0 : index
    %c0_134 = arith.constant 0 : index
    %c0_135 = arith.constant 0 : index
    %c0_136 = arith.constant 0 : index
    %185 = vector.load %arg6[%c0_133, %c0_134, %c0_135, %c0_136] : memref<2x1x22x22xf32, #tpu.memory_space<vmem>>, vector<1x1x22x22xf32>
    %186 = vector.shape_cast %185 : vector<1x1x22x22xf32> to vector<1x22x22xf32>
    %c1_137 = arith.constant 1 : index
    %c0_138 = arith.constant 0 : index
    %c0_139 = arith.constant 0 : index
    %c0_140 = arith.constant 0 : index
    %187 = vector.load %arg6[%c1_137, %c0_138, %c0_139, %c0_140] : memref<2x1x22x22xf32, #tpu.memory_space<vmem>>, vector<1x1x22x22xf32>
    %188 = vector.shape_cast %187 : vector<1x1x22x22xf32> to vector<1x22x22xf32>
    %189 = vector.extract_strided_slice %186 {offsets = [0, 0, 0], sizes = [1, 22, 16], strides = [1, 1, 1]} : vector<1x22x22xf32> to vector<1x22x16xf32>
    %190 = vector.extract_strided_slice %186 {offsets = [0, 0, 1], sizes = [1, 22, 16], strides = [1, 1, 1]} : vector<1x22x22xf32> to vector<1x22x16xf32>
    %191 = vector.extract_strided_slice %186 {offsets = [0, 0, 2], sizes = [1, 22, 16], strides = [1, 1, 1]} : vector<1x22x22xf32> to vector<1x22x16xf32>
    %192 = vector.extract_strided_slice %186 {offsets = [0, 0, 3], sizes = [1, 22, 16], strides = [1, 1, 1]} : vector<1x22x22xf32> to vector<1x22x16xf32>
    %193 = vector.extract_strided_slice %186 {offsets = [0, 0, 4], sizes = [1, 22, 16], strides = [1, 1, 1]} : vector<1x22x22xf32> to vector<1x22x16xf32>
    %194 = vector.extract_strided_slice %186 {offsets = [0, 0, 5], sizes = [1, 22, 16], strides = [1, 1, 1]} : vector<1x22x22xf32> to vector<1x22x16xf32>
    %195 = vector.extract_strided_slice %186 {offsets = [0, 0, 6], sizes = [1, 22, 16], strides = [1, 1, 1]} : vector<1x22x22xf32> to vector<1x22x16xf32>
    %196 = vector.extract_strided_slice %188 {offsets = [0, 0, 0], sizes = [1, 22, 16], strides = [1, 1, 1]} : vector<1x22x22xf32> to vector<1x22x16xf32>
    %197 = vector.extract_strided_slice %188 {offsets = [0, 0, 1], sizes = [1, 22, 16], strides = [1, 1, 1]} : vector<1x22x22xf32> to vector<1x22x16xf32>
    %198 = vector.extract_strided_slice %188 {offsets = [0, 0, 2], sizes = [1, 22, 16], strides = [1, 1, 1]} : vector<1x22x22xf32> to vector<1x22x16xf32>
    %199 = vector.extract_strided_slice %188 {offsets = [0, 0, 3], sizes = [1, 22, 16], strides = [1, 1, 1]} : vector<1x22x22xf32> to vector<1x22x16xf32>
    %200 = vector.extract_strided_slice %188 {offsets = [0, 0, 4], sizes = [1, 22, 16], strides = [1, 1, 1]} : vector<1x22x22xf32> to vector<1x22x16xf32>
    %201 = vector.extract_strided_slice %188 {offsets = [0, 0, 5], sizes = [1, 22, 16], strides = [1, 1, 1]} : vector<1x22x22xf32> to vector<1x22x16xf32>
    %202 = vector.extract_strided_slice %188 {offsets = [0, 0, 6], sizes = [1, 22, 16], strides = [1, 1, 1]} : vector<1x22x22xf32> to vector<1x22x16xf32>
    %cst_141 = arith.constant 0.000000e+00 : f32
    %203 = vector.broadcast %cst_141 : f32 to vector<1x16x16xf32>
    %cst_142 = arith.constant 0.000000e+00 : f32
    %204 = vector.broadcast %cst_142 : f32 to vector<1x22x16xf32>
    %c0_143 = arith.constant 0 : index
    %205 = memref.load %arg4[%c0_143] : memref<98xf32, #tpu.memory_space<smem>>
    %c49 = arith.constant 49 : index
    %206 = memref.load %arg4[%c49] : memref<98xf32, #tpu.memory_space<smem>>
    %207 = vector.broadcast %205 : f32 to vector<1x22x16xf32>
    %208 = arith.mulf %207, %189 : vector<1x22x16xf32>
    %209 = arith.addf %204, %208 : vector<1x22x16xf32>
    %210 = vector.broadcast %206 : f32 to vector<1x22x16xf32>
    %211 = arith.mulf %210, %196 : vector<1x22x16xf32>
    %212 = arith.addf %209, %211 : vector<1x22x16xf32>
    %c1_144 = arith.constant 1 : index
    %213 = memref.load %arg4[%c1_144] : memref<98xf32, #tpu.memory_space<smem>>
    %c50 = arith.constant 50 : index
    %214 = memref.load %arg4[%c50] : memref<98xf32, #tpu.memory_space<smem>>
    %215 = vector.broadcast %213 : f32 to vector<1x22x16xf32>
    %216 = arith.mulf %215, %190 : vector<1x22x16xf32>
    %217 = arith.addf %212, %216 : vector<1x22x16xf32>
    %218 = vector.broadcast %214 : f32 to vector<1x22x16xf32>
    %219 = arith.mulf %218, %197 : vector<1x22x16xf32>
    %220 = arith.addf %217, %219 : vector<1x22x16xf32>
    %c2 = arith.constant 2 : index
    %221 = memref.load %arg4[%c2] : memref<98xf32, #tpu.memory_space<smem>>
    %c51 = arith.constant 51 : index
    %222 = memref.load %arg4[%c51] : memref<98xf32, #tpu.memory_space<smem>>
    %223 = vector.broadcast %221 : f32 to vector<1x22x16xf32>
    %224 = arith.mulf %223, %191 : vector<1x22x16xf32>
    %225 = arith.addf %220, %224 : vector<1x22x16xf32>
    %226 = vector.broadcast %222 : f32 to vector<1x22x16xf32>
    %227 = arith.mulf %226, %198 : vector<1x22x16xf32>
    %228 = arith.addf %225, %227 : vector<1x22x16xf32>
    %c3_145 = arith.constant 3 : index
    %229 = memref.load %arg4[%c3_145] : memref<98xf32, #tpu.memory_space<smem>>
    %c52 = arith.constant 52 : index
    %230 = memref.load %arg4[%c52] : memref<98xf32, #tpu.memory_space<smem>>
    %231 = vector.broadcast %229 : f32 to vector<1x22x16xf32>
    %232 = arith.mulf %231, %192 : vector<1x22x16xf32>
    %233 = arith.addf %228, %232 : vector<1x22x16xf32>
    %234 = vector.broadcast %230 : f32 to vector<1x22x16xf32>
    %235 = arith.mulf %234, %199 : vector<1x22x16xf32>
    %236 = arith.addf %233, %235 : vector<1x22x16xf32>
    %c4_146 = arith.constant 4 : index
    %237 = memref.load %arg4[%c4_146] : memref<98xf32, #tpu.memory_space<smem>>
    %c53 = arith.constant 53 : index
    %238 = memref.load %arg4[%c53] : memref<98xf32, #tpu.memory_space<smem>>
    %239 = vector.broadcast %237 : f32 to vector<1x22x16xf32>
    %240 = arith.mulf %239, %193 : vector<1x22x16xf32>
    %241 = arith.addf %236, %240 : vector<1x22x16xf32>
    %242 = vector.broadcast %238 : f32 to vector<1x22x16xf32>
    %243 = arith.mulf %242, %200 : vector<1x22x16xf32>
    %244 = arith.addf %241, %243 : vector<1x22x16xf32>
    %c5_147 = arith.constant 5 : index
    %245 = memref.load %arg4[%c5_147] : memref<98xf32, #tpu.memory_space<smem>>
    %c54 = arith.constant 54 : index
    %246 = memref.load %arg4[%c54] : memref<98xf32, #tpu.memory_space<smem>>
    %247 = vector.broadcast %245 : f32 to vector<1x22x16xf32>
    %248 = arith.mulf %247, %194 : vector<1x22x16xf32>
    %249 = arith.addf %244, %248 : vector<1x22x16xf32>
    %250 = vector.broadcast %246 : f32 to vector<1x22x16xf32>
    %251 = arith.mulf %250, %201 : vector<1x22x16xf32>
    %252 = arith.addf %249, %251 : vector<1x22x16xf32>
    %c6_148 = arith.constant 6 : index
    %253 = memref.load %arg4[%c6_148] : memref<98xf32, #tpu.memory_space<smem>>
    %c55 = arith.constant 55 : index
    %254 = memref.load %arg4[%c55] : memref<98xf32, #tpu.memory_space<smem>>
    %255 = vector.broadcast %253 : f32 to vector<1x22x16xf32>
    %256 = arith.mulf %255, %195 : vector<1x22x16xf32>
    %257 = arith.addf %252, %256 : vector<1x22x16xf32>
    %258 = vector.broadcast %254 : f32 to vector<1x22x16xf32>
    %259 = arith.mulf %258, %202 : vector<1x22x16xf32>
    %260 = arith.addf %257, %259 : vector<1x22x16xf32>
    %261 = vector.extract_strided_slice %260 {offsets = [0, 0, 0], sizes = [1, 16, 16], strides = [1, 1, 1]} : vector<1x22x16xf32> to vector<1x16x16xf32>
    %262 = arith.addf %203, %261 : vector<1x16x16xf32>
    %cst_149 = arith.constant 0.000000e+00 : f32
    %263 = vector.broadcast %cst_149 : f32 to vector<1x22x16xf32>
    %c7_150 = arith.constant 7 : index
    %264 = memref.load %arg4[%c7_150] : memref<98xf32, #tpu.memory_space<smem>>
    %c56 = arith.constant 56 : index
    %265 = memref.load %arg4[%c56] : memref<98xf32, #tpu.memory_space<smem>>
    %266 = vector.broadcast %264 : f32 to vector<1x22x16xf32>
    %267 = arith.mulf %266, %189 : vector<1x22x16xf32>
    %268 = arith.addf %263, %267 : vector<1x22x16xf32>
    %269 = vector.broadcast %265 : f32 to vector<1x22x16xf32>
    %270 = arith.mulf %269, %196 : vector<1x22x16xf32>
    %271 = arith.addf %268, %270 : vector<1x22x16xf32>
    %c8_151 = arith.constant 8 : index
    %272 = memref.load %arg4[%c8_151] : memref<98xf32, #tpu.memory_space<smem>>
    %c57 = arith.constant 57 : index
    %273 = memref.load %arg4[%c57] : memref<98xf32, #tpu.memory_space<smem>>
    %274 = vector.broadcast %272 : f32 to vector<1x22x16xf32>
    %275 = arith.mulf %274, %190 : vector<1x22x16xf32>
    %276 = arith.addf %271, %275 : vector<1x22x16xf32>
    %277 = vector.broadcast %273 : f32 to vector<1x22x16xf32>
    %278 = arith.mulf %277, %197 : vector<1x22x16xf32>
    %279 = arith.addf %276, %278 : vector<1x22x16xf32>
    %c9_152 = arith.constant 9 : index
    %280 = memref.load %arg4[%c9_152] : memref<98xf32, #tpu.memory_space<smem>>
    %c58 = arith.constant 58 : index
    %281 = memref.load %arg4[%c58] : memref<98xf32, #tpu.memory_space<smem>>
    %282 = vector.broadcast %280 : f32 to vector<1x22x16xf32>
    %283 = arith.mulf %282, %191 : vector<1x22x16xf32>
    %284 = arith.addf %279, %283 : vector<1x22x16xf32>
    %285 = vector.broadcast %281 : f32 to vector<1x22x16xf32>
    %286 = arith.mulf %285, %198 : vector<1x22x16xf32>
    %287 = arith.addf %284, %286 : vector<1x22x16xf32>
    %c10_153 = arith.constant 10 : index
    %288 = memref.load %arg4[%c10_153] : memref<98xf32, #tpu.memory_space<smem>>
    %c59 = arith.constant 59 : index
    %289 = memref.load %arg4[%c59] : memref<98xf32, #tpu.memory_space<smem>>
    %290 = vector.broadcast %288 : f32 to vector<1x22x16xf32>
    %291 = arith.mulf %290, %192 : vector<1x22x16xf32>
    %292 = arith.addf %287, %291 : vector<1x22x16xf32>
    %293 = vector.broadcast %289 : f32 to vector<1x22x16xf32>
    %294 = arith.mulf %293, %199 : vector<1x22x16xf32>
    %295 = arith.addf %292, %294 : vector<1x22x16xf32>
    %c11_154 = arith.constant 11 : index
    %296 = memref.load %arg4[%c11_154] : memref<98xf32, #tpu.memory_space<smem>>
    %c60 = arith.constant 60 : index
    %297 = memref.load %arg4[%c60] : memref<98xf32, #tpu.memory_space<smem>>
    %298 = vector.broadcast %296 : f32 to vector<1x22x16xf32>
    %299 = arith.mulf %298, %193 : vector<1x22x16xf32>
    %300 = arith.addf %295, %299 : vector<1x22x16xf32>
    %301 = vector.broadcast %297 : f32 to vector<1x22x16xf32>
    %302 = arith.mulf %301, %200 : vector<1x22x16xf32>
    %303 = arith.addf %300, %302 : vector<1x22x16xf32>
    %c12_155 = arith.constant 12 : index
    %304 = memref.load %arg4[%c12_155] : memref<98xf32, #tpu.memory_space<smem>>
    %c61 = arith.constant 61 : index
    %305 = memref.load %arg4[%c61] : memref<98xf32, #tpu.memory_space<smem>>
    %306 = vector.broadcast %304 : f32 to vector<1x22x16xf32>
    %307 = arith.mulf %306, %194 : vector<1x22x16xf32>
    %308 = arith.addf %303, %307 : vector<1x22x16xf32>
    %309 = vector.broadcast %305 : f32 to vector<1x22x16xf32>
    %310 = arith.mulf %309, %201 : vector<1x22x16xf32>
    %311 = arith.addf %308, %310 : vector<1x22x16xf32>
    %c13_156 = arith.constant 13 : index
    %312 = memref.load %arg4[%c13_156] : memref<98xf32, #tpu.memory_space<smem>>
    %c62 = arith.constant 62 : index
    %313 = memref.load %arg4[%c62] : memref<98xf32, #tpu.memory_space<smem>>
    %314 = vector.broadcast %312 : f32 to vector<1x22x16xf32>
    %315 = arith.mulf %314, %195 : vector<1x22x16xf32>
    %316 = arith.addf %311, %315 : vector<1x22x16xf32>
    %317 = vector.broadcast %313 : f32 to vector<1x22x16xf32>
    %318 = arith.mulf %317, %202 : vector<1x22x16xf32>
    %319 = arith.addf %316, %318 : vector<1x22x16xf32>
    %320 = vector.extract_strided_slice %319 {offsets = [0, 1, 0], sizes = [1, 16, 16], strides = [1, 1, 1]} : vector<1x22x16xf32> to vector<1x16x16xf32>
    %321 = arith.addf %262, %320 : vector<1x16x16xf32>
    %cst_157 = arith.constant 0.000000e+00 : f32
    %322 = vector.broadcast %cst_157 : f32 to vector<1x22x16xf32>
    %c14_158 = arith.constant 14 : index
    %323 = memref.load %arg4[%c14_158] : memref<98xf32, #tpu.memory_space<smem>>
    %c63 = arith.constant 63 : index
    %324 = memref.load %arg4[%c63] : memref<98xf32, #tpu.memory_space<smem>>
    %325 = vector.broadcast %323 : f32 to vector<1x22x16xf32>
    %326 = arith.mulf %325, %189 : vector<1x22x16xf32>
    %327 = arith.addf %322, %326 : vector<1x22x16xf32>
    %328 = vector.broadcast %324 : f32 to vector<1x22x16xf32>
    %329 = arith.mulf %328, %196 : vector<1x22x16xf32>
    %330 = arith.addf %327, %329 : vector<1x22x16xf32>
    %c15_159 = arith.constant 15 : index
    %331 = memref.load %arg4[%c15_159] : memref<98xf32, #tpu.memory_space<smem>>
    %c64 = arith.constant 64 : index
    %332 = memref.load %arg4[%c64] : memref<98xf32, #tpu.memory_space<smem>>
    %333 = vector.broadcast %331 : f32 to vector<1x22x16xf32>
    %334 = arith.mulf %333, %190 : vector<1x22x16xf32>
    %335 = arith.addf %330, %334 : vector<1x22x16xf32>
    %336 = vector.broadcast %332 : f32 to vector<1x22x16xf32>
    %337 = arith.mulf %336, %197 : vector<1x22x16xf32>
    %338 = arith.addf %335, %337 : vector<1x22x16xf32>
    %c16_160 = arith.constant 16 : index
    %339 = memref.load %arg4[%c16_160] : memref<98xf32, #tpu.memory_space<smem>>
    %c65 = arith.constant 65 : index
    %340 = memref.load %arg4[%c65] : memref<98xf32, #tpu.memory_space<smem>>
    %341 = vector.broadcast %339 : f32 to vector<1x22x16xf32>
    %342 = arith.mulf %341, %191 : vector<1x22x16xf32>
    %343 = arith.addf %338, %342 : vector<1x22x16xf32>
    %344 = vector.broadcast %340 : f32 to vector<1x22x16xf32>
    %345 = arith.mulf %344, %198 : vector<1x22x16xf32>
    %346 = arith.addf %343, %345 : vector<1x22x16xf32>
    %c17_161 = arith.constant 17 : index
    %347 = memref.load %arg4[%c17_161] : memref<98xf32, #tpu.memory_space<smem>>
    %c66 = arith.constant 66 : index
    %348 = memref.load %arg4[%c66] : memref<98xf32, #tpu.memory_space<smem>>
    %349 = vector.broadcast %347 : f32 to vector<1x22x16xf32>
    %350 = arith.mulf %349, %192 : vector<1x22x16xf32>
    %351 = arith.addf %346, %350 : vector<1x22x16xf32>
    %352 = vector.broadcast %348 : f32 to vector<1x22x16xf32>
    %353 = arith.mulf %352, %199 : vector<1x22x16xf32>
    %354 = arith.addf %351, %353 : vector<1x22x16xf32>
    %c18_162 = arith.constant 18 : index
    %355 = memref.load %arg4[%c18_162] : memref<98xf32, #tpu.memory_space<smem>>
    %c67 = arith.constant 67 : index
    %356 = memref.load %arg4[%c67] : memref<98xf32, #tpu.memory_space<smem>>
    %357 = vector.broadcast %355 : f32 to vector<1x22x16xf32>
    %358 = arith.mulf %357, %193 : vector<1x22x16xf32>
    %359 = arith.addf %354, %358 : vector<1x22x16xf32>
    %360 = vector.broadcast %356 : f32 to vector<1x22x16xf32>
    %361 = arith.mulf %360, %200 : vector<1x22x16xf32>
    %362 = arith.addf %359, %361 : vector<1x22x16xf32>
    %c19 = arith.constant 19 : index
    %363 = memref.load %arg4[%c19] : memref<98xf32, #tpu.memory_space<smem>>
    %c68 = arith.constant 68 : index
    %364 = memref.load %arg4[%c68] : memref<98xf32, #tpu.memory_space<smem>>
    %365 = vector.broadcast %363 : f32 to vector<1x22x16xf32>
    %366 = arith.mulf %365, %194 : vector<1x22x16xf32>
    %367 = arith.addf %362, %366 : vector<1x22x16xf32>
    %368 = vector.broadcast %364 : f32 to vector<1x22x16xf32>
    %369 = arith.mulf %368, %201 : vector<1x22x16xf32>
    %370 = arith.addf %367, %369 : vector<1x22x16xf32>
    %c20 = arith.constant 20 : index
    %371 = memref.load %arg4[%c20] : memref<98xf32, #tpu.memory_space<smem>>
    %c69 = arith.constant 69 : index
    %372 = memref.load %arg4[%c69] : memref<98xf32, #tpu.memory_space<smem>>
    %373 = vector.broadcast %371 : f32 to vector<1x22x16xf32>
    %374 = arith.mulf %373, %195 : vector<1x22x16xf32>
    %375 = arith.addf %370, %374 : vector<1x22x16xf32>
    %376 = vector.broadcast %372 : f32 to vector<1x22x16xf32>
    %377 = arith.mulf %376, %202 : vector<1x22x16xf32>
    %378 = arith.addf %375, %377 : vector<1x22x16xf32>
    %379 = vector.extract_strided_slice %378 {offsets = [0, 2, 0], sizes = [1, 16, 16], strides = [1, 1, 1]} : vector<1x22x16xf32> to vector<1x16x16xf32>
    %380 = arith.addf %321, %379 : vector<1x16x16xf32>
    %cst_163 = arith.constant 0.000000e+00 : f32
    %381 = vector.broadcast %cst_163 : f32 to vector<1x22x16xf32>
    %c21 = arith.constant 21 : index
    %382 = memref.load %arg4[%c21] : memref<98xf32, #tpu.memory_space<smem>>
    %c70 = arith.constant 70 : index
    %383 = memref.load %arg4[%c70] : memref<98xf32, #tpu.memory_space<smem>>
    %384 = vector.broadcast %382 : f32 to vector<1x22x16xf32>
    %385 = arith.mulf %384, %189 : vector<1x22x16xf32>
    %386 = arith.addf %381, %385 : vector<1x22x16xf32>
    %387 = vector.broadcast %383 : f32 to vector<1x22x16xf32>
    %388 = arith.mulf %387, %196 : vector<1x22x16xf32>
    %389 = arith.addf %386, %388 : vector<1x22x16xf32>
    %c22 = arith.constant 22 : index
    %390 = memref.load %arg4[%c22] : memref<98xf32, #tpu.memory_space<smem>>
    %c71 = arith.constant 71 : index
    %391 = memref.load %arg4[%c71] : memref<98xf32, #tpu.memory_space<smem>>
    %392 = vector.broadcast %390 : f32 to vector<1x22x16xf32>
    %393 = arith.mulf %392, %190 : vector<1x22x16xf32>
    %394 = arith.addf %389, %393 : vector<1x22x16xf32>
    %395 = vector.broadcast %391 : f32 to vector<1x22x16xf32>
    %396 = arith.mulf %395, %197 : vector<1x22x16xf32>
    %397 = arith.addf %394, %396 : vector<1x22x16xf32>
    %c23 = arith.constant 23 : index
    %398 = memref.load %arg4[%c23] : memref<98xf32, #tpu.memory_space<smem>>
    %c72 = arith.constant 72 : index
    %399 = memref.load %arg4[%c72] : memref<98xf32, #tpu.memory_space<smem>>
    %400 = vector.broadcast %398 : f32 to vector<1x22x16xf32>
    %401 = arith.mulf %400, %191 : vector<1x22x16xf32>
    %402 = arith.addf %397, %401 : vector<1x22x16xf32>
    %403 = vector.broadcast %399 : f32 to vector<1x22x16xf32>
    %404 = arith.mulf %403, %198 : vector<1x22x16xf32>
    %405 = arith.addf %402, %404 : vector<1x22x16xf32>
    %c24 = arith.constant 24 : index
    %406 = memref.load %arg4[%c24] : memref<98xf32, #tpu.memory_space<smem>>
    %c73 = arith.constant 73 : index
    %407 = memref.load %arg4[%c73] : memref<98xf32, #tpu.memory_space<smem>>
    %408 = vector.broadcast %406 : f32 to vector<1x22x16xf32>
    %409 = arith.mulf %408, %192 : vector<1x22x16xf32>
    %410 = arith.addf %405, %409 : vector<1x22x16xf32>
    %411 = vector.broadcast %407 : f32 to vector<1x22x16xf32>
    %412 = arith.mulf %411, %199 : vector<1x22x16xf32>
    %413 = arith.addf %410, %412 : vector<1x22x16xf32>
    %c25 = arith.constant 25 : index
    %414 = memref.load %arg4[%c25] : memref<98xf32, #tpu.memory_space<smem>>
    %c74 = arith.constant 74 : index
    %415 = memref.load %arg4[%c74] : memref<98xf32, #tpu.memory_space<smem>>
    %416 = vector.broadcast %414 : f32 to vector<1x22x16xf32>
    %417 = arith.mulf %416, %193 : vector<1x22x16xf32>
    %418 = arith.addf %413, %417 : vector<1x22x16xf32>
    %419 = vector.broadcast %415 : f32 to vector<1x22x16xf32>
    %420 = arith.mulf %419, %200 : vector<1x22x16xf32>
    %421 = arith.addf %418, %420 : vector<1x22x16xf32>
    %c26 = arith.constant 26 : index
    %422 = memref.load %arg4[%c26] : memref<98xf32, #tpu.memory_space<smem>>
    %c75 = arith.constant 75 : index
    %423 = memref.load %arg4[%c75] : memref<98xf32, #tpu.memory_space<smem>>
    %424 = vector.broadcast %422 : f32 to vector<1x22x16xf32>
    %425 = arith.mulf %424, %194 : vector<1x22x16xf32>
    %426 = arith.addf %421, %425 : vector<1x22x16xf32>
    %427 = vector.broadcast %423 : f32 to vector<1x22x16xf32>
    %428 = arith.mulf %427, %201 : vector<1x22x16xf32>
    %429 = arith.addf %426, %428 : vector<1x22x16xf32>
    %c27 = arith.constant 27 : index
    %430 = memref.load %arg4[%c27] : memref<98xf32, #tpu.memory_space<smem>>
    %c76 = arith.constant 76 : index
    %431 = memref.load %arg4[%c76] : memref<98xf32, #tpu.memory_space<smem>>
    %432 = vector.broadcast %430 : f32 to vector<1x22x16xf32>
    %433 = arith.mulf %432, %195 : vector<1x22x16xf32>
    %434 = arith.addf %429, %433 : vector<1x22x16xf32>
    %435 = vector.broadcast %431 : f32 to vector<1x22x16xf32>
    %436 = arith.mulf %435, %202 : vector<1x22x16xf32>
    %437 = arith.addf %434, %436 : vector<1x22x16xf32>
    %438 = vector.extract_strided_slice %437 {offsets = [0, 3, 0], sizes = [1, 16, 16], strides = [1, 1, 1]} : vector<1x22x16xf32> to vector<1x16x16xf32>
    %439 = arith.addf %380, %438 : vector<1x16x16xf32>
    %cst_164 = arith.constant 0.000000e+00 : f32
    %440 = vector.broadcast %cst_164 : f32 to vector<1x22x16xf32>
    %c28 = arith.constant 28 : index
    %441 = memref.load %arg4[%c28] : memref<98xf32, #tpu.memory_space<smem>>
    %c77 = arith.constant 77 : index
    %442 = memref.load %arg4[%c77] : memref<98xf32, #tpu.memory_space<smem>>
    %443 = vector.broadcast %441 : f32 to vector<1x22x16xf32>
    %444 = arith.mulf %443, %189 : vector<1x22x16xf32>
    %445 = arith.addf %440, %444 : vector<1x22x16xf32>
    %446 = vector.broadcast %442 : f32 to vector<1x22x16xf32>
    %447 = arith.mulf %446, %196 : vector<1x22x16xf32>
    %448 = arith.addf %445, %447 : vector<1x22x16xf32>
    %c29 = arith.constant 29 : index
    %449 = memref.load %arg4[%c29] : memref<98xf32, #tpu.memory_space<smem>>
    %c78 = arith.constant 78 : index
    %450 = memref.load %arg4[%c78] : memref<98xf32, #tpu.memory_space<smem>>
    %451 = vector.broadcast %449 : f32 to vector<1x22x16xf32>
    %452 = arith.mulf %451, %190 : vector<1x22x16xf32>
    %453 = arith.addf %448, %452 : vector<1x22x16xf32>
    %454 = vector.broadcast %450 : f32 to vector<1x22x16xf32>
    %455 = arith.mulf %454, %197 : vector<1x22x16xf32>
    %456 = arith.addf %453, %455 : vector<1x22x16xf32>
    %c30 = arith.constant 30 : index
    %457 = memref.load %arg4[%c30] : memref<98xf32, #tpu.memory_space<smem>>
    %c79 = arith.constant 79 : index
    %458 = memref.load %arg4[%c79] : memref<98xf32, #tpu.memory_space<smem>>
    %459 = vector.broadcast %457 : f32 to vector<1x22x16xf32>
    %460 = arith.mulf %459, %191 : vector<1x22x16xf32>
    %461 = arith.addf %456, %460 : vector<1x22x16xf32>
    %462 = vector.broadcast %458 : f32 to vector<1x22x16xf32>
    %463 = arith.mulf %462, %198 : vector<1x22x16xf32>
    %464 = arith.addf %461, %463 : vector<1x22x16xf32>
    %c31 = arith.constant 31 : index
    %465 = memref.load %arg4[%c31] : memref<98xf32, #tpu.memory_space<smem>>
    %c80 = arith.constant 80 : index
    %466 = memref.load %arg4[%c80] : memref<98xf32, #tpu.memory_space<smem>>
    %467 = vector.broadcast %465 : f32 to vector<1x22x16xf32>
    %468 = arith.mulf %467, %192 : vector<1x22x16xf32>
    %469 = arith.addf %464, %468 : vector<1x22x16xf32>
    %470 = vector.broadcast %466 : f32 to vector<1x22x16xf32>
    %471 = arith.mulf %470, %199 : vector<1x22x16xf32>
    %472 = arith.addf %469, %471 : vector<1x22x16xf32>
    %c32 = arith.constant 32 : index
    %473 = memref.load %arg4[%c32] : memref<98xf32, #tpu.memory_space<smem>>
    %c81 = arith.constant 81 : index
    %474 = memref.load %arg4[%c81] : memref<98xf32, #tpu.memory_space<smem>>
    %475 = vector.broadcast %473 : f32 to vector<1x22x16xf32>
    %476 = arith.mulf %475, %193 : vector<1x22x16xf32>
    %477 = arith.addf %472, %476 : vector<1x22x16xf32>
    %478 = vector.broadcast %474 : f32 to vector<1x22x16xf32>
    %479 = arith.mulf %478, %200 : vector<1x22x16xf32>
    %480 = arith.addf %477, %479 : vector<1x22x16xf32>
    %c33 = arith.constant 33 : index
    %481 = memref.load %arg4[%c33] : memref<98xf32, #tpu.memory_space<smem>>
    %c82 = arith.constant 82 : index
    %482 = memref.load %arg4[%c82] : memref<98xf32, #tpu.memory_space<smem>>
    %483 = vector.broadcast %481 : f32 to vector<1x22x16xf32>
    %484 = arith.mulf %483, %194 : vector<1x22x16xf32>
    %485 = arith.addf %480, %484 : vector<1x22x16xf32>
    %486 = vector.broadcast %482 : f32 to vector<1x22x16xf32>
    %487 = arith.mulf %486, %201 : vector<1x22x16xf32>
    %488 = arith.addf %485, %487 : vector<1x22x16xf32>
    %c34 = arith.constant 34 : index
    %489 = memref.load %arg4[%c34] : memref<98xf32, #tpu.memory_space<smem>>
    %c83 = arith.constant 83 : index
    %490 = memref.load %arg4[%c83] : memref<98xf32, #tpu.memory_space<smem>>
    %491 = vector.broadcast %489 : f32 to vector<1x22x16xf32>
    %492 = arith.mulf %491, %195 : vector<1x22x16xf32>
    %493 = arith.addf %488, %492 : vector<1x22x16xf32>
    %494 = vector.broadcast %490 : f32 to vector<1x22x16xf32>
    %495 = arith.mulf %494, %202 : vector<1x22x16xf32>
    %496 = arith.addf %493, %495 : vector<1x22x16xf32>
    %497 = vector.extract_strided_slice %496 {offsets = [0, 4, 0], sizes = [1, 16, 16], strides = [1, 1, 1]} : vector<1x22x16xf32> to vector<1x16x16xf32>
    %498 = arith.addf %439, %497 : vector<1x16x16xf32>
    %cst_165 = arith.constant 0.000000e+00 : f32
    %499 = vector.broadcast %cst_165 : f32 to vector<1x22x16xf32>
    %c35 = arith.constant 35 : index
    %500 = memref.load %arg4[%c35] : memref<98xf32, #tpu.memory_space<smem>>
    %c84 = arith.constant 84 : index
    %501 = memref.load %arg4[%c84] : memref<98xf32, #tpu.memory_space<smem>>
    %502 = vector.broadcast %500 : f32 to vector<1x22x16xf32>
    %503 = arith.mulf %502, %189 : vector<1x22x16xf32>
    %504 = arith.addf %499, %503 : vector<1x22x16xf32>
    %505 = vector.broadcast %501 : f32 to vector<1x22x16xf32>
    %506 = arith.mulf %505, %196 : vector<1x22x16xf32>
    %507 = arith.addf %504, %506 : vector<1x22x16xf32>
    %c36 = arith.constant 36 : index
    %508 = memref.load %arg4[%c36] : memref<98xf32, #tpu.memory_space<smem>>
    %c85 = arith.constant 85 : index
    %509 = memref.load %arg4[%c85] : memref<98xf32, #tpu.memory_space<smem>>
    %510 = vector.broadcast %508 : f32 to vector<1x22x16xf32>
    %511 = arith.mulf %510, %190 : vector<1x22x16xf32>
    %512 = arith.addf %507, %511 : vector<1x22x16xf32>
    %513 = vector.broadcast %509 : f32 to vector<1x22x16xf32>
    %514 = arith.mulf %513, %197 : vector<1x22x16xf32>
    %515 = arith.addf %512, %514 : vector<1x22x16xf32>
    %c37 = arith.constant 37 : index
    %516 = memref.load %arg4[%c37] : memref<98xf32, #tpu.memory_space<smem>>
    %c86 = arith.constant 86 : index
    %517 = memref.load %arg4[%c86] : memref<98xf32, #tpu.memory_space<smem>>
    %518 = vector.broadcast %516 : f32 to vector<1x22x16xf32>
    %519 = arith.mulf %518, %191 : vector<1x22x16xf32>
    %520 = arith.addf %515, %519 : vector<1x22x16xf32>
    %521 = vector.broadcast %517 : f32 to vector<1x22x16xf32>
    %522 = arith.mulf %521, %198 : vector<1x22x16xf32>
    %523 = arith.addf %520, %522 : vector<1x22x16xf32>
    %c38 = arith.constant 38 : index
    %524 = memref.load %arg4[%c38] : memref<98xf32, #tpu.memory_space<smem>>
    %c87 = arith.constant 87 : index
    %525 = memref.load %arg4[%c87] : memref<98xf32, #tpu.memory_space<smem>>
    %526 = vector.broadcast %524 : f32 to vector<1x22x16xf32>
    %527 = arith.mulf %526, %192 : vector<1x22x16xf32>
    %528 = arith.addf %523, %527 : vector<1x22x16xf32>
    %529 = vector.broadcast %525 : f32 to vector<1x22x16xf32>
    %530 = arith.mulf %529, %199 : vector<1x22x16xf32>
    %531 = arith.addf %528, %530 : vector<1x22x16xf32>
    %c39 = arith.constant 39 : index
    %532 = memref.load %arg4[%c39] : memref<98xf32, #tpu.memory_space<smem>>
    %c88 = arith.constant 88 : index
    %533 = memref.load %arg4[%c88] : memref<98xf32, #tpu.memory_space<smem>>
    %534 = vector.broadcast %532 : f32 to vector<1x22x16xf32>
    %535 = arith.mulf %534, %193 : vector<1x22x16xf32>
    %536 = arith.addf %531, %535 : vector<1x22x16xf32>
    %537 = vector.broadcast %533 : f32 to vector<1x22x16xf32>
    %538 = arith.mulf %537, %200 : vector<1x22x16xf32>
    %539 = arith.addf %536, %538 : vector<1x22x16xf32>
    %c40 = arith.constant 40 : index
    %540 = memref.load %arg4[%c40] : memref<98xf32, #tpu.memory_space<smem>>
    %c89 = arith.constant 89 : index
    %541 = memref.load %arg4[%c89] : memref<98xf32, #tpu.memory_space<smem>>
    %542 = vector.broadcast %540 : f32 to vector<1x22x16xf32>
    %543 = arith.mulf %542, %194 : vector<1x22x16xf32>
    %544 = arith.addf %539, %543 : vector<1x22x16xf32>
    %545 = vector.broadcast %541 : f32 to vector<1x22x16xf32>
    %546 = arith.mulf %545, %201 : vector<1x22x16xf32>
    %547 = arith.addf %544, %546 : vector<1x22x16xf32>
    %c41 = arith.constant 41 : index
    %548 = memref.load %arg4[%c41] : memref<98xf32, #tpu.memory_space<smem>>
    %c90 = arith.constant 90 : index
    %549 = memref.load %arg4[%c90] : memref<98xf32, #tpu.memory_space<smem>>
    %550 = vector.broadcast %548 : f32 to vector<1x22x16xf32>
    %551 = arith.mulf %550, %195 : vector<1x22x16xf32>
    %552 = arith.addf %547, %551 : vector<1x22x16xf32>
    %553 = vector.broadcast %549 : f32 to vector<1x22x16xf32>
    %554 = arith.mulf %553, %202 : vector<1x22x16xf32>
    %555 = arith.addf %552, %554 : vector<1x22x16xf32>
    %556 = vector.extract_strided_slice %555 {offsets = [0, 5, 0], sizes = [1, 16, 16], strides = [1, 1, 1]} : vector<1x22x16xf32> to vector<1x16x16xf32>
    %557 = arith.addf %498, %556 : vector<1x16x16xf32>
    %cst_166 = arith.constant 0.000000e+00 : f32
    %558 = vector.broadcast %cst_166 : f32 to vector<1x22x16xf32>
    %c42 = arith.constant 42 : index
    %559 = memref.load %arg4[%c42] : memref<98xf32, #tpu.memory_space<smem>>
    %c91 = arith.constant 91 : index
    %560 = memref.load %arg4[%c91] : memref<98xf32, #tpu.memory_space<smem>>
    %561 = vector.broadcast %559 : f32 to vector<1x22x16xf32>
    %562 = arith.mulf %561, %189 : vector<1x22x16xf32>
    %563 = arith.addf %558, %562 : vector<1x22x16xf32>
    %564 = vector.broadcast %560 : f32 to vector<1x22x16xf32>
    %565 = arith.mulf %564, %196 : vector<1x22x16xf32>
    %566 = arith.addf %563, %565 : vector<1x22x16xf32>
    %c43 = arith.constant 43 : index
    %567 = memref.load %arg4[%c43] : memref<98xf32, #tpu.memory_space<smem>>
    %c92 = arith.constant 92 : index
    %568 = memref.load %arg4[%c92] : memref<98xf32, #tpu.memory_space<smem>>
    %569 = vector.broadcast %567 : f32 to vector<1x22x16xf32>
    %570 = arith.mulf %569, %190 : vector<1x22x16xf32>
    %571 = arith.addf %566, %570 : vector<1x22x16xf32>
    %572 = vector.broadcast %568 : f32 to vector<1x22x16xf32>
    %573 = arith.mulf %572, %197 : vector<1x22x16xf32>
    %574 = arith.addf %571, %573 : vector<1x22x16xf32>
    %c44 = arith.constant 44 : index
    %575 = memref.load %arg4[%c44] : memref<98xf32, #tpu.memory_space<smem>>
    %c93 = arith.constant 93 : index
    %576 = memref.load %arg4[%c93] : memref<98xf32, #tpu.memory_space<smem>>
    %577 = vector.broadcast %575 : f32 to vector<1x22x16xf32>
    %578 = arith.mulf %577, %191 : vector<1x22x16xf32>
    %579 = arith.addf %574, %578 : vector<1x22x16xf32>
    %580 = vector.broadcast %576 : f32 to vector<1x22x16xf32>
    %581 = arith.mulf %580, %198 : vector<1x22x16xf32>
    %582 = arith.addf %579, %581 : vector<1x22x16xf32>
    %c45 = arith.constant 45 : index
    %583 = memref.load %arg4[%c45] : memref<98xf32, #tpu.memory_space<smem>>
    %c94 = arith.constant 94 : index
    %584 = memref.load %arg4[%c94] : memref<98xf32, #tpu.memory_space<smem>>
    %585 = vector.broadcast %583 : f32 to vector<1x22x16xf32>
    %586 = arith.mulf %585, %192 : vector<1x22x16xf32>
    %587 = arith.addf %582, %586 : vector<1x22x16xf32>
    %588 = vector.broadcast %584 : f32 to vector<1x22x16xf32>
    %589 = arith.mulf %588, %199 : vector<1x22x16xf32>
    %590 = arith.addf %587, %589 : vector<1x22x16xf32>
    %c46 = arith.constant 46 : index
    %591 = memref.load %arg4[%c46] : memref<98xf32, #tpu.memory_space<smem>>
    %c95 = arith.constant 95 : index
    %592 = memref.load %arg4[%c95] : memref<98xf32, #tpu.memory_space<smem>>
    %593 = vector.broadcast %591 : f32 to vector<1x22x16xf32>
    %594 = arith.mulf %593, %193 : vector<1x22x16xf32>
    %595 = arith.addf %590, %594 : vector<1x22x16xf32>
    %596 = vector.broadcast %592 : f32 to vector<1x22x16xf32>
    %597 = arith.mulf %596, %200 : vector<1x22x16xf32>
    %598 = arith.addf %595, %597 : vector<1x22x16xf32>
    %c47 = arith.constant 47 : index
    %599 = memref.load %arg4[%c47] : memref<98xf32, #tpu.memory_space<smem>>
    %c96 = arith.constant 96 : index
    %600 = memref.load %arg4[%c96] : memref<98xf32, #tpu.memory_space<smem>>
    %601 = vector.broadcast %599 : f32 to vector<1x22x16xf32>
    %602 = arith.mulf %601, %194 : vector<1x22x16xf32>
    %603 = arith.addf %598, %602 : vector<1x22x16xf32>
    %604 = vector.broadcast %600 : f32 to vector<1x22x16xf32>
    %605 = arith.mulf %604, %201 : vector<1x22x16xf32>
    %606 = arith.addf %603, %605 : vector<1x22x16xf32>
    %c48 = arith.constant 48 : index
    %607 = memref.load %arg4[%c48] : memref<98xf32, #tpu.memory_space<smem>>
    %c97 = arith.constant 97 : index
    %608 = memref.load %arg4[%c97] : memref<98xf32, #tpu.memory_space<smem>>
    %609 = vector.broadcast %607 : f32 to vector<1x22x16xf32>
    %610 = arith.mulf %609, %195 : vector<1x22x16xf32>
    %611 = arith.addf %606, %610 : vector<1x22x16xf32>
    %612 = vector.broadcast %608 : f32 to vector<1x22x16xf32>
    %613 = arith.mulf %612, %202 : vector<1x22x16xf32>
    %614 = arith.addf %611, %613 : vector<1x22x16xf32>
    %615 = vector.extract_strided_slice %614 {offsets = [0, 6, 0], sizes = [1, 16, 16], strides = [1, 1, 1]} : vector<1x22x16xf32> to vector<1x16x16xf32>
    %616 = arith.addf %557, %615 : vector<1x16x16xf32>
    %617 = arith.negf %616 : vector<1x16x16xf32>
    %618 = math.exp %617 : vector<1x16x16xf32>
    %cst_167 = arith.constant 1.000000e+00 : f32
    %619 = vector.broadcast %cst_167 : f32 to vector<1x16x16xf32>
    %620 = arith.addf %619, %618 : vector<1x16x16xf32>
    %621 = arith.divf %619, %620 : vector<1x16x16xf32>
    %622 = vector.extract_strided_slice %621 {offsets = [0, 0, 0], sizes = [1, 1, 16], strides = [1, 1, 1]} : vector<1x16x16xf32> to vector<1x1x16xf32>
    %c0_168 = arith.constant 0 : index
    %c0_169 = arith.constant 0 : index
    %c0_170 = arith.constant 0 : index
    %623 = vector.load %arg7[%c0_168, %c0_169, %c0_170] : memref<1x1x256xf32, #tpu.memory_space<vmem>>, vector<1x1x16xf32>
    tpu.vector_store %arg7[%c0_168, %c0_169, %c0_170], %622 {strides = array<i32>} : memref<1x1x256xf32, #tpu.memory_space<vmem>>, vector<1x1x16xf32>,
    %624 = vector.extract_strided_slice %621 {offsets = [0, 1, 0], sizes = [1, 1, 16], strides = [1, 1, 1]} : vector<1x16x16xf32> to vector<1x1x16xf32>
    %c0_171 = arith.constant 0 : index
    %c0_172 = arith.constant 0 : index
    %c16_173 = arith.constant 16 : index
    %625 = vector.load %arg7[%c0_171, %c0_172, %c16_173] : memref<1x1x256xf32, #tpu.memory_space<vmem>>, vector<1x1x16xf32>
    tpu.vector_store %arg7[%c0_171, %c0_172, %c16_173], %624 {strides = array<i32>} : memref<1x1x256xf32, #tpu.memory_space<vmem>>, vector<1x1x16xf32>,
    %626 = vector.extract_strided_slice %621 {offsets = [0, 2, 0], sizes = [1, 1, 16], strides = [1, 1, 1]} : vector<1x16x16xf32> to vector<1x1x16xf32>
    %c0_174 = arith.constant 0 : index
    %c0_175 = arith.constant 0 : index
    %c32_176 = arith.constant 32 : index
    %627 = vector.load %arg7[%c0_174, %c0_175, %c32_176] : memref<1x1x256xf32, #tpu.memory_space<vmem>>, vector<1x1x16xf32>
    tpu.vector_store %arg7[%c0_174, %c0_175, %c32_176], %626 {strides = array<i32>} : memref<1x1x256xf32, #tpu.memory_space<vmem>>, vector<1x1x16xf32>,
    %628 = vector.extract_strided_slice %621 {offsets = [0, 3, 0], sizes = [1, 1, 16], strides = [1, 1, 1]} : vector<1x16x16xf32> to vector<1x1x16xf32>
    %c0_177 = arith.constant 0 : index
    %c0_178 = arith.constant 0 : index
    %c48_179 = arith.constant 48 : index
    %629 = vector.load %arg7[%c0_177, %c0_178, %c48_179] : memref<1x1x256xf32, #tpu.memory_space<vmem>>, vector<1x1x16xf32>
    tpu.vector_store %arg7[%c0_177, %c0_178, %c48_179], %628 {strides = array<i32>} : memref<1x1x256xf32, #tpu.memory_space<vmem>>, vector<1x1x16xf32>,
    %630 = vector.extract_strided_slice %621 {offsets = [0, 4, 0], sizes = [1, 1, 16], strides = [1, 1, 1]} : vector<1x16x16xf32> to vector<1x1x16xf32>
    %c0_180 = arith.constant 0 : index
    %c0_181 = arith.constant 0 : index
    %c64_182 = arith.constant 64 : index
    %631 = vector.load %arg7[%c0_180, %c0_181, %c64_182] : memref<1x1x256xf32, #tpu.memory_space<vmem>>, vector<1x1x16xf32>
    tpu.vector_store %arg7[%c0_180, %c0_181, %c64_182], %630 {strides = array<i32>} : memref<1x1x256xf32, #tpu.memory_space<vmem>>, vector<1x1x16xf32>,
    %632 = vector.extract_strided_slice %621 {offsets = [0, 5, 0], sizes = [1, 1, 16], strides = [1, 1, 1]} : vector<1x16x16xf32> to vector<1x1x16xf32>
    %c0_183 = arith.constant 0 : index
    %c0_184 = arith.constant 0 : index
    %c80_185 = arith.constant 80 : index
    %633 = vector.load %arg7[%c0_183, %c0_184, %c80_185] : memref<1x1x256xf32, #tpu.memory_space<vmem>>, vector<1x1x16xf32>
    tpu.vector_store %arg7[%c0_183, %c0_184, %c80_185], %632 {strides = array<i32>} : memref<1x1x256xf32, #tpu.memory_space<vmem>>, vector<1x1x16xf32>,
    %634 = vector.extract_strided_slice %621 {offsets = [0, 6, 0], sizes = [1, 1, 16], strides = [1, 1, 1]} : vector<1x16x16xf32> to vector<1x1x16xf32>
    %c0_186 = arith.constant 0 : index
    %c0_187 = arith.constant 0 : index
    %c96_188 = arith.constant 96 : index
    %635 = vector.load %arg7[%c0_186, %c0_187, %c96_188] : memref<1x1x256xf32, #tpu.memory_space<vmem>>, vector<1x1x16xf32>
    tpu.vector_store %arg7[%c0_186, %c0_187, %c96_188], %634 {strides = array<i32>} : memref<1x1x256xf32, #tpu.memory_space<vmem>>, vector<1x1x16xf32>,
    %636 = vector.extract_strided_slice %621 {offsets = [0, 7, 0], sizes = [1, 1, 16], strides = [1, 1, 1]} : vector<1x16x16xf32> to vector<1x1x16xf32>
    %c0_189 = arith.constant 0 : index
    %c0_190 = arith.constant 0 : index
    %c112 = arith.constant 112 : index
    %637 = vector.load %arg7[%c0_189, %c0_190, %c112] : memref<1x1x256xf32, #tpu.memory_space<vmem>>, vector<1x1x16xf32>
    tpu.vector_store %arg7[%c0_189, %c0_190, %c112], %636 {strides = array<i32>} : memref<1x1x256xf32, #tpu.memory_space<vmem>>, vector<1x1x16xf32>,
    %638 = vector.extract_strided_slice %621 {offsets = [0, 8, 0], sizes = [1, 1, 16], strides = [1, 1, 1]} : vector<1x16x16xf32> to vector<1x1x16xf32>
    %c0_191 = arith.constant 0 : index
    %c0_192 = arith.constant 0 : index
    %c128 = arith.constant 128 : index
    %639 = vector.load %arg7[%c0_191, %c0_192, %c128] : memref<1x1x256xf32, #tpu.memory_space<vmem>>, vector<1x1x16xf32>
    tpu.vector_store %arg7[%c0_191, %c0_192, %c128], %638 {strides = array<i32>} : memref<1x1x256xf32, #tpu.memory_space<vmem>>, vector<1x1x16xf32>,
    %640 = vector.extract_strided_slice %621 {offsets = [0, 9, 0], sizes = [1, 1, 16], strides = [1, 1, 1]} : vector<1x16x16xf32> to vector<1x1x16xf32>
    %c0_193 = arith.constant 0 : index
    %c0_194 = arith.constant 0 : index
    %c144 = arith.constant 144 : index
    %641 = vector.load %arg7[%c0_193, %c0_194, %c144] : memref<1x1x256xf32, #tpu.memory_space<vmem>>, vector<1x1x16xf32>
    tpu.vector_store %arg7[%c0_193, %c0_194, %c144], %640 {strides = array<i32>} : memref<1x1x256xf32, #tpu.memory_space<vmem>>, vector<1x1x16xf32>,
    %642 = vector.extract_strided_slice %621 {offsets = [0, 10, 0], sizes = [1, 1, 16], strides = [1, 1, 1]} : vector<1x16x16xf32> to vector<1x1x16xf32>
    %c0_195 = arith.constant 0 : index
    %c0_196 = arith.constant 0 : index
    %c160 = arith.constant 160 : index
    %643 = vector.load %arg7[%c0_195, %c0_196, %c160] : memref<1x1x256xf32, #tpu.memory_space<vmem>>, vector<1x1x16xf32>
    tpu.vector_store %arg7[%c0_195, %c0_196, %c160], %642 {strides = array<i32>} : memref<1x1x256xf32, #tpu.memory_space<vmem>>, vector<1x1x16xf32>,
    %644 = vector.extract_strided_slice %621 {offsets = [0, 11, 0], sizes = [1, 1, 16], strides = [1, 1, 1]} : vector<1x16x16xf32> to vector<1x1x16xf32>
    %c0_197 = arith.constant 0 : index
    %c0_198 = arith.constant 0 : index
    %c176 = arith.constant 176 : index
    %645 = vector.load %arg7[%c0_197, %c0_198, %c176] : memref<1x1x256xf32, #tpu.memory_space<vmem>>, vector<1x1x16xf32>
    tpu.vector_store %arg7[%c0_197, %c0_198, %c176], %644 {strides = array<i32>} : memref<1x1x256xf32, #tpu.memory_space<vmem>>, vector<1x1x16xf32>,
    %646 = vector.extract_strided_slice %621 {offsets = [0, 12, 0], sizes = [1, 1, 16], strides = [1, 1, 1]} : vector<1x16x16xf32> to vector<1x1x16xf32>
    %c0_199 = arith.constant 0 : index
    %c0_200 = arith.constant 0 : index
    %c192 = arith.constant 192 : index
    %647 = vector.load %arg7[%c0_199, %c0_200, %c192] : memref<1x1x256xf32, #tpu.memory_space<vmem>>, vector<1x1x16xf32>
    tpu.vector_store %arg7[%c0_199, %c0_200, %c192], %646 {strides = array<i32>} : memref<1x1x256xf32, #tpu.memory_space<vmem>>, vector<1x1x16xf32>,
    %648 = vector.extract_strided_slice %621 {offsets = [0, 13, 0], sizes = [1, 1, 16], strides = [1, 1, 1]} : vector<1x16x16xf32> to vector<1x1x16xf32>
    %c0_201 = arith.constant 0 : index
    %c0_202 = arith.constant 0 : index
    %c208 = arith.constant 208 : index
    %649 = vector.load %arg7[%c0_201, %c0_202, %c208] : memref<1x1x256xf32, #tpu.memory_space<vmem>>, vector<1x1x16xf32>
    tpu.vector_store %arg7[%c0_201, %c0_202, %c208], %648 {strides = array<i32>} : memref<1x1x256xf32, #tpu.memory_space<vmem>>, vector<1x1x16xf32>,
    %650 = vector.extract_strided_slice %621 {offsets = [0, 14, 0], sizes = [1, 1, 16], strides = [1, 1, 1]} : vector<1x16x16xf32> to vector<1x1x16xf32>
    %c0_203 = arith.constant 0 : index
    %c0_204 = arith.constant 0 : index
    %c224 = arith.constant 224 : index
    %651 = vector.load %arg7[%c0_203, %c0_204, %c224] : memref<1x1x256xf32, #tpu.memory_space<vmem>>, vector<1x1x16xf32>
    tpu.vector_store %arg7[%c0_203, %c0_204, %c224], %650 {strides = array<i32>} : memref<1x1x256xf32, #tpu.memory_space<vmem>>, vector<1x1x16xf32>,
    %652 = vector.extract_strided_slice %621 {offsets = [0, 15, 0], sizes = [1, 1, 16], strides = [1, 1, 1]} : vector<1x16x16xf32> to vector<1x1x16xf32>
    %c0_205 = arith.constant 0 : index
    %c0_206 = arith.constant 0 : index
    %c240 = arith.constant 240 : index
    %653 = vector.load %arg7[%c0_205, %c0_206, %c240] : memref<1x1x256xf32, #tpu.memory_space<vmem>>, vector<1x1x16xf32>
    tpu.vector_store %arg7[%c0_205, %c0_206, %c240], %652 {strides = array<i32>} : memref<1x1x256xf32, #tpu.memory_space<vmem>>, vector<1x1x16xf32>,
    %c0_207 = arith.constant 0 : index
    %c0_208 = arith.constant 0 : index
    %c0_209 = arith.constant 0 : index
    %654 = vector.load %arg7[%c0_207, %c0_208, %c0_209] : memref<1x1x256xf32, #tpu.memory_space<vmem>>, vector<1x1x256xf32>
    %655 = vector.broadcast %654 : vector<1x1x256xf32> to vector<1x32x256xf32>
    %656 = arith.mulf %48, %655 : vector<1x32x256xf32>
    %c0_210 = arith.constant 0 : index
    %c0_211 = arith.constant 0 : index
    %c0_212 = arith.constant 0 : index
    %657 = vector.load %arg5[%c0_210, %c0_211, %c0_212] : memref<1x32x256xf32, #tpu.memory_space<vmem>>, vector<1x32x256xf32>
    tpu.vector_store %arg5[%c0_210, %c0_211, %c0_212], %656 {strides = array<i32>} : memref<1x32x256xf32, #tpu.memory_space<vmem>>, vector<1x32x256xf32>,
    return
  }
  func.func @transform_0(%arg0: i32) -> (i32, i32, i32) {
    %c0_i32 = arith.constant 0 : i32
    %c0_i32_0 = arith.constant 0 : i32
    %c0_i32_1 = arith.constant 0 : i32
    return %arg0, %c0_i32, %c0_i32_0 : i32, i32, i32
  }
  func.func @transform_1(%arg0: i32) -> (i32, i32) {
    %c0_i32 = arith.constant 0 : i32
    %c0_i32_0 = arith.constant 0 : i32
    %c0_i32_1 = arith.constant 0 : i32
    return %c0_i32, %c0_i32_0 : i32, i32
  }
  func.func @transform_2(%arg0: i32) -> (i32, i32) {
    %c0_i32 = arith.constant 0 : i32
    %c0_i32_0 = arith.constant 0 : i32
    %c0_i32_1 = arith.constant 0 : i32
    return %c0_i32, %c0_i32_0 : i32, i32
  }
  func.func @transform_3(%arg0: i32) -> i32 {
    %c0_i32 = arith.constant 0 : i32
    %c0_i32_0 = arith.constant 0 : i32
    return %c0_i32 : i32
  }
  func.func @transform_4(%arg0: i32) -> (i32, i32, i32) {
    %c0_i32 = arith.constant 0 : i32
    %c0_i32_0 = arith.constant 0 : i32
    %c0_i32_1 = arith.constant 0 : i32
    return %arg0, %c0_i32, %c0_i32_0 : i32, i32, i32
  }
}

</mosaic_0001>

<llo_original>
// kernel: tpu_custom_call.1
$region0: #{tpu_custom_call.1}
  #allocation0 [shape = 'u32[]', space=smem, size = 0x4, offset = 0x4, fixed_abs, tag = 'smem constant byte address 0x4 - core index']
  #allocation1 [shape = 'u32[72,128]{1,0:T(1,128)}', space=vmem, size = 0x9000, scoped, tag = 'internal scratch']
  #allocation2 [shape = 'f32[2,1,22,22]{3,2,1,0:T(8,128)}', space=vmem, size = 0x6000, scoped, tag = 'scratch operand']
  #allocation3 [shape = 'f32[1,1,256]{2,1,0:T(1,128)}', space=vmem, size = 0x400, scoped, tag = 'scratch operand']
  %s0 = inlined_call_operand.hbm [shape: f32[2,32,256], index: 0, kind: input, shape index: {}]
  %s1 = inlined_call_operand.vmem [shape: f32[32,2], index: 1, kind: input, shape index: {}]
  %s2 = inlined_call_operand.vmem [shape: f32[32,2], index: 2, kind: input, shape index: {}]
  %s3 = inlined_call_operand.vmem [shape: f32[98], index: 3, kind: input, shape index: {}]
  %s4 = inlined_call_operand.hbm [shape: f32[2,32,256], index: 4, kind: output, shape index: {}]
  %s5 = sld [smem:[#allocation0]]
  $region57: #{tpu_custom_call.1} parent=0
    _
  %s7 = ssub.s32 1, %s5
  %s8 = scalar_select 0, %s7, %s5
  $region1: #{tpu_custom_call.1} parent=0
    #allocation4 [shape = 'u8[65536]{0}', space=vmem, size = 0x10000, scoped, tag = 'input window, operand 0']
    #allocation5 [shape = 's32[2]{0}', space=sflag, size = 0x8, scoped, tag = 'scoped memory for tpu_custom_call.1']
    #allocation6 [shape = 's32[2]{0}', space=sflag, size = 0x8, scoped, tag = 'scoped memory for tpu_custom_call.1']
    #allocation7 [shape = 's32[2]{0}', space=sflag, size = 0x8, scoped, tag = 'scoped memory for tpu_custom_call.1']
    #allocation8 [shape = 'u8[512]{0}', space=smem, size = 0x200, scoped, tag = 'input window, operand 3, single buffered']
    #allocation9 [shape = 'u8[65536]{0}', space=vmem, size = 0x10000, scoped, tag = 'output window, operand 0']
    %9 = vsyncpa [#allocation5], 0
    %s10 = scalar_lea.sflag [#allocation5], 1
    %11 = vsyncpa %s10, 0
    %12 = vsyncpa [#allocation7], 0
    %13 = vsyncpa [#allocation6], 0
    %s14 = scalar_lea.sflag [#allocation6], 1
    %15 = vsyncpa %s14, 0
    loop: start=0, step=1, limit=4
    $region2: #{tpu_custom_call.1} parent=1 // loop_pre_header
      _
    $region3: #{tpu_custom_call.1} parent=1 // loop_header
      %s17 = sphi 0, %s21
      %p18 = scmp.ge.s32.totalorder %s17, 4
      %s27 = sphi 0, %s29
      %s30 = sphi 0, %s27
      %s31 = sphi 0, %s30
      %s47 = sphi 0, %s31
      %s51 = sphi 0, %s51
      %s53 = sphi 0, %s51
      %s54 = sphi 0, %s53
      %s68 = sphi 0, %s54
      %s72 = sphi 0, %s72
      %s74 = sphi 0, %s72
      %s75 = sphi 0, %s74
      %s89 = sphi 0, %s75
      %s93 = sphi 0, %s93
      %s95 = sphi 0, %s93
      %s96 = sphi 0, %s95
      %s110 = sphi 0, %s96
      %s116 = sphi 0, %s118
      %s119 = sphi 0, %s116
      %s120 = sphi 0, %s119
      %s136 = sphi 0, %s120
    $region4: #{tpu_custom_call.1} parent=1 // loop_header_branch
      %20 = sbr.rel (%p18) target = $region8
    $region5: #{tpu_custom_call.1} parent=1 // loop_body
      %s22 = ssub.s32 %s17, 1
      %s23 = ssub.s32 %s17, 2
      %s24 = sadd.s32 %s17, 1
      %s25 = ssub.s32 %s17, %s24
      %p26 = scmp.eq.s32.totalorder %s25, 0
      %s28 = sadd.s32 %s27, 1
      %s29 = scalar_select %p26, %s27, %s28
      %p32 = pneg %p26
      %p33 = scmp.eq.s32.totalorder %s17, 1
      %p34 = por %p32, %p33
      %p35 = scmp.ne.s32.totalorder %s27, %s30
      %p36 = scmp.eq.s32.totalorder %s17, 0
      %p37 = por %p35, %p36
      %p38 = scmp.ne.s32.totalorder %s27, %s30
      %p39 = scmp.eq.s32.totalorder %s22, 1
      %p40 = por %p38, %p39
      %p41 = scmp.ne.s32.totalorder %s30, %s31
      %p42 = scmp.eq.s32.totalorder %s22, 0
      %p43 = por %p41, %p42
      %p44 = scmp.ne.s32.totalorder %s30, %s31
      %p45 = scmp.eq.s32.totalorder %s23, 1
      %p46 = por %p44, %p45
      %p48 = scmp.ne.s32.totalorder %s31, %s47
      %p49 = scmp.eq.s32.totalorder %s23, 0
      %p50 = por %p48, %p49
      %s52 = sadd.s32 %s51, 1
      %p55 = scmp.eq.s32.totalorder %s17, 1
      %p56 = scmp.ne.s32.totalorder %s51, %s53
      %p57 = scmp.eq.s32.totalorder %s17, 0
      %p58 = por %p56, %p57
      %p59 = scmp.ne.s32.totalorder %s51, %s53
      %p60 = scmp.eq.s32.totalorder %s22, 1
      %p61 = por %p59, %p60
      %p62 = scmp.ne.s32.totalorder %s53, %s54
      %p63 = scmp.eq.s32.totalorder %s22, 0
      %p64 = por %p62, %p63
      %p65 = scmp.ne.s32.totalorder %s53, %s54
      %p66 = scmp.eq.s32.totalorder %s23, 1
      %p67 = por %p65, %p66
      %p69 = scmp.ne.s32.totalorder %s54, %s68
      %p70 = scmp.eq.s32.totalorder %s23, 0
      %p71 = por %p69, %p70
      %s73 = sadd.s32 %s72, 1
      %p76 = scmp.eq.s32.totalorder %s17, 1
      %p77 = scmp.ne.s32.totalorder %s72, %s74
      %p78 = scmp.eq.s32.totalorder %s17, 0
      %p79 = por %p77, %p78
      %p80 = scmp.ne.s32.totalorder %s72, %s74
      %p81 = scmp.eq.s32.totalorder %s22, 1
      %p82 = por %p80, %p81
      %p83 = scmp.ne.s32.totalorder %s74, %s75
      %p84 = scmp.eq.s32.totalorder %s22, 0
      %p85 = por %p83, %p84
      %p86 = scmp.ne.s32.totalorder %s74, %s75
      %p87 = scmp.eq.s32.totalorder %s23, 1
      %p88 = por %p86, %p87
      %p90 = scmp.ne.s32.totalorder %s75, %s89
      %p91 = scmp.eq.s32.totalorder %s23, 0
      %p92 = por %p90, %p91
      %s94 = sadd.s32 %s93, 1
      %p97 = scmp.eq.s32.totalorder %s17, 1
      %p98 = scmp.ne.s32.totalorder %s93, %s95
      %p99 = scmp.eq.s32.totalorder %s17, 0
      %p100 = por %p98, %p99
      %p101 = scmp.ne.s32.totalorder %s93, %s95
      %p102 = scmp.eq.s32.totalorder %s22, 1
      %p103 = por %p101, %p102
      %p104 = scmp.ne.s32.totalorder %s95, %s96
      %p105 = scmp.eq.s32.totalorder %s22, 0
      %p106 = por %p104, %p105
      %p107 = scmp.ne.s32.totalorder %s95, %s96
      %p108 = scmp.eq.s32.totalorder %s23, 1
      %p109 = por %p107, %p108
      %p111 = scmp.ne.s32.totalorder %s96, %s110
      %p112 = scmp.eq.s32.totalorder %s23, 0
      %p113 = por %p111, %p112
      %s114 = ssub.s32 %s17, %s24
      %p115 = scmp.eq.s32.totalorder %s114, 0
      %s117 = sadd.s32 %s116, 1
      %s118 = scalar_select %p115, %s116, %s117
      %p121 = pneg %p115
      %p122 = scmp.eq.s32.totalorder %s17, 1
      %p123 = por %p121, %p122
      %p124 = scmp.ne.s32.totalorder %s116, %s119
      %p125 = scmp.eq.s32.totalorder %s17, 0
      %p126 = por %p124, %p125
      %p127 = scmp.ne.s32.totalorder %s116, %s119
      %p128 = scmp.eq.s32.totalorder %s22, 1
      %p129 = por %p127, %p128
      %p130 = scmp.ne.s32.totalorder %s119, %s120
      %p131 = scmp.eq.s32.totalorder %s22, 0
      %p132 = por %p130, %p131
      %p133 = scmp.ne.s32.totalorder %s119, %s120
      %p134 = scmp.eq.s32.totalorder %s23, 1
      %p135 = por %p133, %p134
      %p137 = scmp.ne.s32.totalorder %s120, %s136
      %p138 = scmp.eq.s32.totalorder %s23, 0
      %p139 = por %p137, %p138
      %p140 = scmp.le.s32.totalorder 1, %s17
      %p141 = scmp.lt.s32.totalorder %s17, 3
      %p142 = pnand %p140, %p141
      %p143 = pneg %p142
      // Predicated region
      $region9: #{tpu_custom_call.1} parent=5 // pred_check
        _
      $region10: #{tpu_custom_call.1} parent=5 // pred_check_branch
        %145 = sbr.rel (%p142) target = $region12
      $region11: #{tpu_custom_call.1} parent=5 // pred_region
        %s146 = ssub.s32 %s17, 1
        // Predicated region
        $region13: #{tpu_custom_call.1} parent=11 // pred_check
          %p147 = pneg %p64
        $region14: #{tpu_custom_call.1} parent=11 // pred_check_branch
          %149 = sbr.rel (%p147) target = $region16
        $region15: #{tpu_custom_call.1} parent=11 // pred_region
          _
        $region16: #{tpu_custom_call.1} parent=11 // pred_fallthru
          _
        // Predicated region
        $region17: #{tpu_custom_call.1} parent=11 // pred_check
          %p150 = pneg %p85
        $region18: #{tpu_custom_call.1} parent=11 // pred_check_branch
          %152 = sbr.rel (%p150) target = $region20
        $region19: #{tpu_custom_call.1} parent=11 // pred_region
          _
        $region20: #{tpu_custom_call.1} parent=11 // pred_fallthru
          _
        // Predicated region
        $region21: #{tpu_custom_call.1} parent=11 // pred_check
          %p153 = pneg %p106
        $region22: #{tpu_custom_call.1} parent=11 // pred_check_branch
          %155 = sbr.rel (%p153) target = $region24
        $region23: #{tpu_custom_call.1} parent=11 // pred_region
          %157 = vsyncadd [#allocation7], 0
          %s159 = sshll.u32 %s3, 4
          %s160 = int_to_ptr.vmem [resolvable:$true] %s159
          %162 = dma.vmem_to_smem %s160, 16, [#allocation8], [#allocation7]
        $region24: #{tpu_custom_call.1} parent=11 // pred_fallthru
          _
      $region12: #{tpu_custom_call.1} parent=5 // pred_fallthru
        _
      %p163 = scmp.lt.s32.totalorder %s17, 2
      // Predicated region
      $region25: #{tpu_custom_call.1} parent=5 // pred_check
        %p164 = pneg %p163
      $region26: #{tpu_custom_call.1} parent=5 // pred_check_branch
        %166 = sbr.rel (%p164) target = $region28
      $region27: #{tpu_custom_call.1} parent=5 // pred_region
        // Predicated region
        $region29: #{tpu_custom_call.1} parent=27 // pred_check
          %p167 = pneg %p37
        $region30: #{tpu_custom_call.1} parent=27 // pred_check_branch
          %169 = sbr.rel (%p167) target = $region32
        $region31: #{tpu_custom_call.1} parent=27 // pred_region
          %s170 = sand.u32 %s27, 1
          %s171 = scalar_lea.sflag [#allocation5], %s170
          %s172 = sand.u32 %s27, 1
          %s173 = smul.addr %s172, 64
          %s174 = scalar_lea.vmem [#allocation4], %s173
          %176 = vsyncadd %s171, 0
          %s177 = smul.addr %s17, 8
          %s178 = smul.addr %s177, 8
          %s179 = scalar_lea.hbm %s0, %s178
          %s180 = sshll.u32 %s179, 4
          %s181 = int_to_ptr.hbm [resolvable:$true] %s180
          %s182 = sshll.u32 %s174, 4
          %s183 = int_to_ptr.vmem [resolvable:$true] %s182
          %188 = dma.hbm_to_vmem [thread:$0]  %s181, 1024, %s183, %s171, 256, 256, 16
        $region32: #{tpu_custom_call.1} parent=27 // pred_fallthru
          _
      $region28: #{tpu_custom_call.1} parent=5 // pred_fallthru
        _
      %p189 = scmp.le.s32.totalorder 1, %s17
      %p190 = scmp.lt.s32.totalorder %s17, 3
      %p191 = pnand %p189, %p190
      %p192 = pneg %p191
      // Predicated region
      $region33: #{tpu_custom_call.1} parent=5 // pred_check
        _
      $region34: #{tpu_custom_call.1} parent=5 // pred_check_branch
        %194 = sbr.rel (%p191) target = $region36
      $region35: #{tpu_custom_call.1} parent=5 // pred_region
        %s195 = ssub.s32 %s17, 1
        %s196 = sand.u32 %s30, 1
        %s197 = scalar_lea.sflag [#allocation5], %s196
        %s198 = sand.u32 %s30, 1
        %s199 = smul.addr %s198, 64
        %s200 = scalar_lea.vmem [#allocation4], %s199
        // Predicated region
        $region37: #{tpu_custom_call.1} parent=35 // pred_check
          %p201 = pneg %p43
        $region38: #{tpu_custom_call.1} parent=35 // pred_check_branch
          %203 = sbr.rel (%p201) target = $region40
        $region39: #{tpu_custom_call.1} parent=35 // pred_region
          %205 = dma.done %s197, 1024
        $region40: #{tpu_custom_call.1} parent=35 // pred_fallthru
          _
        // Predicated region
        $region41: #{tpu_custom_call.1} parent=35 // pred_check
          %p206 = pneg %p106
        $region42: #{tpu_custom_call.1} parent=35 // pred_check_branch
          %208 = sbr.rel (%p206) target = $region44
        $region43: #{tpu_custom_call.1} parent=35 // pred_region
          %210 = dma.done [#allocation7], 16
        $region44: #{tpu_custom_call.1} parent=35 // pred_fallthru
          _
        %211 = sfence
        %s212 = sand.u32 %s30, 1
        %s213 = scalar_lea.sflag [#allocation5], %s212
        %s214 = sand.u32 %s30, 1
        %s215 = smul.addr %s214, 64
        %s216 = scalar_lea.vmem [#allocation4], %s215
        %p217 = pneg %p43
        %p218 = pneg %p40
        %p219 = pneg %p64
        %p220 = pneg %p61
        %p221 = pneg %p85
        %p222 = pneg %p82
        %p223 = pneg %p106
        %p224 = pneg %p103
        %p225 = pneg %p132
        %p226 = pneg %p129
        %s227 = sand.u32 %s119, 1
        %s228 = scalar_lea.sflag [#allocation6], %s227
        %s229 = sand.u32 %s119, 1
        %s230 = smul.addr %s229, 64
        %s231 = scalar_lea.vmem [#allocation9], %s230
        %v232 = vld [vmem:[%s200] sm:$0xff]
        %v233 = vld [vmem:[%s200 + $0x8] sm:$0xff]
        %v234 = vld [vmem:[%s200 + $0x10] sm:$0xff]
        %v235 = vld [vmem:[%s200 + $0x18] sm:$0xff]
        %v236 = vld [vmem:[%s200 + $0x20] sm:$0xff]
        %v237 = vld [vmem:[%s200 + $0x28] sm:$0xff]
        %v238 = vld [vmem:[%s200 + $0x30] sm:$0xff]
        %v239 = vld [vmem:[%s200 + $0x38] sm:$0xff]
        %v240 = vadd.f32 %v232, %v233
        %241 = vadd.xlane.f32.xlu0 %v240
        %v242 = vpop.xlane.xlu0 %241
        %v243 = vadd.f32 %v234, %v235
        %244 = vadd.xlane.f32.xlu0 %v243
        %v245 = vpop.xlane.xlu0 %244
        %v246 = vadd.f32 %v236, %v237
        %247 = vadd.xlane.f32.xlu0 %v246
        %v248 = vpop.xlane.xlu0 %247
        %v249 = vadd.f32 %v238, %v239
        %250 = vadd.xlane.f32.xlu0 %v249
        %v251 = vpop.xlane.xlu0 %250
        %v252 = vrcp.pop 256.0
        %v253 = vmul.f32 256.0, %v252
        %v254 = vsub.f32 1.0, %v253
        %v255 = vmul.f32 %v252, %v254
        %v256 = vadd.f32 %v252, %v255
        %vm257 = vweird.f32 %v252
        %v258 = vsel %vm257, %v252, %v256
        %v259 = vmul.f32 %v242, %v258
        %v260 = vmul.f32 %v245, %v258
        %v261 = vmul.f32 %v248, %v258
        %v262 = vmul.f32 %v251, %v258
        %v263 = vmax.f32 %v232, %v233
        %264 = vmax.xlane.f32.xlu0 %v263
        %v265 = vpop.xlane.xlu0 %264
        %v266 = vmax.f32 %v234, %v235
        %267 = vmax.xlane.f32.xlu0 %v266
        %v268 = vpop.xlane.xlu0 %267
        %v269 = vmax.f32 %v236, %v237
        %270 = vmax.xlane.f32.xlu0 %v269
        %v271 = vpop.xlane.xlu0 %270
        %v272 = vmax.f32 %v238, %v239
        %273 = vmax.xlane.f32.xlu0 %v272
        %v274 = vpop.xlane.xlu0 %273
        %v275 = vld [vmem:[%s1] sm:$0xff]
        %v276 = vld [vmem:[%s1 + $0x8] sm:$0xff]
        %v277 = vld [vmem:[%s1 + $0x10] sm:$0xff]
        %v278 = vld [vmem:[%s1 + $0x18] sm:$0xff]
        %v279 = vld [vmem:[%s2] sm:$0xff]
        %v280 = vld [vmem:[%s2 + $0x8] sm:$0xff]
        %v281 = vld [vmem:[%s2 + $0x10] sm:$0xff]
        %v282 = vld [vmem:[%s2 + $0x18] sm:$0xff]
        %v283 = vmul.f32 %v259, %v275
        %v284 = vmul.f32 %v260, %v276
        %v285 = vmul.f32 %v261, %v277
        %v286 = vmul.f32 %v262, %v278
        %v287 = vmul.f32 %v265, %v275
        %v288 = vmul.f32 %v268, %v276
        %v289 = vmul.f32 %v271, %v277
        %v290 = vmul.f32 %v274, %v278
        %vm291 = vcmask 7168
        %v292 = vsel %vm291, %v283, 0.0
        %v293 = vsel %vm291, %v284, 0.0
        %v294 = vadd.f32 %v292, %v293
        %v295 = vsel %vm291, %v285, 0.0
        %v296 = vadd.f32 %v294, %v295
        %v297 = vsel %vm291, %v286, 0.0
        %v298 = vadd.f32 %v296, %v297
        %v299 = vrot.slane %v298, 4
        %v300 = vadd.f32 %v298, %v299
        %v301 = vrot.slane %v300, 2
        %v302 = vadd.f32 %v300, %v301
        %v303 = vrot.slane %v302, 1
        %v304 = vadd.f32 %v302, %v303
        %v305 = vsel %vm291, %v287, 0.0
        %v306 = vsel %vm291, %v288, 0.0
        %v307 = vadd.f32 %v305, %v306
        %v308 = vsel %vm291, %v289, 0.0
        %v309 = vadd.f32 %v307, %v308
        %v310 = vsel %vm291, %v290, 0.0
        %v311 = vadd.f32 %v309, %v310
        %v312 = vrot.slane %v311, 4
        %v313 = vadd.f32 %v311, %v312
        %v314 = vrot.slane %v313, 2
        %v315 = vadd.f32 %v313, %v314
        %v316 = vrot.slane %v315, 1
        %v317 = vadd.f32 %v315, %v316
        %v318 = vmax.f32 %v304, 0.0
        %v319 = vmax.f32 %v317, 0.0
        %v320 = vmul.f32 %v318, %v279
        %v321 = vmul.f32 %v318, %v280
        %v322 = vmul.f32 %v318, %v281
        %v323 = vmul.f32 %v318, %v282
        %v324 = vmul.f32 %v319, %v279
        %v325 = vmul.f32 %v319, %v280
        %v326 = vmul.f32 %v319, %v281
        %v327 = vmul.f32 %v319, %v282
        %v328 = vadd.f32 %v320, 0.0
        %v329 = vadd.f32 %v321, 0.0
        %v330 = vadd.f32 %v322, 0.0
        %v331 = vadd.f32 %v323, 0.0
        %v332 = vadd.f32 %v324, 0.0
        %v333 = vadd.f32 %v325, 0.0
        %v334 = vadd.f32 %v326, 0.0
        %v335 = vadd.f32 %v327, 0.0
        %340 = vrot.lane.b32.xlu0 %v275, 127
        %v341 = vpop.permute.xlu0 %340
        %342 = vrot.lane.b32.xlu0 %v276, 127
        %v343 = vpop.permute.xlu0 %342
        %344 = vrot.lane.b32.xlu0 %v277, 127
        %v345 = vpop.permute.xlu0 %344
        %346 = vrot.lane.b32.xlu0 %v278, 127
        %v347 = vpop.permute.xlu0 %346
        %v352 = vmul.f32 %v259, %v341
        %v353 = vmul.f32 %v260, %v343
        %v354 = vmul.f32 %v261, %v345
        %v355 = vmul.f32 %v262, %v347
        %v356 = vmul.f32 %v265, %v341
        %v357 = vmul.f32 %v268, %v343
        %v358 = vmul.f32 %v271, %v345
        %v359 = vmul.f32 %v274, %v347
        %v360 = vsel %vm291, %v352, 0.0
        %v361 = vsel %vm291, %v353, 0.0
        %v362 = vadd.f32 %v360, %v361
        %v363 = vsel %vm291, %v354, 0.0
        %v364 = vadd.f32 %v362, %v363
        %v365 = vsel %vm291, %v355, 0.0
        %v366 = vadd.f32 %v364, %v365
        %v367 = vrot.slane %v366, 4
        %v368 = vadd.f32 %v366, %v367
        %v369 = vrot.slane %v368, 2
        %v370 = vadd.f32 %v368, %v369
        %v371 = vrot.slane %v370, 1
        %v372 = vadd.f32 %v370, %v371
        %v373 = vsel %vm291, %v356, 0.0
        %v374 = vsel %vm291, %v357, 0.0
        %v375 = vadd.f32 %v373, %v374
        %v376 = vsel %vm291, %v358, 0.0
        %v377 = vadd.f32 %v375, %v376
        %v378 = vsel %vm291, %v359, 0.0
        %v379 = vadd.f32 %v377, %v378
        %v380 = vrot.slane %v379, 4
        %v381 = vadd.f32 %v379, %v380
        %v382 = vrot.slane %v381, 2
        %v383 = vadd.f32 %v381, %v382
        %v384 = vrot.slane %v383, 1
        %v385 = vadd.f32 %v383, %v384
        %v386 = vmax.f32 %v372, 0.0
        %v387 = vmax.f32 %v385, 0.0
        %392 = vrot.lane.b32.xlu0 %v279, 127
        %v393 = vpop.permute.xlu0 %392
        %394 = vrot.lane.b32.xlu0 %v280, 127
        %v395 = vpop.permute.xlu0 %394
        %396 = vrot.lane.b32.xlu0 %v281, 127
        %v397 = vpop.permute.xlu0 %396
        %398 = vrot.lane.b32.xlu0 %v282, 127
        %v399 = vpop.permute.xlu0 %398
        %v404 = vmul.f32 %v386, %v393
        %v405 = vmul.f32 %v386, %v395
        %v406 = vmul.f32 %v386, %v397
        %v407 = vmul.f32 %v386, %v399
        %v408 = vmul.f32 %v387, %v393
        %v409 = vmul.f32 %v387, %v395
        %v410 = vmul.f32 %v387, %v397
        %v411 = vmul.f32 %v387, %v399
        %v412 = vadd.f32 %v328, %v404
        %v413 = vadd.f32 %v329, %v405
        %v414 = vadd.f32 %v330, %v406
        %v415 = vadd.f32 %v331, %v407
        %v416 = vadd.f32 %v332, %v408
        %v417 = vadd.f32 %v333, %v409
        %v418 = vadd.f32 %v334, %v410
        %v419 = vadd.f32 %v335, %v411
        %v420 = vadd.f32 %v412, %v416
        %v421 = vadd.f32 %v413, %v417
        %v422 = vadd.f32 %v414, %v418
        %v423 = vadd.f32 %v415, %v419
        %v424 = vxor.u32 %v420, 2147483648
        %v425 = vxor.u32 %v421, 2147483648
        %v426 = vxor.u32 %v422, 2147483648
        %v427 = vxor.u32 %v423, 2147483648
        %v428 = vmul.f32 %v424, 1.442695
        %v429 = vpow.pop %v428
        %v430 = vmul.f32 %v425, 1.442695
        %v431 = vpow.pop %v430
        %v432 = vmul.f32 %v426, 1.442695
        %v433 = vpow.pop %v432
        %v434 = vmul.f32 %v427, 1.442695
        %v435 = vpow.pop %v434
        %v436 = vadd.f32 %v429, 1.0
        %v437 = vadd.f32 %v431, 1.0
        %v438 = vadd.f32 %v433, 1.0
        %v439 = vadd.f32 %v435, 1.0
        %v440 = vrcp.pop %v436
        %v441 = vmul.f32 %v436, %v440
        %v442 = vsub.f32 1.0, %v441
        %v443 = vmul.f32 %v440, %v442
        %v444 = vadd.f32 %v440, %v443
        %vm445 = vweird.f32 %v436
        %vm446 = vweird.f32 %v440
        %vm447 = vmor %vm445, %vm446
        %v448 = vsel %vm447, %v440, %v444
        %v449 = vand.u32 2147483647, %v436
        %vm450 = vcmp.eq.f32.partialorder %v449, 8.507059e+37
        %v451 = vand.u32 %v436, 2147483648
        %v452 = vor.u32 1.1754944e-38, %v451
        %v453 = vsel %vm450, %v452, %v448
        %v454 = vmul.f32 1.0, %v453
        %v455 = vrcp.pop %v437
        %v456 = vmul.f32 %v437, %v455
        %v457 = vsub.f32 1.0, %v456
        %v458 = vmul.f32 %v455, %v457
        %v459 = vadd.f32 %v455, %v458
        %vm460 = vweird.f32 %v437
        %vm461 = vweird.f32 %v455
        %vm462 = vmor %vm460, %vm461
        %v463 = vsel %vm462, %v455, %v459
        %v464 = vand.u32 2147483647, %v437
        %vm465 = vcmp.eq.f32.partialorder %v464, 8.507059e+37
        %v466 = vand.u32 %v437, 2147483648
        %v467 = vor.u32 1.1754944e-38, %v466
        %v468 = vsel %vm465, %v467, %v463
        %v469 = vmul.f32 1.0, %v468
        %v470 = vrcp.pop %v438
        %v471 = vmul.f32 %v438, %v470
        %v472 = vsub.f32 1.0, %v471
        %v473 = vmul.f32 %v470, %v472
        %v474 = vadd.f32 %v470, %v473
        %vm475 = vweird.f32 %v438
        %vm476 = vweird.f32 %v470
        %vm477 = vmor %vm475, %vm476
        %v478 = vsel %vm477, %v470, %v474
        %v479 = vand.u32 2147483647, %v438
        %vm480 = vcmp.eq.f32.partialorder %v479, 8.507059e+37
        %v481 = vand.u32 %v438, 2147483648
        %v482 = vor.u32 1.1754944e-38, %v481
        %v483 = vsel %vm480, %v482, %v478
        %v484 = vmul.f32 1.0, %v483
        %v485 = vrcp.pop %v439
        %v486 = vmul.f32 %v439, %v485
        %v487 = vsub.f32 1.0, %v486
        %v488 = vmul.f32 %v485, %v487
        %v489 = vadd.f32 %v485, %v488
        %vm490 = vweird.f32 %v439
        %vm491 = vweird.f32 %v485
        %vm492 = vmor %vm490, %vm491
        %v493 = vsel %vm492, %v485, %v489
        %v494 = vand.u32 2147483647, %v439
        %vm495 = vcmp.eq.f32.partialorder %v494, 8.507059e+37
        %v496 = vand.u32 %v439, 2147483648
        %v497 = vor.u32 1.1754944e-38, %v496
        %v498 = vsel %vm495, %v497, %v493
        %v499 = vmul.f32 1.0, %v498
        %501 = vset.pattern.permute.xlu0 0
        %502 = vperm.xlu0 %501, %v454
        %v503 = vpop.permute.xlu0 %502
        %506 = vset.pattern.permute.xlu0 0
        %507 = vperm.xlu0 %506, %v469
        %v508 = vpop.permute.xlu0 %507
        %511 = vset.pattern.permute.xlu0 0
        %512 = vperm.xlu0 %511, %v484
        %v513 = vpop.permute.xlu0 %512
        %516 = vset.pattern.permute.xlu0 0
        %517 = vperm.xlu0 %516, %v499
        %v518 = vpop.permute.xlu0 %517
        %v520 = vmul.f32 %v232, %v503
        %v521 = vmul.f32 %v233, %v503
        %v522 = vmul.f32 %v234, %v508
        %v523 = vmul.f32 %v235, %v508
        %v524 = vmul.f32 %v236, %v513
        %v525 = vmul.f32 %v237, %v513
        %v526 = vmul.f32 %v238, %v518
        %v527 = vmul.f32 %v239, %v518
        %v528 = vadd.f32 %v520, %v522
        %v529 = vadd.f32 %v528, %v524
        %v530 = vadd.f32 %v529, %v526
        %v531 = vrot.slane %v530, 4
        %v532 = vadd.f32 %v530, %v531
        %v533 = vrot.slane %v532, 2
        %v534 = vadd.f32 %v532, %v533
        %v535 = vrot.slane %v534, 1
        %v536 = vadd.f32 %v534, %v535
        %v537 = vadd.f32 %v521, %v523
        %v538 = vadd.f32 %v537, %v525
        %v539 = vadd.f32 %v538, %v527
        %v540 = vrot.slane %v539, 4
        %v541 = vadd.f32 %v539, %v540
        %v542 = vrot.slane %v541, 2
        %v543 = vadd.f32 %v541, %v542
        %v544 = vrot.slane %v543, 1
        %v545 = vadd.f32 %v543, %v544
        %v546 = vrcp.pop 32.0
        %v547 = vmul.f32 32.0, %v546
        %v548 = vsub.f32 1.0, %v547
        %v549 = vmul.f32 %v546, %v548
        %v550 = vadd.f32 %v546, %v549
        %vm551 = vweird.f32 %v546
        %v552 = vsel %vm551, %v546, %v550
        %v553 = vmul.f32 %v536, %v552
        %v554 = vmul.f32 %v545, %v552
        %v555 = vmax.f32 %v520, %v524
        %v556 = vmax.f32 %v522, %v526
        %v557 = vmax.f32 %v555, %v556
        %v558 = vrot.slane %v557, 4
        %v559 = vmax.f32 %v557, %v558
        %v560 = vrot.slane %v559, 2
        %v561 = vmax.f32 %v559, %v560
        %v562 = vrot.slane %v561, 1
        %v563 = vmax.f32 %v561, %v562
        %v564 = vmax.f32 %v521, %v525
        %v565 = vmax.f32 %v523, %v527
        %v566 = vmax.f32 %v564, %v565
        %v567 = vrot.slane %v566, 4
        %v568 = vmax.f32 %v566, %v567
        %v569 = vrot.slane %v568, 2
        %v570 = vmax.f32 %v568, %v569
        %v571 = vrot.slane %v570, 1
        %v572 = vmax.f32 %v570, %v571
        %vm573 = vcmask 179200
        %574 = vst.msk [vmem:[#allocation2] sm:$0xff] %vm573, 0.0
        %575 = vst.msk [vmem:[#allocation2 + $0x8] sm:$0xff] %vm573, 0.0
        %vm576 = vcmask 177152
        %577 = vst.msk [vmem:[#allocation2 + $0x10] sm:$0x3f] %vm576, 0.0
        %578 = vst.msk [vmem:[#allocation2 + $0x18] sm:$0xff] %vm573, 0.0
        %579 = vst.msk [vmem:[#allocation2 + $0x20] sm:$0xff] %vm573, 0.0
        %580 = vst.msk [vmem:[#allocation2 + $0x28] sm:$0x3f] %vm576, 0.0
        %582 = vrot.lane.b32.xlu0 %v553, 3
        %v583 = vpop.permute.xlu0 %582
        %vm585 = vcmask 147480
        %586 = vst.msk [vmem:[#allocation2 + $0x3] sm:$0x1] %vm585, %v583
        %588 = vrot.lane.b32.xlu0 %v563, 3
        %v589 = vpop.permute.xlu0 %588
        %s591 = scalar_lea.vmem [#allocation2], 24
        %592 = vst.msk [vmem:[%s591 + $0x3] sm:$0x1] %vm585, %v589
        %593 = vrot.lane.b32.xlu0 %v553, 115
        %v594 = vpop.permute.xlu0 %593
        %596 = vst.msk [vmem:[#allocation2 + $0x4] sm:$0x1] %vm585, %v594
        %597 = vrot.lane.b32.xlu0 %v563, 115
        %v598 = vpop.permute.xlu0 %597
        %600 = vst.msk [vmem:[%s591 + $0x4] sm:$0x1] %vm585, %v598
        %601 = vrot.lane.b32.xlu0 %v553, 99
        %v602 = vpop.permute.xlu0 %601
        %604 = vst.msk [vmem:[#allocation2 + $0x5] sm:$0x1] %vm585, %v602
        %605 = vrot.lane.b32.xlu0 %v563, 99
        %v606 = vpop.permute.xlu0 %605
        %608 = vst.msk [vmem:[%s591 + $0x5] sm:$0x1] %vm585, %v606
        %609 = vrot.lane.b32.xlu0 %v553, 83
        %v610 = vpop.permute.xlu0 %609
        %612 = vst.msk [vmem:[#allocation2 + $0x6] sm:$0x1] %vm585, %v610
        %613 = vrot.lane.b32.xlu0 %v563, 83
        %v614 = vpop.permute.xlu0 %613
        %616 = vst.msk [vmem:[%s591 + $0x6] sm:$0x1] %vm585, %v614
        %617 = vrot.lane.b32.xlu0 %v553, 67
        %v618 = vpop.permute.xlu0 %617
        %620 = vst.msk [vmem:[#allocation2 + $0x7] sm:$0x1] %vm585, %v618
        %621 = vrot.lane.b32.xlu0 %v563, 67
        %v622 = vpop.permute.xlu0 %621
        %624 = vst.msk [vmem:[%s591 + $0x7] sm:$0x1] %vm585, %v622
        %625 = vrot.lane.b32.xlu0 %v553, 51
        %v626 = vpop.permute.xlu0 %625
        %628 = vst.msk [vmem:[#allocation2 + $0x8] sm:$0x1] %vm585, %v626
        %629 = vrot.lane.b32.xlu0 %v563, 51
        %v630 = vpop.permute.xlu0 %629
        %632 = vst.msk [vmem:[%s591 + $0x8] sm:$0x1] %vm585, %v630
        %633 = vrot.lane.b32.xlu0 %v553, 35
        %v634 = vpop.permute.xlu0 %633
        %636 = vst.msk [vmem:[#allocation2 + $0x9] sm:$0x1] %vm585, %v634
        %637 = vrot.lane.b32.xlu0 %v563, 35
        %v638 = vpop.permute.xlu0 %637
        %640 = vst.msk [vmem:[%s591 + $0x9] sm:$0x1] %vm585, %v638
        %641 = vrot.lane.b32.xlu0 %v553, 19
        %v642 = vpop.permute.xlu0 %641
        %644 = vst.msk [vmem:[#allocation2 + $0xa] sm:$0x1] %vm585, %v642
        %645 = vrot.lane.b32.xlu0 %v563, 19
        %v646 = vpop.permute.xlu0 %645
        %648 = vst.msk [vmem:[%s591 + $0xa] sm:$0x1] %vm585, %v646
        %650 = vrot.lane.b32.xlu0 %v554, 3
        %v651 = vpop.permute.xlu0 %650
        %653 = vst.msk [vmem:[#allocation2 + $0xb] sm:$0x1] %vm585, %v651
        %655 = vrot.lane.b32.xlu0 %v572, 3
        %v656 = vpop.permute.xlu0 %655
        %658 = vst.msk [vmem:[%s591 + $0xb] sm:$0x1] %vm585, %v656
        %659 = vrot.lane.b32.xlu0 %v554, 115
        %v660 = vpop.permute.xlu0 %659
        %662 = vst.msk [vmem:[#allocation2 + $0xc] sm:$0x1] %vm585, %v660
        %663 = vrot.lane.b32.xlu0 %v572, 115
        %v664 = vpop.permute.xlu0 %663
        %666 = vst.msk [vmem:[%s591 + $0xc] sm:$0x1] %vm585, %v664
        %667 = vrot.lane.b32.xlu0 %v554, 99
        %v668 = vpop.permute.xlu0 %667
        %670 = vst.msk [vmem:[#allocation2 + $0xd] sm:$0x1] %vm585, %v668
        %671 = vrot.lane.b32.xlu0 %v572, 99
        %v672 = vpop.permute.xlu0 %671
        %674 = vst.msk [vmem:[%s591 + $0xd] sm:$0x1] %vm585, %v672
        %675 = vrot.lane.b32.xlu0 %v554, 83
        %v676 = vpop.permute.xlu0 %675
        %678 = vst.msk [vmem:[#allocation2 + $0xe] sm:$0x1] %vm585, %v676
        %679 = vrot.lane.b32.xlu0 %v572, 83
        %v680 = vpop.permute.xlu0 %679
        %682 = vst.msk [vmem:[%s591 + $0xe] sm:$0x1] %vm585, %v680
        %683 = vrot.lane.b32.xlu0 %v554, 67
        %v684 = vpop.permute.xlu0 %683
        %686 = vst.msk [vmem:[#allocation2 + $0xf] sm:$0x1] %vm585, %v684
        %687 = vrot.lane.b32.xlu0 %v572, 67
        %v688 = vpop.permute.xlu0 %687
        %690 = vst.msk [vmem:[%s591 + $0xf] sm:$0x1] %vm585, %v688
        %691 = vrot.lane.b32.xlu0 %v554, 51
        %v692 = vpop.permute.xlu0 %691
        %694 = vst.msk [vmem:[#allocation2 + $0x10] sm:$0x1] %vm585, %v692
        %695 = vrot.lane.b32.xlu0 %v572, 51
        %v696 = vpop.permute.xlu0 %695
        %698 = vst.msk [vmem:[%s591 + $0x10] sm:$0x1] %vm585, %v696
        %699 = vrot.lane.b32.xlu0 %v554, 35
        %v700 = vpop.permute.xlu0 %699
        %702 = vst.msk [vmem:[#allocation2 + $0x11] sm:$0x1] %vm585, %v700
        %703 = vrot.lane.b32.xlu0 %v572, 35
        %v704 = vpop.permute.xlu0 %703
        %706 = vst.msk [vmem:[%s591 + $0x11] sm:$0x1] %vm585, %v704
        %707 = vrot.lane.b32.xlu0 %v554, 19
        %v708 = vpop.permute.xlu0 %707
        %710 = vst.msk [vmem:[#allocation2 + $0x12] sm:$0x1] %vm585, %v708
        %711 = vrot.lane.b32.xlu0 %v572, 19
        %v712 = vpop.permute.xlu0 %711
        %714 = vst.msk [vmem:[%s591 + $0x12] sm:$0x1] %vm585, %v712
        %v715 = vld [vmem:[#allocation2] sm:$0xff]
        %v716 = vld [vmem:[#allocation2 + $0x8] sm:$0xff]
        %v717 = vld [vmem:[#allocation2 + $0x10] sm:$0x3f]
        %v718 = vld [vmem:[%s591] sm:$0xff]
        %v719 = vld [vmem:[%s591 + $0x8] sm:$0xff]
        %v720 = vld [vmem:[%s591 + $0x10] sm:$0x3f]
        %s721 = sld [smem:[#allocation8]]
        %s722 = sld [smem:[#allocation8 + $0x31]]
        %v723 = vstv %s721
        %v724 = vmul.f32 %v723, %v715
        %v725 = vmul.f32 %v723, %v716
        %v726 = vadd.f32 %v724, 0.0
        %v727 = vadd.f32 %v725, 0.0
        %v728 = vstv %s722
        %v729 = vmul.f32 %v728, %v718
        %v730 = vmul.f32 %v728, %v719
        %v731 = vadd.f32 %v726, %v729
        %v732 = vadd.f32 %v727, %v730
        %s733 = sld [smem:[#allocation8 + $0x1]]
        %s734 = sld [smem:[#allocation8 + $0x32]]
        %v735 = vstv %s733
        %v736 = vmul.f32 %v735, %v715
        %v737 = vmul.f32 %v735, %v716
        %740 = vrot.lane.b32.xlu0 %v736, 127
        %v741 = vpop.permute.xlu0 %740
        %742 = vrot.lane.b32.xlu0 %v737, 127
        %v743 = vpop.permute.xlu0 %742
        %v746 = vadd.f32 %v731, %v741
        %v747 = vadd.f32 %v732, %v743
        %v748 = vstv %s734
        %v749 = vmul.f32 %v748, %v718
        %v750 = vmul.f32 %v748, %v719
        %753 = vrot.lane.b32.xlu0 %v749, 127
        %v754 = vpop.permute.xlu0 %753
        %755 = vrot.lane.b32.xlu0 %v750, 127
        %v756 = vpop.permute.xlu0 %755
        %v759 = vadd.f32 %v746, %v754
        %v760 = vadd.f32 %v747, %v756
        %s761 = sld [smem:[#allocation8 + $0x2]]
        %s762 = sld [smem:[#allocation8 + $0x33]]
        %v763 = vstv %s761
        %v764 = vmul.f32 %v763, %v715
        %v765 = vmul.f32 %v763, %v716
        %768 = vrot.lane.b32.xlu0 %v764, 126
        %v769 = vpop.permute.xlu0 %768
        %770 = vrot.lane.b32.xlu0 %v765, 126
        %v771 = vpop.permute.xlu0 %770
        %v774 = vadd.f32 %v759, %v769
        %v775 = vadd.f32 %v760, %v771
        %v776 = vstv %s762
        %v777 = vmul.f32 %v776, %v718
        %v778 = vmul.f32 %v776, %v719
        %781 = vrot.lane.b32.xlu0 %v777, 126
        %v782 = vpop.permute.xlu0 %781
        %783 = vrot.lane.b32.xlu0 %v778, 126
        %v784 = vpop.permute.xlu0 %783
        %v787 = vadd.f32 %v774, %v782
        %v788 = vadd.f32 %v775, %v784
        %s789 = sld [smem:[#allocation8 + $0x3]]
        %s790 = sld [smem:[#allocation8 + $0x34]]
        %v791 = vstv %s789
        %v792 = vmul.f32 %v791, %v715
        %v793 = vmul.f32 %v791, %v716
        %796 = vrot.lane.b32.xlu0 %v792, 125
        %v797 = vpop.permute.xlu0 %796
        %798 = vrot.lane.b32.xlu0 %v793, 125
        %v799 = vpop.permute.xlu0 %798
        %v802 = vadd.f32 %v787, %v797
        %v803 = vadd.f32 %v788, %v799
        %v804 = vstv %s790
        %v805 = vmul.f32 %v804, %v718
        %v806 = vmul.f32 %v804, %v719
        %809 = vrot.lane.b32.xlu0 %v805, 125
        %v810 = vpop.permute.xlu0 %809
        %811 = vrot.lane.b32.xlu0 %v806, 125
        %v812 = vpop.permute.xlu0 %811
        %v815 = vadd.f32 %v802, %v810
        %v816 = vadd.f32 %v803, %v812
        %s817 = sld [smem:[#allocation8 + $0x4]]
        %s818 = sld [smem:[#allocation8 + $0x35]]
        %v819 = vstv %s817
        %v820 = vmul.f32 %v819, %v715
        %v821 = vmul.f32 %v819, %v716
        %824 = vrot.lane.b32.xlu0 %v820, 124
        %v825 = vpop.permute.xlu0 %824
        %826 = vrot.lane.b32.xlu0 %v821, 124
        %v827 = vpop.permute.xlu0 %826
        %v830 = vadd.f32 %v815, %v825
        %v831 = vadd.f32 %v816, %v827
        %v832 = vstv %s818
        %v833 = vmul.f32 %v832, %v718
        %v834 = vmul.f32 %v832, %v719
        %837 = vrot.lane.b32.xlu0 %v833, 124
        %v838 = vpop.permute.xlu0 %837
        %839 = vrot.lane.b32.xlu0 %v834, 124
        %v840 = vpop.permute.xlu0 %839
        %v843 = vadd.f32 %v830, %v838
        %v844 = vadd.f32 %v831, %v840
        %s845 = sld [smem:[#allocation8 + $0x5]]
        %s846 = sld [smem:[#allocation8 + $0x36]]
        %v847 = vstv %s845
        %v848 = vmul.f32 %v847, %v715
        %v849 = vmul.f32 %v847, %v716
        %852 = vrot.lane.b32.xlu0 %v848, 123
        %v853 = vpop.permute.xlu0 %852
        %854 = vrot.lane.b32.xlu0 %v849, 123
        %v855 = vpop.permute.xlu0 %854
        %v858 = vadd.f32 %v843, %v853
        %v859 = vadd.f32 %v844, %v855
        %v860 = vstv %s846
        %v861 = vmul.f32 %v860, %v718
        %v862 = vmul.f32 %v860, %v719
        %865 = vrot.lane.b32.xlu0 %v861, 123
        %v866 = vpop.permute.xlu0 %865
        %867 = vrot.lane.b32.xlu0 %v862, 123
        %v868 = vpop.permute.xlu0 %867
        %v871 = vadd.f32 %v858, %v866
        %v872 = vadd.f32 %v859, %v868
        %s873 = sld [smem:[#allocation8 + $0x6]]
        %s874 = sld [smem:[#allocation8 + $0x37]]
        %v875 = vstv %s873
        %v876 = vmul.f32 %v875, %v715
        %v877 = vmul.f32 %v875, %v716
        %880 = vrot.lane.b32.xlu0 %v876, 122
        %v881 = vpop.permute.xlu0 %880
        %882 = vrot.lane.b32.xlu0 %v877, 122
        %v883 = vpop.permute.xlu0 %882
        %v886 = vadd.f32 %v871, %v881
        %v887 = vadd.f32 %v872, %v883
        %v888 = vstv %s874
        %v889 = vmul.f32 %v888, %v718
        %v890 = vmul.f32 %v888, %v719
        %893 = vrot.lane.b32.xlu0 %v889, 122
        %v894 = vpop.permute.xlu0 %893
        %895 = vrot.lane.b32.xlu0 %v890, 122
        %v896 = vpop.permute.xlu0 %895
        %v899 = vadd.f32 %v886, %v894
        %v900 = vadd.f32 %v887, %v896
        %v901 = vadd.f32 %v899, 0.0
        %v902 = vadd.f32 %v900, 0.0
        %s903 = sld [smem:[#allocation8 + $0x7]]
        %s904 = sld [smem:[#allocation8 + $0x38]]
        %v905 = vstv %s903
        %v906 = vmul.f32 %v905, %v715
        %v907 = vmul.f32 %v905, %v716
        %v908 = vmul.f32 %v905, %v717
        %v909 = vadd.f32 %v906, 0.0
        %v910 = vadd.f32 %v907, 0.0
        %v911 = vadd.f32 %v908, 0.0
        %v912 = vstv %s904
        %v913 = vmul.f32 %v912, %v718
        %v914 = vmul.f32 %v912, %v719
        %v915 = vmul.f32 %v912, %v720
        %v916 = vadd.f32 %v909, %v913
        %v917 = vadd.f32 %v910, %v914
        %v918 = vadd.f32 %v911, %v915
        %s919 = sld [smem:[#allocation8 + $0x8]]
        %s920 = sld [smem:[#allocation8 + $0x39]]
        %v921 = vstv %s919
        %v922 = vmul.f32 %v921, %v715
        %v923 = vmul.f32 %v921, %v716
        %v924 = vmul.f32 %v921, %v717
        %928 = vrot.lane.b32.xlu0 %v922, 127
        %v929 = vpop.permute.xlu0 %928
        %930 = vrot.lane.b32.xlu0 %v923, 127
        %v931 = vpop.permute.xlu0 %930
        %932 = vrot.lane.b32.xlu0 %v924, 127
        %v933 = vpop.permute.xlu0 %932
        %v937 = vadd.f32 %v916, %v929
        %v938 = vadd.f32 %v917, %v931
        %v939 = vadd.f32 %v918, %v933
        %v940 = vstv %s920
        %v941 = vmul.f32 %v940, %v718
        %v942 = vmul.f32 %v940, %v719
        %v943 = vmul.f32 %v940, %v720
        %947 = vrot.lane.b32.xlu0 %v941, 127
        %v948 = vpop.permute.xlu0 %947
        %949 = vrot.lane.b32.xlu0 %v942, 127
        %v950 = vpop.permute.xlu0 %949
        %951 = vrot.lane.b32.xlu0 %v943, 127
        %v952 = vpop.permute.xlu0 %951
        %v956 = vadd.f32 %v937, %v948
        %v957 = vadd.f32 %v938, %v950
        %v958 = vadd.f32 %v939, %v952
        %s959 = sld [smem:[#allocation8 + $0x9]]
        %s960 = sld [smem:[#allocation8 + $0x3a]]
        %v961 = vstv %s959
        %v962 = vmul.f32 %v961, %v715
        %v963 = vmul.f32 %v961, %v716
        %v964 = vmul.f32 %v961, %v717
        %968 = vrot.lane.b32.xlu0 %v962, 126
        %v969 = vpop.permute.xlu0 %968
        %970 = vrot.lane.b32.xlu0 %v963, 126
        %v971 = vpop.permute.xlu0 %970
        %972 = vrot.lane.b32.xlu0 %v964, 126
        %v973 = vpop.permute.xlu0 %972
        %v977 = vadd.f32 %v956, %v969
        %v978 = vadd.f32 %v957, %v971
        %v979 = vadd.f32 %v958, %v973
        %v980 = vstv %s960
        %v981 = vmul.f32 %v980, %v718
        %v982 = vmul.f32 %v980, %v719
        %v983 = vmul.f32 %v980, %v720
        %987 = vrot.lane.b32.xlu0 %v981, 126
        %v988 = vpop.permute.xlu0 %987
        %989 = vrot.lane.b32.xlu0 %v982, 126
        %v990 = vpop.permute.xlu0 %989
        %991 = vrot.lane.b32.xlu0 %v983, 126
        %v992 = vpop.permute.xlu0 %991
        %v996 = vadd.f32 %v977, %v988
        %v997 = vadd.f32 %v978, %v990
        %v998 = vadd.f32 %v979, %v992
        %s999 = sld [smem:[#allocation8 + $0xa]]
        %s1000 = sld [smem:[#allocation8 + $0x3b]]
        %v1001 = vstv %s999
        %v1002 = vmul.f32 %v1001, %v715
        %v1003 = vmul.f32 %v1001, %v716
        %v1004 = vmul.f32 %v1001, %v717
        %1008 = vrot.lane.b32.xlu0 %v1002, 125
        %v1009 = vpop.permute.xlu0 %1008
        %1010 = vrot.lane.b32.xlu0 %v1003, 125
        %v1011 = vpop.permute.xlu0 %1010
        %1012 = vrot.lane.b32.xlu0 %v1004, 125
        %v1013 = vpop.permute.xlu0 %1012
        %v1017 = vadd.f32 %v996, %v1009
        %v1018 = vadd.f32 %v997, %v1011
        %v1019 = vadd.f32 %v998, %v1013
        %v1020 = vstv %s1000
        %v1021 = vmul.f32 %v1020, %v718
        %v1022 = vmul.f32 %v1020, %v719
        %v1023 = vmul.f32 %v1020, %v720
        %1027 = vrot.lane.b32.xlu0 %v1021, 125
        %v1028 = vpop.permute.xlu0 %1027
        %1029 = vrot.lane.b32.xlu0 %v1022, 125
        %v1030 = vpop.permute.xlu0 %1029
        %1031 = vrot.lane.b32.xlu0 %v1023, 125
        %v1032 = vpop.permute.xlu0 %1031
        %v1036 = vadd.f32 %v1017, %v1028
        %v1037 = vadd.f32 %v1018, %v1030
        %v1038 = vadd.f32 %v1019, %v1032
        %s1039 = sld [smem:[#allocation8 + $0xb]]
        %s1040 = sld [smem:[#allocation8 + $0x3c]]
        %v1041 = vstv %s1039
        %v1042 = vmul.f32 %v1041, %v715
        %v1043 = vmul.f32 %v1041, %v716
        %v1044 = vmul.f32 %v1041, %v717
        %1048 = vrot.lane.b32.xlu0 %v1042, 124
        %v1049 = vpop.permute.xlu0 %1048
        %1050 = vrot.lane.b32.xlu0 %v1043, 124
        %v1051 = vpop.permute.xlu0 %1050
        %1052 = vrot.lane.b32.xlu0 %v1044, 124
        %v1053 = vpop.permute.xlu0 %1052
        %v1057 = vadd.f32 %v1036, %v1049
        %v1058 = vadd.f32 %v1037, %v1051
        %v1059 = vadd.f32 %v1038, %v1053
        %v1060 = vstv %s1040
        %v1061 = vmul.f32 %v1060, %v718
        %v1062 = vmul.f32 %v1060, %v719
        %v1063 = vmul.f32 %v1060, %v720
        %1067 = vrot.lane.b32.xlu0 %v1061, 124
        %v1068 = vpop.permute.xlu0 %1067
        %1069 = vrot.lane.b32.xlu0 %v1062, 124
        %v1070 = vpop.permute.xlu0 %1069
        %1071 = vrot.lane.b32.xlu0 %v1063, 124
        %v1072 = vpop.permute.xlu0 %1071
        %v1076 = vadd.f32 %v1057, %v1068
        %v1077 = vadd.f32 %v1058, %v1070
        %v1078 = vadd.f32 %v1059, %v1072
        %s1079 = sld [smem:[#allocation8 + $0xc]]
        %s1080 = sld [smem:[#allocation8 + $0x3d]]
        %v1081 = vstv %s1079
        %v1082 = vmul.f32 %v1081, %v715
        %v1083 = vmul.f32 %v1081, %v716
        %v1084 = vmul.f32 %v1081, %v717
        %1088 = vrot.lane.b32.xlu0 %v1082, 123
        %v1089 = vpop.permute.xlu0 %1088
        %1090 = vrot.lane.b32.xlu0 %v1083, 123
        %v1091 = vpop.permute.xlu0 %1090
        %1092 = vrot.lane.b32.xlu0 %v1084, 123
        %v1093 = vpop.permute.xlu0 %1092
        %v1097 = vadd.f32 %v1076, %v1089
        %v1098 = vadd.f32 %v1077, %v1091
        %v1099 = vadd.f32 %v1078, %v1093
        %v1100 = vstv %s1080
        %v1101 = vmul.f32 %v1100, %v718
        %v1102 = vmul.f32 %v1100, %v719
        %v1103 = vmul.f32 %v1100, %v720
        %1107 = vrot.lane.b32.xlu0 %v1101, 123
        %v1108 = vpop.permute.xlu0 %1107
        %1109 = vrot.lane.b32.xlu0 %v1102, 123
        %v1110 = vpop.permute.xlu0 %1109
        %1111 = vrot.lane.b32.xlu0 %v1103, 123
        %v1112 = vpop.permute.xlu0 %1111
        %v1116 = vadd.f32 %v1097, %v1108
        %v1117 = vadd.f32 %v1098, %v1110
        %v1118 = vadd.f32 %v1099, %v1112
        %s1119 = sld [smem:[#allocation8 + $0xd]]
        %s1120 = sld [smem:[#allocation8 + $0x3e]]
        %v1121 = vstv %s1119
        %v1122 = vmul.f32 %v1121, %v715
        %v1123 = vmul.f32 %v1121, %v716
        %v1124 = vmul.f32 %v1121, %v717
        %1128 = vrot.lane.b32.xlu0 %v1122, 122
        %v1129 = vpop.permute.xlu0 %1128
        %1130 = vrot.lane.b32.xlu0 %v1123, 122
        %v1131 = vpop.permute.xlu0 %1130
        %1132 = vrot.lane.b32.xlu0 %v1124, 122
        %v1133 = vpop.permute.xlu0 %1132
        %v1137 = vadd.f32 %v1116, %v1129
        %v1138 = vadd.f32 %v1117, %v1131
        %v1139 = vadd.f32 %v1118, %v1133
        %v1140 = vstv %s1120
        %v1141 = vmul.f32 %v1140, %v718
        %v1142 = vmul.f32 %v1140, %v719
        %v1143 = vmul.f32 %v1140, %v720
        %1147 = vrot.lane.b32.xlu0 %v1141, 122
        %v1148 = vpop.permute.xlu0 %1147
        %1149 = vrot.lane.b32.xlu0 %v1142, 122
        %v1150 = vpop.permute.xlu0 %1149
        %1151 = vrot.lane.b32.xlu0 %v1143, 122
        %v1152 = vpop.permute.xlu0 %1151
        %v1156 = vadd.f32 %v1137, %v1148
        %v1157 = vadd.f32 %v1138, %v1150
        %v1158 = vadd.f32 %v1139, %v1152
        %vm1162 = vcmask 1046528
        %v1163 = vrot.slane %v1156, 1
        %v1164 = vrot.slane %v1157, 1
        %v1165 = vsel %vm1162, %v1163, %v1164
        %v1166 = vrot.slane %v1158, 1
        %v1167 = vsel %vm1162, %v1164, %v1166
        %v1170 = vadd.f32 %v901, %v1165
        %v1171 = vadd.f32 %v902, %v1167
        %s1172 = sld [smem:[#allocation8 + $0xe]]
        %s1173 = sld [smem:[#allocation8 + $0x3f]]
        %v1174 = vstv %s1172
        %v1175 = vmul.f32 %v1174, %v715
        %v1176 = vmul.f32 %v1174, %v716
        %v1177 = vmul.f32 %v1174, %v717
        %v1178 = vadd.f32 %v1175, 0.0
        %v1179 = vadd.f32 %v1176, 0.0
        %v1180 = vadd.f32 %v1177, 0.0
        %v1181 = vstv %s1173
        %v1182 = vmul.f32 %v1181, %v718
        %v1183 = vmul.f32 %v1181, %v719
        %v1184 = vmul.f32 %v1181, %v720
        %v1185 = vadd.f32 %v1178, %v1182
        %v1186 = vadd.f32 %v1179, %v1183
        %v1187 = vadd.f32 %v1180, %v1184
        %s1188 = sld [smem:[#allocation8 + $0xf]]
        %s1189 = sld [smem:[#allocation8 + $0x40]]
        %v1190 = vstv %s1188
        %v1191 = vmul.f32 %v1190, %v715
        %v1192 = vmul.f32 %v1190, %v716
        %v1193 = vmul.f32 %v1190, %v717
        %1197 = vrot.lane.b32.xlu0 %v1191, 127
        %v1198 = vpop.permute.xlu0 %1197
        %1199 = vrot.lane.b32.xlu0 %v1192, 127
        %v1200 = vpop.permute.xlu0 %1199
        %1201 = vrot.lane.b32.xlu0 %v1193, 127
        %v1202 = vpop.permute.xlu0 %1201
        %v1206 = vadd.f32 %v1185, %v1198
        %v1207 = vadd.f32 %v1186, %v1200
        %v1208 = vadd.f32 %v1187, %v1202
        %v1209 = vstv %s1189
        %v1210 = vmul.f32 %v1209, %v718
        %v1211 = vmul.f32 %v1209, %v719
        %v1212 = vmul.f32 %v1209, %v720
        %1216 = vrot.lane.b32.xlu0 %v1210, 127
        %v1217 = vpop.permute.xlu0 %1216
        %1218 = vrot.lane.b32.xlu0 %v1211, 127
        %v1219 = vpop.permute.xlu0 %1218
        %1220 = vrot.lane.b32.xlu0 %v1212, 127
        %v1221 = vpop.permute.xlu0 %1220
        %v1225 = vadd.f32 %v1206, %v1217
        %v1226 = vadd.f32 %v1207, %v1219
        %v1227 = vadd.f32 %v1208, %v1221
        %s1228 = sld [smem:[#allocation8 + $0x10]]
        %s1229 = sld [smem:[#allocation8 + $0x41]]
        %v1230 = vstv %s1228
        %v1231 = vmul.f32 %v1230, %v715
        %v1232 = vmul.f32 %v1230, %v716
        %v1233 = vmul.f32 %v1230, %v717
        %1237 = vrot.lane.b32.xlu0 %v1231, 126
        %v1238 = vpop.permute.xlu0 %1237
        %1239 = vrot.lane.b32.xlu0 %v1232, 126
        %v1240 = vpop.permute.xlu0 %1239
        %1241 = vrot.lane.b32.xlu0 %v1233, 126
        %v1242 = vpop.permute.xlu0 %1241
        %v1246 = vadd.f32 %v1225, %v1238
        %v1247 = vadd.f32 %v1226, %v1240
        %v1248 = vadd.f32 %v1227, %v1242
        %v1249 = vstv %s1229
        %v1250 = vmul.f32 %v1249, %v718
        %v1251 = vmul.f32 %v1249, %v719
        %v1252 = vmul.f32 %v1249, %v720
        %1256 = vrot.lane.b32.xlu0 %v1250, 126
        %v1257 = vpop.permute.xlu0 %1256
        %1258 = vrot.lane.b32.xlu0 %v1251, 126
        %v1259 = vpop.permute.xlu0 %1258
        %1260 = vrot.lane.b32.xlu0 %v1252, 126
        %v1261 = vpop.permute.xlu0 %1260
        %v1265 = vadd.f32 %v1246, %v1257
        %v1266 = vadd.f32 %v1247, %v1259
        %v1267 = vadd.f32 %v1248, %v1261
        %s1268 = sld [smem:[#allocation8 + $0x11]]
        %s1269 = sld [smem:[#allocation8 + $0x42]]
        %v1270 = vstv %s1268
        %v1271 = vmul.f32 %v1270, %v715
        %v1272 = vmul.f32 %v1270, %v716
        %v1273 = vmul.f32 %v1270, %v717
        %1277 = vrot.lane.b32.xlu0 %v1271, 125
        %v1278 = vpop.permute.xlu0 %1277
        %1279 = vrot.lane.b32.xlu0 %v1272, 125
        %v1280 = vpop.permute.xlu0 %1279
        %1281 = vrot.lane.b32.xlu0 %v1273, 125
        %v1282 = vpop.permute.xlu0 %1281
        %v1286 = vadd.f32 %v1265, %v1278
        %v1287 = vadd.f32 %v1266, %v1280
        %v1288 = vadd.f32 %v1267, %v1282
        %v1289 = vstv %s1269
        %v1290 = vmul.f32 %v1289, %v718
        %v1291 = vmul.f32 %v1289, %v719
        %v1292 = vmul.f32 %v1289, %v720
        %1296 = vrot.lane.b32.xlu0 %v1290, 125
        %v1297 = vpop.permute.xlu0 %1296
        %1298 = vrot.lane.b32.xlu0 %v1291, 125
        %v1299 = vpop.permute.xlu0 %1298
        %1300 = vrot.lane.b32.xlu0 %v1292, 125
        %v1301 = vpop.permute.xlu0 %1300
        %v1305 = vadd.f32 %v1286, %v1297
        %v1306 = vadd.f32 %v1287, %v1299
        %v1307 = vadd.f32 %v1288, %v1301
        %s1308 = sld [smem:[#allocation8 + $0x12]]
        %s1309 = sld [smem:[#allocation8 + $0x43]]
        %v1310 = vstv %s1308
        %v1311 = vmul.f32 %v1310, %v715
        %v1312 = vmul.f32 %v1310, %v716
        %v1313 = vmul.f32 %v1310, %v717
        %1317 = vrot.lane.b32.xlu0 %v1311, 124
        %v1318 = vpop.permute.xlu0 %1317
        %1319 = vrot.lane.b32.xlu0 %v1312, 124
        %v1320 = vpop.permute.xlu0 %1319
        %1321 = vrot.lane.b32.xlu0 %v1313, 124
        %v1322 = vpop.permute.xlu0 %1321
        %v1326 = vadd.f32 %v1305, %v1318
        %v1327 = vadd.f32 %v1306, %v1320
        %v1328 = vadd.f32 %v1307, %v1322
        %v1329 = vstv %s1309
        %v1330 = vmul.f32 %v1329, %v718
        %v1331 = vmul.f32 %v1329, %v719
        %v1332 = vmul.f32 %v1329, %v720
        %1336 = vrot.lane.b32.xlu0 %v1330, 124
        %v1337 = vpop.permute.xlu0 %1336
        %1338 = vrot.lane.b32.xlu0 %v1331, 124
        %v1339 = vpop.permute.xlu0 %1338
        %1340 = vrot.lane.b32.xlu0 %v1332, 124
        %v1341 = vpop.permute.xlu0 %1340
        %v1345 = vadd.f32 %v1326, %v1337
        %v1346 = vadd.f32 %v1327, %v1339
        %v1347 = vadd.f32 %v1328, %v1341
        %s1348 = sld [smem:[#allocation8 + $0x13]]
        %s1349 = sld [smem:[#allocation8 + $0x44]]
        %v1350 = vstv %s1348
        %v1351 = vmul.f32 %v1350, %v715
        %v1352 = vmul.f32 %v1350, %v716
        %v1353 = vmul.f32 %v1350, %v717
        %1357 = vrot.lane.b32.xlu0 %v1351, 123
        %v1358 = vpop.permute.xlu0 %1357
        %1359 = vrot.lane.b32.xlu0 %v1352, 123
        %v1360 = vpop.permute.xlu0 %1359
        %1361 = vrot.lane.b32.xlu0 %v1353, 123
        %v1362 = vpop.permute.xlu0 %1361
        %v1366 = vadd.f32 %v1345, %v1358
        %v1367 = vadd.f32 %v1346, %v1360
        %v1368 = vadd.f32 %v1347, %v1362
        %v1369 = vstv %s1349
        %v1370 = vmul.f32 %v1369, %v718
        %v1371 = vmul.f32 %v1369, %v719
        %v1372 = vmul.f32 %v1369, %v720
        %1376 = vrot.lane.b32.xlu0 %v1370, 123
        %v1377 = vpop.permute.xlu0 %1376
        %1378 = vrot.lane.b32.xlu0 %v1371, 123
        %v1379 = vpop.permute.xlu0 %1378
        %1380 = vrot.lane.b32.xlu0 %v1372, 123
        %v1381 = vpop.permute.xlu0 %1380
        %v1385 = vadd.f32 %v1366, %v1377
        %v1386 = vadd.f32 %v1367, %v1379
        %v1387 = vadd.f32 %v1368, %v1381
        %s1388 = sld [smem:[#allocation8 + $0x14]]
        %s1389 = sld [smem:[#allocation8 + $0x45]]
        %v1390 = vstv %s1388
        %v1391 = vmul.f32 %v1390, %v715
        %v1392 = vmul.f32 %v1390, %v716
        %v1393 = vmul.f32 %v1390, %v717
        %1397 = vrot.lane.b32.xlu0 %v1391, 122
        %v1398 = vpop.permute.xlu0 %1397
        %1399 = vrot.lane.b32.xlu0 %v1392, 122
        %v1400 = vpop.permute.xlu0 %1399
        %1401 = vrot.lane.b32.xlu0 %v1393, 122
        %v1402 = vpop.permute.xlu0 %1401
        %v1406 = vadd.f32 %v1385, %v1398
        %v1407 = vadd.f32 %v1386, %v1400
        %v1408 = vadd.f32 %v1387, %v1402
        %v1409 = vstv %s1389
        %v1410 = vmul.f32 %v1409, %v718
        %v1411 = vmul.f32 %v1409, %v719
        %v1412 = vmul.f32 %v1409, %v720
        %1416 = vrot.lane.b32.xlu0 %v1410, 122
        %v1417 = vpop.permute.xlu0 %1416
        %1418 = vrot.lane.b32.xlu0 %v1411, 122
        %v1419 = vpop.permute.xlu0 %1418
        %1420 = vrot.lane.b32.xlu0 %v1412, 122
        %v1421 = vpop.permute.xlu0 %1420
        %v1425 = vadd.f32 %v1406, %v1417
        %v1426 = vadd.f32 %v1407, %v1419
        %v1427 = vadd.f32 %v1408, %v1421
        %vm1431 = vcmask 1045504
        %v1432 = vrot.slane %v1425, 2
        %v1433 = vrot.slane %v1426, 2
        %v1434 = vsel %vm1431, %v1432, %v1433
        %v1435 = vrot.slane %v1427, 2
        %v1436 = vsel %vm1431, %v1433, %v1435
        %v1439 = vadd.f32 %v1170, %v1434
        %v1440 = vadd.f32 %v1171, %v1436
        %s1441 = sld [smem:[#allocation8 + $0x15]]
        %s1442 = sld [smem:[#allocation8 + $0x46]]
        %v1443 = vstv %s1441
        %v1444 = vmul.f32 %v1443, %v715
        %v1445 = vmul.f32 %v1443, %v716
        %v1446 = vmul.f32 %v1443, %v717
        %v1447 = vadd.f32 %v1444, 0.0
        %v1448 = vadd.f32 %v1445, 0.0
        %v1449 = vadd.f32 %v1446, 0.0
        %v1450 = vstv %s1442
        %v1451 = vmul.f32 %v1450, %v718
        %v1452 = vmul.f32 %v1450, %v719
        %v1453 = vmul.f32 %v1450, %v720
        %v1454 = vadd.f32 %v1447, %v1451
        %v1455 = vadd.f32 %v1448, %v1452
        %v1456 = vadd.f32 %v1449, %v1453
        %s1457 = sld [smem:[#allocation8 + $0x16]]
        %s1458 = sld [smem:[#allocation8 + $0x47]]
        %v1459 = vstv %s1457
        %v1460 = vmul.f32 %v1459, %v715
        %v1461 = vmul.f32 %v1459, %v716
        %v1462 = vmul.f32 %v1459, %v717
        %1466 = vrot.lane.b32.xlu0 %v1460, 127
        %v1467 = vpop.permute.xlu0 %1466
        %1468 = vrot.lane.b32.xlu0 %v1461, 127
        %v1469 = vpop.permute.xlu0 %1468
        %1470 = vrot.lane.b32.xlu0 %v1462, 127
        %v1471 = vpop.permute.xlu0 %1470
        %v1475 = vadd.f32 %v1454, %v1467
        %v1476 = vadd.f32 %v1455, %v1469
        %v1477 = vadd.f32 %v1456, %v1471
        %v1478 = vstv %s1458
        %v1479 = vmul.f32 %v1478, %v718
        %v1480 = vmul.f32 %v1478, %v719
        %v1481 = vmul.f32 %v1478, %v720
        %1485 = vrot.lane.b32.xlu0 %v1479, 127
        %v1486 = vpop.permute.xlu0 %1485
        %1487 = vrot.lane.b32.xlu0 %v1480, 127
        %v1488 = vpop.permute.xlu0 %1487
        %1489 = vrot.lane.b32.xlu0 %v1481, 127
        %v1490 = vpop.permute.xlu0 %1489
        %v1494 = vadd.f32 %v1475, %v1486
        %v1495 = vadd.f32 %v1476, %v1488
        %v1496 = vadd.f32 %v1477, %v1490
        %s1497 = sld [smem:[#allocation8 + $0x17]]
        %s1498 = sld [smem:[#allocation8 + $0x48]]
        %v1499 = vstv %s1497
        %v1500 = vmul.f32 %v1499, %v715
        %v1501 = vmul.f32 %v1499, %v716
        %v1502 = vmul.f32 %v1499, %v717
        %1506 = vrot.lane.b32.xlu0 %v1500, 126
        %v1507 = vpop.permute.xlu0 %1506
        %1508 = vrot.lane.b32.xlu0 %v1501, 126
        %v1509 = vpop.permute.xlu0 %1508
        %1510 = vrot.lane.b32.xlu0 %v1502, 126
        %v1511 = vpop.permute.xlu0 %1510
        %v1515 = vadd.f32 %v1494, %v1507
        %v1516 = vadd.f32 %v1495, %v1509
        %v1517 = vadd.f32 %v1496, %v1511
        %v1518 = vstv %s1498
        %v1519 = vmul.f32 %v1518, %v718
        %v1520 = vmul.f32 %v1518, %v719
        %v1521 = vmul.f32 %v1518, %v720
        %1525 = vrot.lane.b32.xlu0 %v1519, 126
        %v1526 = vpop.permute.xlu0 %1525
        %1527 = vrot.lane.b32.xlu0 %v1520, 126
        %v1528 = vpop.permute.xlu0 %1527
        %1529 = vrot.lane.b32.xlu0 %v1521, 126
        %v1530 = vpop.permute.xlu0 %1529
        %v1534 = vadd.f32 %v1515, %v1526
        %v1535 = vadd.f32 %v1516, %v1528
        %v1536 = vadd.f32 %v1517, %v1530
        %s1537 = sld [smem:[#allocation8 + $0x18]]
        %s1538 = sld [smem:[#allocation8 + $0x49]]
        %v1539 = vstv %s1537
        %v1540 = vmul.f32 %v1539, %v715
        %v1541 = vmul.f32 %v1539, %v716
        %v1542 = vmul.f32 %v1539, %v717
        %1546 = vrot.lane.b32.xlu0 %v1540, 125
        %v1547 = vpop.permute.xlu0 %1546
        %1548 = vrot.lane.b32.xlu0 %v1541, 125
        %v1549 = vpop.permute.xlu0 %1548
        %1550 = vrot.lane.b32.xlu0 %v1542, 125
        %v1551 = vpop.permute.xlu0 %1550
        %v1555 = vadd.f32 %v1534, %v1547
        %v1556 = vadd.f32 %v1535, %v1549
        %v1557 = vadd.f32 %v1536, %v1551
        %v1558 = vstv %s1538
        %v1559 = vmul.f32 %v1558, %v718
        %v1560 = vmul.f32 %v1558, %v719
        %v1561 = vmul.f32 %v1558, %v720
        %1565 = vrot.lane.b32.xlu0 %v1559, 125
        %v1566 = vpop.permute.xlu0 %1565
        %1567 = vrot.lane.b32.xlu0 %v1560, 125
        %v1568 = vpop.permute.xlu0 %1567
        %1569 = vrot.lane.b32.xlu0 %v1561, 125
        %v1570 = vpop.permute.xlu0 %1569
        %v1574 = vadd.f32 %v1555, %v1566
        %v1575 = vadd.f32 %v1556, %v1568
        %v1576 = vadd.f32 %v1557, %v1570
        %s1577 = sld [smem:[#allocation8 + $0x19]]
        %s1578 = sld [smem:[#allocation8 + $0x4a]]
        %v1579 = vstv %s1577
        %v1580 = vmul.f32 %v1579, %v715
        %v1581 = vmul.f32 %v1579, %v716
        %v1582 = vmul.f32 %v1579, %v717
        %1586 = vrot.lane.b32.xlu0 %v1580, 124
        %v1587 = vpop.permute.xlu0 %1586
        %1588 = vrot.lane.b32.xlu0 %v1581, 124
        %v1589 = vpop.permute.xlu0 %1588
        %1590 = vrot.lane.b32.xlu0 %v1582, 124
        %v1591 = vpop.permute.xlu0 %1590
        %v1595 = vadd.f32 %v1574, %v1587
        %v1596 = vadd.f32 %v1575, %v1589
        %v1597 = vadd.f32 %v1576, %v1591
        %v1598 = vstv %s1578
        %v1599 = vmul.f32 %v1598, %v718
        %v1600 = vmul.f32 %v1598, %v719
        %v1601 = vmul.f32 %v1598, %v720
        %1605 = vrot.lane.b32.xlu0 %v1599, 124
        %v1606 = vpop.permute.xlu0 %1605
        %1607 = vrot.lane.b32.xlu0 %v1600, 124
        %v1608 = vpop.permute.xlu0 %1607
        %1609 = vrot.lane.b32.xlu0 %v1601, 124
        %v1610 = vpop.permute.xlu0 %1609
        %v1614 = vadd.f32 %v1595, %v1606
        %v1615 = vadd.f32 %v1596, %v1608
        %v1616 = vadd.f32 %v1597, %v1610
        %s1617 = sld [smem:[#allocation8 + $0x1a]]
        %s1618 = sld [smem:[#allocation8 + $0x4b]]
        %v1619 = vstv %s1617
        %v1620 = vmul.f32 %v1619, %v715
        %v1621 = vmul.f32 %v1619, %v716
        %v1622 = vmul.f32 %v1619, %v717
        %1626 = vrot.lane.b32.xlu0 %v1620, 123
        %v1627 = vpop.permute.xlu0 %1626
        %1628 = vrot.lane.b32.xlu0 %v1621, 123
        %v1629 = vpop.permute.xlu0 %1628
        %1630 = vrot.lane.b32.xlu0 %v1622, 123
        %v1631 = vpop.permute.xlu0 %1630
        %v1635 = vadd.f32 %v1614, %v1627
        %v1636 = vadd.f32 %v1615, %v1629
        %v1637 = vadd.f32 %v1616, %v1631
        %v1638 = vstv %s1618
        %v1639 = vmul.f32 %v1638, %v718
        %v1640 = vmul.f32 %v1638, %v719
        %v1641 = vmul.f32 %v1638, %v720
        %1645 = vrot.lane.b32.xlu0 %v1639, 123
        %v1646 = vpop.permute.xlu0 %1645
        %1647 = vrot.lane.b32.xlu0 %v1640, 123
        %v1648 = vpop.permute.xlu0 %1647
        %1649 = vrot.lane.b32.xlu0 %v1641, 123
        %v1650 = vpop.permute.xlu0 %1649
        %v1654 = vadd.f32 %v1635, %v1646
        %v1655 = vadd.f32 %v1636, %v1648
        %v1656 = vadd.f32 %v1637, %v1650
        %s1657 = sld [smem:[#allocation8 + $0x1b]]
        %s1658 = sld [smem:[#allocation8 + $0x4c]]
        %v1659 = vstv %s1657
        %v1660 = vmul.f32 %v1659, %v715
        %v1661 = vmul.f32 %v1659, %v716
        %v1662 = vmul.f32 %v1659, %v717
        %1666 = vrot.lane.b32.xlu0 %v1660, 122
        %v1667 = vpop.permute.xlu0 %1666
        %1668 = vrot.lane.b32.xlu0 %v1661, 122
        %v1669 = vpop.permute.xlu0 %1668
        %1670 = vrot.lane.b32.xlu0 %v1662, 122
        %v1671 = vpop.permute.xlu0 %1670
        %v1675 = vadd.f32 %v1654, %v1667
        %v1676 = vadd.f32 %v1655, %v1669
        %v1677 = vadd.f32 %v1656, %v1671
        %v1678 = vstv %s1658
        %v1679 = vmul.f32 %v1678, %v718
        %v1680 = vmul.f32 %v1678, %v719
        %v1681 = vmul.f32 %v1678, %v720
        %1685 = vrot.lane.b32.xlu0 %v1679, 122
        %v1686 = vpop.permute.xlu0 %1685
        %1687 = vrot.lane.b32.xlu0 %v1680, 122
        %v1688 = vpop.permute.xlu0 %1687
        %1689 = vrot.lane.b32.xlu0 %v1681, 122
        %v1690 = vpop.permute.xlu0 %1689
        %v1694 = vadd.f32 %v1675, %v1686
        %v1695 = vadd.f32 %v1676, %v1688
        %v1696 = vadd.f32 %v1677, %v1690
        %vm1700 = vcmask 1044480
        %v1701 = vrot.slane %v1694, 3
        %v1702 = vrot.slane %v1695, 3
        %v1703 = vsel %vm1700, %v1701, %v1702
        %v1704 = vrot.slane %v1696, 3
        %v1705 = vsel %vm1700, %v1702, %v1704
        %v1708 = vadd.f32 %v1439, %v1703
        %v1709 = vadd.f32 %v1440, %v1705
        %s1710 = sld [smem:[#allocation8 + $0x1c]]
        %s1711 = sld [smem:[#allocation8 + $0x4d]]
        %v1712 = vstv %s1710
        %v1713 = vmul.f32 %v1712, %v715
        %v1714 = vmul.f32 %v1712, %v716
        %v1715 = vmul.f32 %v1712, %v717
        %v1716 = vadd.f32 %v1713, 0.0
        %v1717 = vadd.f32 %v1714, 0.0
        %v1718 = vadd.f32 %v1715, 0.0
        %v1719 = vstv %s1711
        %v1720 = vmul.f32 %v1719, %v718
        %v1721 = vmul.f32 %v1719, %v719
        %v1722 = vmul.f32 %v1719, %v720
        %v1723 = vadd.f32 %v1716, %v1720
        %v1724 = vadd.f32 %v1717, %v1721
        %v1725 = vadd.f32 %v1718, %v1722
        %s1726 = sld [smem:[#allocation8 + $0x1d]]
        %s1727 = sld [smem:[#allocation8 + $0x4e]]
        %v1728 = vstv %s1726
        %v1729 = vmul.f32 %v1728, %v715
        %v1730 = vmul.f32 %v1728, %v716
        %v1731 = vmul.f32 %v1728, %v717
        %1735 = vrot.lane.b32.xlu0 %v1729, 127
        %v1736 = vpop.permute.xlu0 %1735
        %1737 = vrot.lane.b32.xlu0 %v1730, 127
        %v1738 = vpop.permute.xlu0 %1737
        %1739 = vrot.lane.b32.xlu0 %v1731, 127
        %v1740 = vpop.permute.xlu0 %1739
        %v1744 = vadd.f32 %v1723, %v1736
        %v1745 = vadd.f32 %v1724, %v1738
        %v1746 = vadd.f32 %v1725, %v1740
        %v1747 = vstv %s1727
        %v1748 = vmul.f32 %v1747, %v718
        %v1749 = vmul.f32 %v1747, %v719
        %v1750 = vmul.f32 %v1747, %v720
        %1754 = vrot.lane.b32.xlu0 %v1748, 127
        %v1755 = vpop.permute.xlu0 %1754
        %1756 = vrot.lane.b32.xlu0 %v1749, 127
        %v1757 = vpop.permute.xlu0 %1756
        %1758 = vrot.lane.b32.xlu0 %v1750, 127
        %v1759 = vpop.permute.xlu0 %1758
        %v1763 = vadd.f32 %v1744, %v1755
        %v1764 = vadd.f32 %v1745, %v1757
        %v1765 = vadd.f32 %v1746, %v1759
        %s1766 = sld [smem:[#allocation8 + $0x1e]]
        %s1767 = sld [smem:[#allocation8 + $0x4f]]
        %v1768 = vstv %s1766
        %v1769 = vmul.f32 %v1768, %v715
        %v1770 = vmul.f32 %v1768, %v716
        %v1771 = vmul.f32 %v1768, %v717
        %1775 = vrot.lane.b32.xlu0 %v1769, 126
        %v1776 = vpop.permute.xlu0 %1775
        %1777 = vrot.lane.b32.xlu0 %v1770, 126
        %v1778 = vpop.permute.xlu0 %1777
        %1779 = vrot.lane.b32.xlu0 %v1771, 126
        %v1780 = vpop.permute.xlu0 %1779
        %v1784 = vadd.f32 %v1763, %v1776
        %v1785 = vadd.f32 %v1764, %v1778
        %v1786 = vadd.f32 %v1765, %v1780
        %v1787 = vstv %s1767
        %v1788 = vmul.f32 %v1787, %v718
        %v1789 = vmul.f32 %v1787, %v719
        %v1790 = vmul.f32 %v1787, %v720
        %1794 = vrot.lane.b32.xlu0 %v1788, 126
        %v1795 = vpop.permute.xlu0 %1794
        %1796 = vrot.lane.b32.xlu0 %v1789, 126
        %v1797 = vpop.permute.xlu0 %1796
        %1798 = vrot.lane.b32.xlu0 %v1790, 126
        %v1799 = vpop.permute.xlu0 %1798
        %v1803 = vadd.f32 %v1784, %v1795
        %v1804 = vadd.f32 %v1785, %v1797
        %v1805 = vadd.f32 %v1786, %v1799
        %s1806 = sld [smem:[#allocation8 + $0x1f]]
        %s1807 = sld [smem:[#allocation8 + $0x50]]
        %v1808 = vstv %s1806
        %v1809 = vmul.f32 %v1808, %v715
        %v1810 = vmul.f32 %v1808, %v716
        %v1811 = vmul.f32 %v1808, %v717
        %1815 = vrot.lane.b32.xlu0 %v1809, 125
        %v1816 = vpop.permute.xlu0 %1815
        %1817 = vrot.lane.b32.xlu0 %v1810, 125
        %v1818 = vpop.permute.xlu0 %1817
        %1819 = vrot.lane.b32.xlu0 %v1811, 125
        %v1820 = vpop.permute.xlu0 %1819
        %v1824 = vadd.f32 %v1803, %v1816
        %v1825 = vadd.f32 %v1804, %v1818
        %v1826 = vadd.f32 %v1805, %v1820
        %v1827 = vstv %s1807
        %v1828 = vmul.f32 %v1827, %v718
        %v1829 = vmul.f32 %v1827, %v719
        %v1830 = vmul.f32 %v1827, %v720
        %1834 = vrot.lane.b32.xlu0 %v1828, 125
        %v1835 = vpop.permute.xlu0 %1834
        %1836 = vrot.lane.b32.xlu0 %v1829, 125
        %v1837 = vpop.permute.xlu0 %1836
        %1838 = vrot.lane.b32.xlu0 %v1830, 125
        %v1839 = vpop.permute.xlu0 %1838
        %v1843 = vadd.f32 %v1824, %v1835
        %v1844 = vadd.f32 %v1825, %v1837
        %v1845 = vadd.f32 %v1826, %v1839
        %s1846 = sld [smem:[#allocation8 + $0x20]]
        %s1847 = sld [smem:[#allocation8 + $0x51]]
        %v1848 = vstv %s1846
        %v1849 = vmul.f32 %v1848, %v715
        %v1850 = vmul.f32 %v1848, %v716
        %v1851 = vmul.f32 %v1848, %v717
        %1855 = vrot.lane.b32.xlu0 %v1849, 124
        %v1856 = vpop.permute.xlu0 %1855
        %1857 = vrot.lane.b32.xlu0 %v1850, 124
        %v1858 = vpop.permute.xlu0 %1857
        %1859 = vrot.lane.b32.xlu0 %v1851, 124
        %v1860 = vpop.permute.xlu0 %1859
        %v1864 = vadd.f32 %v1843, %v1856
        %v1865 = vadd.f32 %v1844, %v1858
        %v1866 = vadd.f32 %v1845, %v1860
        %v1867 = vstv %s1847
        %v1868 = vmul.f32 %v1867, %v718
        %v1869 = vmul.f32 %v1867, %v719
        %v1870 = vmul.f32 %v1867, %v720
        %1874 = vrot.lane.b32.xlu0 %v1868, 124
        %v1875 = vpop.permute.xlu0 %1874
        %1876 = vrot.lane.b32.xlu0 %v1869, 124
        %v1877 = vpop.permute.xlu0 %1876
        %1878 = vrot.lane.b32.xlu0 %v1870, 124
        %v1879 = vpop.permute.xlu0 %1878
        %v1883 = vadd.f32 %v1864, %v1875
        %v1884 = vadd.f32 %v1865, %v1877
        %v1885 = vadd.f32 %v1866, %v1879
        %s1886 = sld [smem:[#allocation8 + $0x21]]
        %s1887 = sld [smem:[#allocation8 + $0x52]]
        %v1888 = vstv %s1886
        %v1889 = vmul.f32 %v1888, %v715
        %v1890 = vmul.f32 %v1888, %v716
        %v1891 = vmul.f32 %v1888, %v717
        %1895 = vrot.lane.b32.xlu0 %v1889, 123
        %v1896 = vpop.permute.xlu0 %1895
        %1897 = vrot.lane.b32.xlu0 %v1890, 123
        %v1898 = vpop.permute.xlu0 %1897
        %1899 = vrot.lane.b32.xlu0 %v1891, 123
        %v1900 = vpop.permute.xlu0 %1899
        %v1904 = vadd.f32 %v1883, %v1896
        %v1905 = vadd.f32 %v1884, %v1898
        %v1906 = vadd.f32 %v1885, %v1900
        %v1907 = vstv %s1887
        %v1908 = vmul.f32 %v1907, %v718
        %v1909 = vmul.f32 %v1907, %v719
        %v1910 = vmul.f32 %v1907, %v720
        %1914 = vrot.lane.b32.xlu0 %v1908, 123
        %v1915 = vpop.permute.xlu0 %1914
        %1916 = vrot.lane.b32.xlu0 %v1909, 123
        %v1917 = vpop.permute.xlu0 %1916
        %1918 = vrot.lane.b32.xlu0 %v1910, 123
        %v1919 = vpop.permute.xlu0 %1918
        %v1923 = vadd.f32 %v1904, %v1915
        %v1924 = vadd.f32 %v1905, %v1917
        %v1925 = vadd.f32 %v1906, %v1919
        %s1926 = sld [smem:[#allocation8 + $0x22]]
        %s1927 = sld [smem:[#allocation8 + $0x53]]
        %v1928 = vstv %s1926
        %v1929 = vmul.f32 %v1928, %v715
        %v1930 = vmul.f32 %v1928, %v716
        %v1931 = vmul.f32 %v1928, %v717
        %1935 = vrot.lane.b32.xlu0 %v1929, 122
        %v1936 = vpop.permute.xlu0 %1935
        %1937 = vrot.lane.b32.xlu0 %v1930, 122
        %v1938 = vpop.permute.xlu0 %1937
        %1939 = vrot.lane.b32.xlu0 %v1931, 122
        %v1940 = vpop.permute.xlu0 %1939
        %v1944 = vadd.f32 %v1923, %v1936
        %v1945 = vadd.f32 %v1924, %v1938
        %v1946 = vadd.f32 %v1925, %v1940
        %v1947 = vstv %s1927
        %v1948 = vmul.f32 %v1947, %v718
        %v1949 = vmul.f32 %v1947, %v719
        %v1950 = vmul.f32 %v1947, %v720
        %1954 = vrot.lane.b32.xlu0 %v1948, 122
        %v1955 = vpop.permute.xlu0 %1954
        %1956 = vrot.lane.b32.xlu0 %v1949, 122
        %v1957 = vpop.permute.xlu0 %1956
        %1958 = vrot.lane.b32.xlu0 %v1950, 122
        %v1959 = vpop.permute.xlu0 %1958
        %v1963 = vadd.f32 %v1944, %v1955
        %v1964 = vadd.f32 %v1945, %v1957
        %v1965 = vadd.f32 %v1946, %v1959
        %vm1969 = vcmask 1043456
        %v1970 = vrot.slane %v1963, 4
        %v1971 = vrot.slane %v1964, 4
        %v1972 = vsel %vm1969, %v1970, %v1971
        %v1973 = vrot.slane %v1965, 4
        %v1974 = vsel %vm1969, %v1971, %v1973
        %v1977 = vadd.f32 %v1708, %v1972
        %v1978 = vadd.f32 %v1709, %v1974
        %s1979 = sld [smem:[#allocation8 + $0x23]]
        %s1980 = sld [smem:[#allocation8 + $0x54]]
        %v1981 = vstv %s1979
        %v1982 = vmul.f32 %v1981, %v715
        %v1983 = vmul.f32 %v1981, %v716
        %v1984 = vmul.f32 %v1981, %v717
        %v1985 = vadd.f32 %v1982, 0.0
        %v1986 = vadd.f32 %v1983, 0.0
        %v1987 = vadd.f32 %v1984, 0.0
        %v1988 = vstv %s1980
        %v1989 = vmul.f32 %v1988, %v718
        %v1990 = vmul.f32 %v1988, %v719
        %v1991 = vmul.f32 %v1988, %v720
        %v1992 = vadd.f32 %v1985, %v1989
        %v1993 = vadd.f32 %v1986, %v1990
        %v1994 = vadd.f32 %v1987, %v1991
        %s1995 = sld [smem:[#allocation8 + $0x24]]
        %s1996 = sld [smem:[#allocation8 + $0x55]]
        %v1997 = vstv %s1995
        %v1998 = vmul.f32 %v1997, %v715
        %v1999 = vmul.f32 %v1997, %v716
        %v2000 = vmul.f32 %v1997, %v717
        %2004 = vrot.lane.b32.xlu0 %v1998, 127
        %v2005 = vpop.permute.xlu0 %2004
        %2006 = vrot.lane.b32.xlu0 %v1999, 127
        %v2007 = vpop.permute.xlu0 %2006
        %2008 = vrot.lane.b32.xlu0 %v2000, 127
        %v2009 = vpop.permute.xlu0 %2008
        %v2013 = vadd.f32 %v1992, %v2005
        %v2014 = vadd.f32 %v1993, %v2007
        %v2015 = vadd.f32 %v1994, %v2009
        %v2016 = vstv %s1996
        %v2017 = vmul.f32 %v2016, %v718
        %v2018 = vmul.f32 %v2016, %v719
        %v2019 = vmul.f32 %v2016, %v720
        %2023 = vrot.lane.b32.xlu0 %v2017, 127
        %v2024 = vpop.permute.xlu0 %2023
        %2025 = vrot.lane.b32.xlu0 %v2018, 127
        %v2026 = vpop.permute.xlu0 %2025
        %2027 = vrot.lane.b32.xlu0 %v2019, 127
        %v2028 = vpop.permute.xlu0 %2027
        %v2032 = vadd.f32 %v2013, %v2024
        %v2033 = vadd.f32 %v2014, %v2026
        %v2034 = vadd.f32 %v2015, %v2028
        %s2035 = sld [smem:[#allocation8 + $0x25]]
        %s2036 = sld [smem:[#allocation8 + $0x56]]
        %v2037 = vstv %s2035
        %v2038 = vmul.f32 %v2037, %v715
        %v2039 = vmul.f32 %v2037, %v716
        %v2040 = vmul.f32 %v2037, %v717
        %2044 = vrot.lane.b32.xlu0 %v2038, 126
        %v2045 = vpop.permute.xlu0 %2044
        %2046 = vrot.lane.b32.xlu0 %v2039, 126
        %v2047 = vpop.permute.xlu0 %2046
        %2048 = vrot.lane.b32.xlu0 %v2040, 126
        %v2049 = vpop.permute.xlu0 %2048
        %v2053 = vadd.f32 %v2032, %v2045
        %v2054 = vadd.f32 %v2033, %v2047
        %v2055 = vadd.f32 %v2034, %v2049
        %v2056 = vstv %s2036
        %v2057 = vmul.f32 %v2056, %v718
        %v2058 = vmul.f32 %v2056, %v719
        %v2059 = vmul.f32 %v2056, %v720
        %2063 = vrot.lane.b32.xlu0 %v2057, 126
        %v2064 = vpop.permute.xlu0 %2063
        %2065 = vrot.lane.b32.xlu0 %v2058, 126
        %v2066 = vpop.permute.xlu0 %2065
        %2067 = vrot.lane.b32.xlu0 %v2059, 126
        %v2068 = vpop.permute.xlu0 %2067
        %v2072 = vadd.f32 %v2053, %v2064
        %v2073 = vadd.f32 %v2054, %v2066
        %v2074 = vadd.f32 %v2055, %v2068
        %s2075 = sld [smem:[#allocation8 + $0x26]]
        %s2076 = sld [smem:[#allocation8 + $0x57]]
        %v2077 = vstv %s2075
        %v2078 = vmul.f32 %v2077, %v715
        %v2079 = vmul.f32 %v2077, %v716
        %v2080 = vmul.f32 %v2077, %v717
        %2084 = vrot.lane.b32.xlu0 %v2078, 125
        %v2085 = vpop.permute.xlu0 %2084
        %2086 = vrot.lane.b32.xlu0 %v2079, 125
        %v2087 = vpop.permute.xlu0 %2086
        %2088 = vrot.lane.b32.xlu0 %v2080, 125
        %v2089 = vpop.permute.xlu0 %2088
        %v2093 = vadd.f32 %v2072, %v2085
        %v2094 = vadd.f32 %v2073, %v2087
        %v2095 = vadd.f32 %v2074, %v2089
        %v2096 = vstv %s2076
        %v2097 = vmul.f32 %v2096, %v718
        %v2098 = vmul.f32 %v2096, %v719
        %v2099 = vmul.f32 %v2096, %v720
        %2103 = vrot.lane.b32.xlu0 %v2097, 125
        %v2104 = vpop.permute.xlu0 %2103
        %2105 = vrot.lane.b32.xlu0 %v2098, 125
        %v2106 = vpop.permute.xlu0 %2105
        %2107 = vrot.lane.b32.xlu0 %v2099, 125
        %v2108 = vpop.permute.xlu0 %2107
        %v2112 = vadd.f32 %v2093, %v2104
        %v2113 = vadd.f32 %v2094, %v2106
        %v2114 = vadd.f32 %v2095, %v2108
        %s2115 = sld [smem:[#allocation8 + $0x27]]
        %s2116 = sld [smem:[#allocation8 + $0x58]]
        %v2117 = vstv %s2115
        %v2118 = vmul.f32 %v2117, %v715
        %v2119 = vmul.f32 %v2117, %v716
        %v2120 = vmul.f32 %v2117, %v717
        %2124 = vrot.lane.b32.xlu0 %v2118, 124
        %v2125 = vpop.permute.xlu0 %2124
        %2126 = vrot.lane.b32.xlu0 %v2119, 124
        %v2127 = vpop.permute.xlu0 %2126
        %2128 = vrot.lane.b32.xlu0 %v2120, 124
        %v2129 = vpop.permute.xlu0 %2128
        %v2133 = vadd.f32 %v2112, %v2125
        %v2134 = vadd.f32 %v2113, %v2127
        %v2135 = vadd.f32 %v2114, %v2129
        %v2136 = vstv %s2116
        %v2137 = vmul.f32 %v2136, %v718
        %v2138 = vmul.f32 %v2136, %v719
        %v2139 = vmul.f32 %v2136, %v720
        %2143 = vrot.lane.b32.xlu0 %v2137, 124
        %v2144 = vpop.permute.xlu0 %2143
        %2145 = vrot.lane.b32.xlu0 %v2138, 124
        %v2146 = vpop.permute.xlu0 %2145
        %2147 = vrot.lane.b32.xlu0 %v2139, 124
        %v2148 = vpop.permute.xlu0 %2147
        %v2152 = vadd.f32 %v2133, %v2144
        %v2153 = vadd.f32 %v2134, %v2146
        %v2154 = vadd.f32 %v2135, %v2148
        %s2155 = sld [smem:[#allocation8 + $0x28]]
        %s2156 = sld [smem:[#allocation8 + $0x59]]
        %v2157 = vstv %s2155
        %v2158 = vmul.f32 %v2157, %v715
        %v2159 = vmul.f32 %v2157, %v716
        %v2160 = vmul.f32 %v2157, %v717
        %2164 = vrot.lane.b32.xlu0 %v2158, 123
        %v2165 = vpop.permute.xlu0 %2164
        %2166 = vrot.lane.b32.xlu0 %v2159, 123
        %v2167 = vpop.permute.xlu0 %2166
        %2168 = vrot.lane.b32.xlu0 %v2160, 123
        %v2169 = vpop.permute.xlu0 %2168
        %v2173 = vadd.f32 %v2152, %v2165
        %v2174 = vadd.f32 %v2153, %v2167
        %v2175 = vadd.f32 %v2154, %v2169
        %v2176 = vstv %s2156
        %v2177 = vmul.f32 %v2176, %v718
        %v2178 = vmul.f32 %v2176, %v719
        %v2179 = vmul.f32 %v2176, %v720
        %2183 = vrot.lane.b32.xlu0 %v2177, 123
        %v2184 = vpop.permute.xlu0 %2183
        %2185 = vrot.lane.b32.xlu0 %v2178, 123
        %v2186 = vpop.permute.xlu0 %2185
        %2187 = vrot.lane.b32.xlu0 %v2179, 123
        %v2188 = vpop.permute.xlu0 %2187
        %v2192 = vadd.f32 %v2173, %v2184
        %v2193 = vadd.f32 %v2174, %v2186
        %v2194 = vadd.f32 %v2175, %v2188
        %s2195 = sld [smem:[#allocation8 + $0x29]]
        %s2196 = sld [smem:[#allocation8 + $0x5a]]
        %v2197 = vstv %s2195
        %v2198 = vmul.f32 %v2197, %v715
        %v2199 = vmul.f32 %v2197, %v716
        %v2200 = vmul.f32 %v2197, %v717
        %2204 = vrot.lane.b32.xlu0 %v2198, 122
        %v2205 = vpop.permute.xlu0 %2204
        %2206 = vrot.lane.b32.xlu0 %v2199, 122
        %v2207 = vpop.permute.xlu0 %2206
        %2208 = vrot.lane.b32.xlu0 %v2200, 122
        %v2209 = vpop.permute.xlu0 %2208
        %v2213 = vadd.f32 %v2192, %v2205
        %v2214 = vadd.f32 %v2193, %v2207
        %v2215 = vadd.f32 %v2194, %v2209
        %v2216 = vstv %s2196
        %v2217 = vmul.f32 %v2216, %v718
        %v2218 = vmul.f32 %v2216, %v719
        %v2219 = vmul.f32 %v2216, %v720
        %2223 = vrot.lane.b32.xlu0 %v2217, 122
        %v2224 = vpop.permute.xlu0 %2223
        %2225 = vrot.lane.b32.xlu0 %v2218, 122
        %v2226 = vpop.permute.xlu0 %2225
        %2227 = vrot.lane.b32.xlu0 %v2219, 122
        %v2228 = vpop.permute.xlu0 %2227
        %v2232 = vadd.f32 %v2213, %v2224
        %v2233 = vadd.f32 %v2214, %v2226
        %v2234 = vadd.f32 %v2215, %v2228
        %vm2238 = vcmask 1042432
        %v2239 = vrot.slane %v2232, 5
        %v2240 = vrot.slane %v2233, 5
        %v2241 = vsel %vm2238, %v2239, %v2240
        %v2242 = vrot.slane %v2234, 5
        %v2243 = vsel %vm2238, %v2240, %v2242
        %v2246 = vadd.f32 %v1977, %v2241
        %v2247 = vadd.f32 %v1978, %v2243
        %s2248 = sld [smem:[#allocation8 + $0x2a]]
        %s2249 = sld [smem:[#allocation8 + $0x5b]]
        %v2250 = vstv %s2248
        %v2251 = vmul.f32 %v2250, %v715
        %v2252 = vmul.f32 %v2250, %v716
        %v2253 = vmul.f32 %v2250, %v717
        %v2254 = vadd.f32 %v2251, 0.0
        %v2255 = vadd.f32 %v2252, 0.0
        %v2256 = vadd.f32 %v2253, 0.0
        %v2257 = vstv %s2249
        %v2258 = vmul.f32 %v2257, %v718
        %v2259 = vmul.f32 %v2257, %v719
        %v2260 = vmul.f32 %v2257, %v720
        %v2261 = vadd.f32 %v2254, %v2258
        %v2262 = vadd.f32 %v2255, %v2259
        %v2263 = vadd.f32 %v2256, %v2260
        %s2264 = sld [smem:[#allocation8 + $0x2b]]
        %s2265 = sld [smem:[#allocation8 + $0x5c]]
        %v2266 = vstv %s2264
        %v2267 = vmul.f32 %v2266, %v715
        %v2268 = vmul.f32 %v2266, %v716
        %v2269 = vmul.f32 %v2266, %v717
        %2273 = vrot.lane.b32.xlu0 %v2267, 127
        %v2274 = vpop.permute.xlu0 %2273
        %2275 = vrot.lane.b32.xlu0 %v2268, 127
        %v2276 = vpop.permute.xlu0 %2275
        %2277 = vrot.lane.b32.xlu0 %v2269, 127
        %v2278 = vpop.permute.xlu0 %2277
        %v2282 = vadd.f32 %v2261, %v2274
        %v2283 = vadd.f32 %v2262, %v2276
        %v2284 = vadd.f32 %v2263, %v2278
        %v2285 = vstv %s2265
        %v2286 = vmul.f32 %v2285, %v718
        %v2287 = vmul.f32 %v2285, %v719
        %v2288 = vmul.f32 %v2285, %v720
        %2292 = vrot.lane.b32.xlu0 %v2286, 127
        %v2293 = vpop.permute.xlu0 %2292
        %2294 = vrot.lane.b32.xlu0 %v2287, 127
        %v2295 = vpop.permute.xlu0 %2294
        %2296 = vrot.lane.b32.xlu0 %v2288, 127
        %v2297 = vpop.permute.xlu0 %2296
        %v2301 = vadd.f32 %v2282, %v2293
        %v2302 = vadd.f32 %v2283, %v2295
        %v2303 = vadd.f32 %v2284, %v2297
        %s2304 = sld [smem:[#allocation8 + $0x2c]]
        %s2305 = sld [smem:[#allocation8 + $0x5d]]
        %v2306 = vstv %s2304
        %v2307 = vmul.f32 %v2306, %v715
        %v2308 = vmul.f32 %v2306, %v716
        %v2309 = vmul.f32 %v2306, %v717
        %2313 = vrot.lane.b32.xlu0 %v2307, 126
        %v2314 = vpop.permute.xlu0 %2313
        %2315 = vrot.lane.b32.xlu0 %v2308, 126
        %v2316 = vpop.permute.xlu0 %2315
        %2317 = vrot.lane.b32.xlu0 %v2309, 126
        %v2318 = vpop.permute.xlu0 %2317
        %v2322 = vadd.f32 %v2301, %v2314
        %v2323 = vadd.f32 %v2302, %v2316
        %v2324 = vadd.f32 %v2303, %v2318
        %v2325 = vstv %s2305
        %v2326 = vmul.f32 %v2325, %v718
        %v2327 = vmul.f32 %v2325, %v719
        %v2328 = vmul.f32 %v2325, %v720
        %2332 = vrot.lane.b32.xlu0 %v2326, 126
        %v2333 = vpop.permute.xlu0 %2332
        %2334 = vrot.lane.b32.xlu0 %v2327, 126
        %v2335 = vpop.permute.xlu0 %2334
        %2336 = vrot.lane.b32.xlu0 %v2328, 126
        %v2337 = vpop.permute.xlu0 %2336
        %v2341 = vadd.f32 %v2322, %v2333
        %v2342 = vadd.f32 %v2323, %v2335
        %v2343 = vadd.f32 %v2324, %v2337
        %s2344 = sld [smem:[#allocation8 + $0x2d]]
        %s2345 = sld [smem:[#allocation8 + $0x5e]]
        %v2346 = vstv %s2344
        %v2347 = vmul.f32 %v2346, %v715
        %v2348 = vmul.f32 %v2346, %v716
        %v2349 = vmul.f32 %v2346, %v717
        %2353 = vrot.lane.b32.xlu0 %v2347, 125
        %v2354 = vpop.permute.xlu0 %2353
        %2355 = vrot.lane.b32.xlu0 %v2348, 125
        %v2356 = vpop.permute.xlu0 %2355
        %2357 = vrot.lane.b32.xlu0 %v2349, 125
        %v2358 = vpop.permute.xlu0 %2357
        %v2362 = vadd.f32 %v2341, %v2354
        %v2363 = vadd.f32 %v2342, %v2356
        %v2364 = vadd.f32 %v2343, %v2358
        %v2365 = vstv %s2345
        %v2366 = vmul.f32 %v2365, %v718
        %v2367 = vmul.f32 %v2365, %v719
        %v2368 = vmul.f32 %v2365, %v720
        %2372 = vrot.lane.b32.xlu0 %v2366, 125
        %v2373 = vpop.permute.xlu0 %2372
        %2374 = vrot.lane.b32.xlu0 %v2367, 125
        %v2375 = vpop.permute.xlu0 %2374
        %2376 = vrot.lane.b32.xlu0 %v2368, 125
        %v2377 = vpop.permute.xlu0 %2376
        %v2381 = vadd.f32 %v2362, %v2373
        %v2382 = vadd.f32 %v2363, %v2375
        %v2383 = vadd.f32 %v2364, %v2377
        %s2384 = sld [smem:[#allocation8 + $0x2e]]
        %s2385 = sld [smem:[#allocation8 + $0x5f]]
        %v2386 = vstv %s2384
        %v2387 = vmul.f32 %v2386, %v715
        %v2388 = vmul.f32 %v2386, %v716
        %v2389 = vmul.f32 %v2386, %v717
        %2393 = vrot.lane.b32.xlu0 %v2387, 124
        %v2394 = vpop.permute.xlu0 %2393
        %2395 = vrot.lane.b32.xlu0 %v2388, 124
        %v2396 = vpop.permute.xlu0 %2395
        %2397 = vrot.lane.b32.xlu0 %v2389, 124
        %v2398 = vpop.permute.xlu0 %2397
        %v2402 = vadd.f32 %v2381, %v2394
        %v2403 = vadd.f32 %v2382, %v2396
        %v2404 = vadd.f32 %v2383, %v2398
        %v2405 = vstv %s2385
        %v2406 = vmul.f32 %v2405, %v718
        %v2407 = vmul.f32 %v2405, %v719
        %v2408 = vmul.f32 %v2405, %v720
        %2412 = vrot.lane.b32.xlu0 %v2406, 124
        %v2413 = vpop.permute.xlu0 %2412
        %2414 = vrot.lane.b32.xlu0 %v2407, 124
        %v2415 = vpop.permute.xlu0 %2414
        %2416 = vrot.lane.b32.xlu0 %v2408, 124
        %v2417 = vpop.permute.xlu0 %2416
        %v2421 = vadd.f32 %v2402, %v2413
        %v2422 = vadd.f32 %v2403, %v2415
        %v2423 = vadd.f32 %v2404, %v2417
        %s2424 = sld [smem:[#allocation8 + $0x2f]]
        %s2425 = sld [smem:[#allocation8 + $0x60]]
        %v2426 = vstv %s2424
        %v2427 = vmul.f32 %v2426, %v715
        %v2428 = vmul.f32 %v2426, %v716
        %v2429 = vmul.f32 %v2426, %v717
        %2433 = vrot.lane.b32.xlu0 %v2427, 123
        %v2434 = vpop.permute.xlu0 %2433
        %2435 = vrot.lane.b32.xlu0 %v2428, 123
        %v2436 = vpop.permute.xlu0 %2435
        %2437 = vrot.lane.b32.xlu0 %v2429, 123
        %v2438 = vpop.permute.xlu0 %2437
        %v2442 = vadd.f32 %v2421, %v2434
        %v2443 = vadd.f32 %v2422, %v2436
        %v2444 = vadd.f32 %v2423, %v2438
        %v2445 = vstv %s2425
        %v2446 = vmul.f32 %v2445, %v718
        %v2447 = vmul.f32 %v2445, %v719
        %v2448 = vmul.f32 %v2445, %v720
        %2452 = vrot.lane.b32.xlu0 %v2446, 123
        %v2453 = vpop.permute.xlu0 %2452
        %2454 = vrot.lane.b32.xlu0 %v2447, 123
        %v2455 = vpop.permute.xlu0 %2454
        %2456 = vrot.lane.b32.xlu0 %v2448, 123
        %v2457 = vpop.permute.xlu0 %2456
        %v2461 = vadd.f32 %v2442, %v2453
        %v2462 = vadd.f32 %v2443, %v2455
        %v2463 = vadd.f32 %v2444, %v2457
        %s2464 = sld [smem:[#allocation8 + $0x30]]
        %s2465 = sld [smem:[#allocation8 + $0x61]]
        %v2466 = vstv %s2464
        %v2467 = vmul.f32 %v2466, %v715
        %v2468 = vmul.f32 %v2466, %v716
        %v2469 = vmul.f32 %v2466, %v717
        %2473 = vrot.lane.b32.xlu0 %v2467, 122
        %v2474 = vpop.permute.xlu0 %2473
        %2475 = vrot.lane.b32.xlu0 %v2468, 122
        %v2476 = vpop.permute.xlu0 %2475
        %2477 = vrot.lane.b32.xlu0 %v2469, 122
        %v2478 = vpop.permute.xlu0 %2477
        %v2482 = vadd.f32 %v2461, %v2474
        %v2483 = vadd.f32 %v2462, %v2476
        %v2484 = vadd.f32 %v2463, %v2478
        %v2485 = vstv %s2465
        %v2486 = vmul.f32 %v2485, %v718
        %v2487 = vmul.f32 %v2485, %v719
        %v2488 = vmul.f32 %v2485, %v720
        %2492 = vrot.lane.b32.xlu0 %v2486, 122
        %v2493 = vpop.permute.xlu0 %2492
        %2494 = vrot.lane.b32.xlu0 %v2487, 122
        %v2495 = vpop.permute.xlu0 %2494
        %2496 = vrot.lane.b32.xlu0 %v2488, 122
        %v2497 = vpop.permute.xlu0 %2496
        %v2501 = vadd.f32 %v2482, %v2493
        %v2502 = vadd.f32 %v2483, %v2495
        %v2503 = vadd.f32 %v2484, %v2497
        %vm2507 = vcmask 1041408
        %v2508 = vrot.slane %v2501, 6
        %v2509 = vrot.slane %v2502, 6
        %v2510 = vsel %vm2507, %v2508, %v2509
        %v2511 = vrot.slane %v2503, 6
        %v2512 = vsel %vm2507, %v2509, %v2511
        %v2515 = vadd.f32 %v2246, %v2510
        %v2516 = vadd.f32 %v2247, %v2512
        %v2517 = vxor.u32 %v2515, 2147483648
        %v2518 = vxor.u32 %v2516, 2147483648
        %v2519 = vmul.f32 %v2517, 1.442695
        %v2520 = vpow.pop %v2519
        %v2521 = vmul.f32 %v2518, 1.442695
        %v2522 = vpow.pop %v2521
        %v2523 = vadd.f32 %v2520, 1.0
        %v2524 = vadd.f32 %v2522, 1.0
        %v2525 = vrcp.pop %v2523
        %v2526 = vmul.f32 %v2523, %v2525
        %v2527 = vsub.f32 1.0, %v2526
        %v2528 = vmul.f32 %v2525, %v2527
        %v2529 = vadd.f32 %v2525, %v2528
        %vm2530 = vweird.f32 %v2523
        %vm2531 = vweird.f32 %v2525
        %vm2532 = vmor %vm2530, %vm2531
        %v2533 = vsel %vm2532, %v2525, %v2529
        %v2534 = vand.u32 2147483647, %v2523
        %vm2535 = vcmp.eq.f32.partialorder %v2534, 8.507059e+37
        %v2536 = vand.u32 %v2523, 2147483648
        %v2537 = vor.u32 1.1754944e-38, %v2536
        %v2538 = vsel %vm2535, %v2537, %v2533
        %v2539 = vmul.f32 1.0, %v2538
        %v2540 = vrcp.pop %v2524
        %v2541 = vmul.f32 %v2524, %v2540
        %v2542 = vsub.f32 1.0, %v2541
        %v2543 = vmul.f32 %v2540, %v2542
        %v2544 = vadd.f32 %v2540, %v2543
        %vm2545 = vweird.f32 %v2524
        %vm2546 = vweird.f32 %v2540
        %vm2547 = vmor %vm2545, %vm2546
        %v2548 = vsel %vm2547, %v2540, %v2544
        %v2549 = vand.u32 2147483647, %v2524
        %vm2550 = vcmp.eq.f32.partialorder %v2549, 8.507059e+37
        %v2551 = vand.u32 %v2524, 2147483648
        %v2552 = vor.u32 1.1754944e-38, %v2551
        %v2553 = vsel %vm2550, %v2552, %v2548
        %v2554 = vmul.f32 1.0, %v2553
        %v2555 = vlaneseq
        %vm2556 = vcmp.ge.s32.totalorder %v2555, 0
        %vm2557 = vcmp.lt.s32.totalorder %v2555, 16
        %vm2558 = vmand %vm2556, %vm2557
        %2559 = vst.msk [vmem:[#allocation3] sm:$0x1] %vm2558, %v2539
        %2561 = vst [vmem:[#allocation1] sm:$0xff] %v2539
        %s2562 = scalar_lea.vmem [#allocation1], 1
        %v2563 = vld [vmem:[%s2562] ss:$9 sm:$0xff]
        %2564 = vrot.lane.b32.xlu0 %v2563, 16
        %v2565 = vpop.permute.xlu0 %2564
        %vm2567 = vcmp.ge.s32.totalorder %v2555, 16
        %vm2568 = vcmp.lt.s32.totalorder %v2555, 32
        %vm2569 = vmand %vm2567, %vm2568
        %2570 = vst.msk [vmem:[#allocation3] sm:$0x1] %vm2569, %v2565
        %2571 = vst [vmem:[#allocation1] sm:$0xff] %v2539
        %s2572 = scalar_lea.vmem [#allocation1], 2
        %v2573 = vld [vmem:[%s2572] ss:$9 sm:$0xff]
        %2574 = vrot.lane.b32.xlu0 %v2573, 32
        %v2575 = vpop.permute.xlu0 %2574
        %vm2577 = vcmp.ge.s32.totalorder %v2555, 32
        %vm2578 = vcmp.lt.s32.totalorder %v2555, 48
        %vm2579 = vmand %vm2577, %vm2578
        %2580 = vst.msk [vmem:[#allocation3] sm:$0x1] %vm2579, %v2575
        %2581 = vst [vmem:[#allocation1] sm:$0xff] %v2539
        %s2582 = scalar_lea.vmem [#allocation1], 3
        %v2583 = vld [vmem:[%s2582] ss:$9 sm:$0xff]
        %2584 = vrot.lane.b32.xlu0 %v2583, 48
        %v2585 = vpop.permute.xlu0 %2584
        %vm2587 = vcmp.ge.s32.totalorder %v2555, 48
        %vm2588 = vcmp.lt.s32.totalorder %v2555, 64
        %vm2589 = vmand %vm2587, %vm2588
        %2590 = vst.msk [vmem:[#allocation3] sm:$0x1] %vm2589, %v2585
        %2591 = vst [vmem:[#allocation1] sm:$0xff] %v2539
        %s2592 = scalar_lea.vmem [#allocation1], 4
        %v2593 = vld [vmem:[%s2592] ss:$9 sm:$0xff]
        %2594 = vrot.lane.b32.xlu0 %v2593, 64
        %v2595 = vpop.permute.xlu0 %2594
        %vm2597 = vcmp.ge.s32.totalorder %v2555, 64
        %vm2598 = vcmp.lt.s32.totalorder %v2555, 80
        %vm2599 = vmand %vm2597, %vm2598
        %2600 = vst.msk [vmem:[#allocation3] sm:$0x1] %vm2599, %v2595
        %2601 = vst [vmem:[#allocation1] sm:$0xff] %v2539
        %s2602 = scalar_lea.vmem [#allocation1], 5
        %v2603 = vld [vmem:[%s2602] ss:$9 sm:$0xff]
        %2604 = vrot.lane.b32.xlu0 %v2603, 80
        %v2605 = vpop.permute.xlu0 %2604
        %vm2607 = vcmp.ge.s32.totalorder %v2555, 80
        %vm2608 = vcmp.lt.s32.totalorder %v2555, 96
        %vm2609 = vmand %vm2607, %vm2608
        %2610 = vst.msk [vmem:[#allocation3] sm:$0x1] %vm2609, %v2605
        %2611 = vst [vmem:[#allocation1] sm:$0xff] %v2539
        %s2612 = scalar_lea.vmem [#allocation1], 6
        %v2613 = vld [vmem:[%s2612] ss:$9 sm:$0xff]
        %2614 = vrot.lane.b32.xlu0 %v2613, 96
        %v2615 = vpop.permute.xlu0 %2614
        %vm2617 = vcmp.ge.s32.totalorder %v2555, 96
        %vm2618 = vcmp.lt.s32.totalorder %v2555, 112
        %vm2619 = vmand %vm2617, %vm2618
        %2620 = vst.msk [vmem:[#allocation3] sm:$0x1] %vm2619, %v2615
        %2621 = vst [vmem:[#allocation1] sm:$0xff] %v2539
        %s2622 = scalar_lea.vmem [#allocation1], 7
        %v2623 = vld [vmem:[%s2622] ss:$9 sm:$0xff]
        %2624 = vrot.lane.b32.xlu0 %v2623, 112
        %v2625 = vpop.permute.xlu0 %2624
        %vm2627 = vcmp.ge.s32.totalorder %v2555, 112
        %vm2628 = vcmp.lt.s32.totalorder %v2555, 128
        %vm2629 = vmand %vm2627, %vm2628
        %2630 = vst.msk [vmem:[#allocation3] sm:$0x1] %vm2629, %v2625
        %2631 = vst.msk [vmem:[#allocation3 + $0x1] sm:$0x1] %vm2558, %v2554
        %2633 = vst [vmem:[#allocation1] sm:$0xff] %v2554
        %s2634 = scalar_lea.vmem [#allocation1], 1
        %v2635 = vld [vmem:[%s2634] ss:$9 sm:$0xff]
        %2636 = vrot.lane.b32.xlu0 %v2635, 16
        %v2637 = vpop.permute.xlu0 %2636
        %2639 = vst.msk [vmem:[#allocation3 + $0x1] sm:$0x1] %vm2569, %v2637
        %2640 = vst [vmem:[#allocation1] sm:$0xff] %v2554
        %s2641 = scalar_lea.vmem [#allocation1], 2
        %v2642 = vld [vmem:[%s2641] ss:$9 sm:$0xff]
        %2643 = vrot.lane.b32.xlu0 %v2642, 32
        %v2644 = vpop.permute.xlu0 %2643
        %2646 = vst.msk [vmem:[#allocation3 + $0x1] sm:$0x1] %vm2579, %v2644
        %2647 = vst [vmem:[#allocation1] sm:$0xff] %v2554
        %s2648 = scalar_lea.vmem [#allocation1], 3
        %v2649 = vld [vmem:[%s2648] ss:$9 sm:$0xff]
        %2650 = vrot.lane.b32.xlu0 %v2649, 48
        %v2651 = vpop.permute.xlu0 %2650
        %2653 = vst.msk [vmem:[#allocation3 + $0x1] sm:$0x1] %vm2589, %v2651
        %2654 = vst [vmem:[#allocation1] sm:$0xff] %v2554
        %s2655 = scalar_lea.vmem [#allocation1], 4
        %v2656 = vld [vmem:[%s2655] ss:$9 sm:$0xff]
        %2657 = vrot.lane.b32.xlu0 %v2656, 64
        %v2658 = vpop.permute.xlu0 %2657
        %2660 = vst.msk [vmem:[#allocation3 + $0x1] sm:$0x1] %vm2599, %v2658
        %2661 = vst [vmem:[#allocation1] sm:$0xff] %v2554
        %s2662 = scalar_lea.vmem [#allocation1], 5
        %v2663 = vld [vmem:[%s2662] ss:$9 sm:$0xff]
        %2664 = vrot.lane.b32.xlu0 %v2663, 80
        %v2665 = vpop.permute.xlu0 %2664
        %2667 = vst.msk [vmem:[#allocation3 + $0x1] sm:$0x1] %vm2609, %v2665
        %2668 = vst [vmem:[#allocation1] sm:$0xff] %v2554
        %s2669 = scalar_lea.vmem [#allocation1], 6
        %v2670 = vld [vmem:[%s2669] ss:$9 sm:$0xff]
        %2671 = vrot.lane.b32.xlu0 %v2670, 96
        %v2672 = vpop.permute.xlu0 %2671
        %2674 = vst.msk [vmem:[#allocation3 + $0x1] sm:$0x1] %vm2619, %v2672
        %2675 = vst [vmem:[#allocation1] sm:$0xff] %v2554
        %s2676 = scalar_lea.vmem [#allocation1], 7
        %v2677 = vld [vmem:[%s2676] ss:$9 sm:$0xff]
        %2678 = vrot.lane.b32.xlu0 %v2677, 112
        %v2679 = vpop.permute.xlu0 %2678
        %2681 = vst.msk [vmem:[#allocation3 + $0x1] sm:$0x1] %vm2629, %v2679
        %v2682 = vld [vmem:[#allocation3] sm:$0x3]
        %v2684 = vperm.slane %v2682, 0
        %v2685 = vperm.slane %v2682, 1
        %v2688 = vmul.f32 %v520, %v2684
        %v2689 = vmul.f32 %v521, %v2685
        %v2690 = vmul.f32 %v522, %v2684
        %v2691 = vmul.f32 %v523, %v2685
        %v2692 = vmul.f32 %v524, %v2684
        %v2693 = vmul.f32 %v525, %v2685
        %v2694 = vmul.f32 %v526, %v2684
        %v2695 = vmul.f32 %v527, %v2685
        %2696 = vst [vmem:[%s231] sm:$0xff] %v2688
        %2697 = vst [vmem:[%s231 + $0x8] sm:$0xff] %v2689
        %2698 = vst [vmem:[%s231 + $0x10] sm:$0xff] %v2690
        %2699 = vst [vmem:[%s231 + $0x18] sm:$0xff] %v2691
        %2700 = vst [vmem:[%s231 + $0x20] sm:$0xff] %v2692
        %2701 = vst [vmem:[%s231 + $0x28] sm:$0xff] %v2693
        %2702 = vst [vmem:[%s231 + $0x30] sm:$0xff] %v2694
        %2703 = vst [vmem:[%s231 + $0x38] sm:$0xff] %v2695
        %s2704 = sand.u32 %s119, 1
        %s2705 = scalar_lea.sflag [#allocation6], %s2704
        %s2706 = sand.u32 %s119, 1
        %s2707 = smul.addr %s2706, 64
        %s2708 = scalar_lea.vmem [#allocation9], %s2707
        // Predicated region
        $region45: #{tpu_custom_call.1} parent=35 // pred_check
          %p2709 = pneg %p129
        $region46: #{tpu_custom_call.1} parent=35 // pred_check_branch
          %2711 = sbr.rel (%p2709) target = $region48
        $region47: #{tpu_custom_call.1} parent=35 // pred_region
          %2713 = vsyncadd %s2705, 0
          %s2714 = smul.addr %s22, 8
          %s2715 = smul.addr %s2714, 8
          %s2716 = scalar_lea.hbm %s4, %s2715
          %s2717 = sshll.u32 %s2708, 4
          %s2718 = int_to_ptr.vmem [resolvable:$true] %s2717
          %s2719 = sshll.u32 %s2716, 4
          %s2720 = int_to_ptr.hbm [resolvable:$true] %s2719
          %2725 = dma.vmem_to_hbm [thread:$0]  %s2718, 1024, %s2720, %s2705, 256, 256, 16
        $region48: #{tpu_custom_call.1} parent=35 // pred_fallthru
          _
      $region36: #{tpu_custom_call.1} parent=5 // pred_fallthru
        _
      %p2726 = scmp.le.s32.totalorder 2, %s17
      // Predicated region
      $region49: #{tpu_custom_call.1} parent=5 // pred_check
        %p2727 = pneg %p2726
      $region50: #{tpu_custom_call.1} parent=5 // pred_check_branch
        %2729 = sbr.rel (%p2727) target = $region52
      $region51: #{tpu_custom_call.1} parent=5 // pred_region
        %s2730 = ssub.s32 %s17, 2
        // Predicated region
        $region53: #{tpu_custom_call.1} parent=51 // pred_check
          %p2731 = pneg %p135
        $region54: #{tpu_custom_call.1} parent=51 // pred_check_branch
          %2733 = sbr.rel (%p2731) target = $region56
        $region55: #{tpu_custom_call.1} parent=51 // pred_region
          %s2734 = sand.u32 %s120, 1
          %s2735 = scalar_lea.sflag [#allocation6], %s2734
          %s2736 = sand.u32 %s120, 1
          %s2737 = smul.addr %s2736, 64
          %s2738 = scalar_lea.vmem [#allocation9], %s2737
          %2740 = dma.done %s2735, 1024
        $region56: #{tpu_custom_call.1} parent=51 // pred_fallthru
          _
      $region52: #{tpu_custom_call.1} parent=5 // pred_fallthru
        _
    $region6: #{tpu_custom_call.1} parent=1 // loop_footer
      %s21 = sadd.s32 1, %s17
    $region7: #{tpu_custom_call.1} parent=1 // loop_footer_branch
      %16 = sbr.rel target = $region3
    $region8: #{tpu_custom_call.1} parent=1 // loop_exit
      _
    %2741 = vsyncpa [#allocation5], 1
    %s2742 = scalar_lea.sflag [#allocation5], 1
    %2743 = vsyncpa %s2742, 1
    %2744 = vsyncpa [#allocation6], 1
    %s2745 = scalar_lea.sflag [#allocation6], 1
    %2746 = vsyncpa %s2745, 1
    %2747 = vsyncpa [#allocation7], 1
    %s2748 = scalar_lea.sflag [#allocation7], 1
    %2749 = vsyncpa %s2748, 1

</llo_original>
